<compile_context>
chip_gen: v7x
topology: tpu7x:2x2x1
jax: 0.10.0
libtpu: 0.0.40
codegen_flags: <defaults>
</compile_context>

<pallas_src>
import jax
import jax.numpy as jnp
from jax import lax
from jax.experimental import pallas as pl
from jax.experimental.pallas import tpu as pltpu


# -----------------------------------------------------------------------------
# Flat-pixel geometry for the canonical 24x24 R-net input (q = 24*y + x).
# Every layer keeps its outputs at the *original* flat coordinates; layer k's
# pixel grid has flat row stride RS_k and column stride CS_k.
# -----------------------------------------------------------------------------
H0 = W0 = 24
P0 = H0 * W0                      # 576  input pixels / image
XW = 640                          # padded input lane width (>= 50 + CW1)

# spans of the valid flat coordinates per layer
P1, P2, P3, P4, P5 = 526, 451, 351, 201, 101
# padded lane widths of the VMEM buffers (128-multiples, wide enough that
# every downstream tap slice stays in bounds: B1>=50+B2, B2>=100+B3, ...)
B1, B2, B3, B4, B5 = 640, 512, 384, 256, 128
CW1 = 576                         # conv1 im2col copy width (50 + 576 <= XW)

TAPS_S1 = tuple(24 * i + j for i in range(3) for j in range(3))      # conv1 / pool1 taps
TAPS_S2 = tuple(48 * i + 2 * j for i in range(3) for j in range(3))  # conv2 / pool2 taps
TAPS_S4 = tuple(96 * i + 4 * j for i in range(2) for j in range(2))  # conv3 taps
QCOLS = (0, 4, 96, 100)           # flat coords of the 2x2 conv3 outputs, k = h*2 + w


def _prelu(v, a):
    return jnp.where(v >= 0.0, v, a * v)


def _round_up(v, m):
    return ((v + m - 1) // m) * m


# -----------------------------------------------------------------------------
# The fused Pallas kernel: whole R-net forward for one block of images.
# -----------------------------------------------------------------------------
def _rnet_kernel(alpha_ref, x_ref,
                 w1_ref, s1_ref, w2_ref, s2_ref, w3_ref, s3_ref,
                 wf1_ref, bf1_ref, wf2_ref, bf2_ref, wh_ref, bh_ref,
                 out_ref,
                 c1_s, a1_s, a2_s, c2_s, a3_s, a4_s, c3_s):
    tb = x_ref.shape[0]

    # K-dim pad rows of the im2col scratches are never written inside the
    # loop; zero the buffers once per block so the zero weight columns never
    # multiply stale (possibly NaN) VMEM.
    c1_s[...] = jnp.zeros(c1_s.shape, c1_s.dtype)
    c2_s[...] = jnp.zeros(c2_s.shape, c2_s.dtype)

    # Hoist small loop-invariant loads (not CSE'd across fori_loop iterations).
    al1 = alpha_ref[0]
    al2 = alpha_ref[1]
    al3 = alpha_ref[2]
    al4 = alpha_ref[3]
    al5 = alpha_ref[4]
    sh1 = s1_ref[...]
    sh2 = s2_ref[...]
    sh3 = s3_ref[...]
    bf1 = bf1_ref[...]
    bf2 = bf2_ref[...]
    bh = bh_ref[...]
    row_idx = lax.broadcasted_iota(jnp.int32, (8, 1), 0)

    def one_image(t, carry):
        x0 = x_ref[t]                                              # (3, XW)

        # ---- conv1 (3x3, Cin=3) + folded BN + PReLU as ONE MXU matmul.
        #      im2col: 9 taps x (3 data rows padded to 8) -> K = 72.
        for k, off in enumerate(TAPS_S1):
            c1_s[k * 8:k * 8 + 3, :CW1] = x0[:, off:off + CW1]
        a1_s[...] = _prelu(
            jnp.dot(w1_ref[...], c1_s[...],
                    preferred_element_type=jnp.float32) + sh1, al1)   # (28, B1)

        # ---- maxpool1 3x3 / stride 2 (floor mode)
        m = a1_s[:, 0:B2]
        for off in TAPS_S1[1:]:
            m = jnp.maximum(m, a1_s[:, off:off + B2])
        a2_s[...] = m                                              # (28, B2)

        # ---- conv2 (3x3, Cin=28) + folded BN + PReLU as ONE MXU matmul.
        #      im2col: 9 taps x (28 data rows padded to 32) -> K = 288.
        for k, off in enumerate(TAPS_S2):
            c2_s[k * 32:k * 32 + 28, :] = a2_s[:, off:off + B3]
        a3_s[...] = _prelu(
            jnp.dot(w2_ref[...], c2_s[...],
                    preferred_element_type=jnp.float32) + sh2, al2)   # (48, B3)

        # ---- maxpool2 3x3 / stride 2
        m = a3_s[:, 0:B4]
        for off in TAPS_S2[1:]:
            m = jnp.maximum(m, a3_s[:, off:off + B4])
        a4_s[...] = m                                              # (48, B4)

        # ---- conv3 (2x2, Cin=48) + folded BN + PReLU as ONE MXU matmul.
        #      im2col: 4 taps x 48 rows -> K = 192.
        for k, off in enumerate(TAPS_S4):
            c3_s[k * 48:(k + 1) * 48, :] = a4_s[:, off:off + B5]
        a5 = _prelu(
            jnp.dot(w3_ref[...], c3_s[...],
                    preferred_element_type=jnp.float32) + sh3, al3)   # (64, B5)

        # ---- fc1/fc2/heads, column-oriented: stays on the MXU, no XLU
        #      reductions.  PyTorch's NCHW-flatten order is folded into wf1.
        f = jnp.concatenate([a5[:, q:q + 1] for q in QCOLS], axis=0)  # (256, 1)
        y = _prelu(jnp.dot(wf1_ref[...], f,
                           preferred_element_type=jnp.float32) + bf1, al4)   # (128, 1)
        y = _prelu(jnp.dot(wf2_ref[...], y,
                           preferred_element_type=jnp.float32) + bf2, al5)   # (64, 1)
        z = jnp.dot(wh_ref[...], y,
                    preferred_element_type=jnp.float32) + bh              # (8, 1)
        # row 0 = cond logit -> stable sigmoid; rows 1..4 = offsets; 5..7 pad.
        z = jnp.where(row_idx == 0, 0.5 * (jnp.tanh(0.5 * z) + 1.0), z)
        out_ref[pl.ds(t, 1)] = z.reshape(1, 8, 1)
        return carry

    lax.fori_loop(0, tb, one_image, 0)


# -----------------------------------------------------------------------------
# Wrapper: trace-time weight folding / permutation + pallas_call plumbing.
# -----------------------------------------------------------------------------
def _fold_bn(b, bn, eps):
    gamma, beta, mean, var = bn
    s = gamma / jnp.sqrt(var + eps)
    shift = (b - mean) * s + beta
    return s, shift


def rnet_forward(x_nchw, params, *, block_n=128, eps=1e-5):
    """R-net forward. x_nchw: (N, 3, 24, 24). Returns (cond (N,1), offset (N,4))."""
    f32 = jnp.float32
    N = x_nchw.shape[0]

    # NCHW flatten is a layout no-op; pad the flat-pixel axis 576 -> 640 with
    # zeros so every conv1 im2col tap slice stays in bounds.
    x = x_nchw.astype(f32).reshape(N, 3, P0)
    x = jnp.pad(x, ((0, 0), (0, 0), (0, XW - P0)))

    # Per-block batch size. Keep >= 2 grid steps for larger batches so the
    # "parallel" grid axis can be split across v7x's two TensorCores.
    bn = max(8, _round_up(min(block_n, _round_up(N, 8)), 8))
    if _round_up(N, bn) == bn and bn > 8:
        bn = _round_up((bn + 1) // 2, 8)
    n_pad = _round_up(N, bn)
    if n_pad != N:
        x = jnp.pad(x, ((0, n_pad - N), (0, 0), (0, 0)))

    # Fold inference-mode BatchNorm into conv weights / bias shifts.
    s1, sh1 = _fold_bn(params["b1"], params["bn1"], eps)
    s2, sh2 = _fold_bn(params["b2"], params["bn2"], eps)
    s3, sh3 = _fold_bn(params["b3"], params["bn3"], eps)

    # conv1: (28, 72) matrix over the 8-row-padded, tap-major im2col.
    w1m = (params["w1"].transpose(0, 2, 3, 1).reshape(28, 9, 3)
           * s1[:, None, None]).astype(f32)
    w1big = jnp.zeros((28, 9, 8), f32).at[:, :, :3].set(w1m).reshape(28, 72)
    # conv2: (48, 288) matrix (9 taps x 28 channels padded to 32).
    w2m = (params["w2"].transpose(0, 2, 3, 1).reshape(48, 9, 28)
           * s2[:, None, None]).astype(f32)
    w2big = jnp.zeros((48, 9, 32), f32).at[:, :, :28].set(w2m).reshape(48, 288)
    # conv3: (64, 192) matrix (4 taps x 48 channels).
    w3big = (params["w3"].transpose(0, 2, 3, 1).reshape(64, 4, 48)
             * s3[:, None, None]).reshape(64, 192).astype(f32)
    # fc1 with PyTorch's NCHW flatten permutation folded in, column-oriented:
    #   wf1[o, k*64 + c] = fc1_w[c*4 + k, o],  k = h*2 + w over the 2x2 grid.
    wf1 = (params["fc1_w"].reshape(64, 4, 128).transpose(1, 0, 2)
           .reshape(256, 128).T).astype(f32)                           # (128, 256)
    wf2 = params["fc2_w"].T.astype(f32)                                # (64, 128)
    # heads fused: rows 0 = cond, 1..4 = offset, 5..7 = zero padding.
    wh = jnp.concatenate([params["cond_w"].T, params["off_w"].T,
                          jnp.zeros((3, 64), f32)], axis=0).astype(f32)   # (8, 64)
    bh = jnp.concatenate([params["cond_b"], params["off_b"],
                          jnp.zeros((3,), f32)]).reshape(8, 1).astype(f32)

    alphas = jnp.stack([params["a1"], params["a2"], params["a3"],
                        params["a4"], params["a5"]]).astype(f32)       # (5,) SMEM

    weights = (
        w1big, sh1.reshape(28, 1).astype(f32),
        w2big, sh2.reshape(48, 1).astype(f32),
        w3big, sh3.reshape(64, 1).astype(f32),
        wf1, params["fc1_b"].reshape(128, 1).astype(f32),
        wf2, params["fc2_b"].reshape(64, 1).astype(f32),
        wh, bh,
    )

    in_specs = [
        pl.BlockSpec(memory_space=pltpu.MemorySpace.SMEM),         # PReLU alphas
        pl.BlockSpec((bn, 3, XW), lambda b: (b, 0, 0)),            # image block
    ] + [pl.BlockSpec(w.shape, lambda b: (0, 0)) for w in weights]

    out_specs = pl.BlockSpec((bn, 8, 1), lambda b: (b, 0, 0))
    out_shape = jax.ShapeDtypeStruct((n_pad, 8, 1), f32)

    scratch_shapes = [
        pltpu.VMEM((72, B1), f32),    # conv1 im2col
        pltpu.VMEM((28, B1), f32),    # conv1 out
        pltpu.VMEM((28, B2), f32),    # pool1 out
        pltpu.VMEM((288, B3), f32),   # conv2 im2col
        pltpu.VMEM((48, B3), f32),    # conv2 out
        pltpu.VMEM((48, B4), f32),    # pool2 out
        pltpu.VMEM((192, B5), f32),   # conv3 im2col
    ]

    macs = (28 * 72 * B1 + 48 * 288 * B3 + 64 * 192 * B5
            + 128 * 256 + 64 * 128 + 8 * 64)
    weight_bytes = sum(int(w.size) for w in weights) * 4
    cost = pl.CostEstimate(
        flops=2 * macs * n_pad,
        transcendentals=8 * n_pad,
        bytes_accessed=x.size * 4 + weight_bytes + n_pad * 8 * 4,
    )

    # Scoped-VMEM budget ~= real footprint (double-buffered input block +
    # scratch + weights) plus slack, instead of a blanket 32 MiB.
    scratch_elems = (72 * B1 + 32 * B1 + 32 * B2 + 288 * B3 + 48 * B3
                     + 48 * B4 + 192 * B5)
    xblk_bytes = bn * 8 * XW * 4            # sublane-padded (3 -> 8) input block
    vmem_limit = int(2 * xblk_bytes + 4 * scratch_elems
                     + 2 * weight_bytes + (4 << 20))

    out = pl.pallas_call(
        _rnet_kernel,
        grid=(n_pad // bn,),
        in_specs=in_specs,
        out_specs=out_specs,
        out_shape=out_shape,
        scratch_shapes=scratch_shapes,
        compiler_params=pltpu.CompilerParams(
            dimension_semantics=("parallel",),
            vmem_limit_bytes=vmem_limit,
        ),
        cost_estimate=cost,
    )(alphas, x, *weights)

    out = out.reshape(n_pad, 8)
    return out[:N, 0:1], out[:N, 1:5]


# -----------------------------------------------------------------------------
# Pure-JAX (XLA) reference for correctness checking.
# -----------------------------------------------------------------------------
def rnet_reference(x_nchw, params, eps=1e-5):
    x = x_nchw.astype(jnp.float32)

    def conv_bn_prelu(y, w, b, bn, a):
        y = lax.conv_general_dilated(y, w.astype(jnp.float32), (1, 1), "VALID",
                                     dimension_numbers=("NCHW", "OIHW", "NCHW"))
        y = y + b.reshape(1, -1, 1, 1)
        gamma, beta, mean, var = bn
        inv = (gamma / jnp.sqrt(var + eps)).reshape(1, -1, 1, 1)
        y = (y - mean.reshape(1, -1, 1, 1)) * inv + beta.reshape(1, -1, 1, 1)
        return jnp.where(y >= 0, y, a * y)

    def maxpool(y):
        return lax.reduce_window(y, -jnp.inf, lax.max, (1, 1, 3, 3), (1, 1, 2, 2), "VALID")

    y = conv_bn_prelu(x, params["w1"], params["b1"], params["bn1"], params["a1"])
    y = maxpool(y)
    y = conv_bn_prelu(y, params["w2"], params["b2"], params["bn2"], params["a2"])
    y = maxpool(y)
    y = conv_bn_prelu(y, params["w3"], params["b3"], params["bn3"], params["a3"])
    y = y.reshape(y.shape[0], -1)                    # PyTorch NCHW flatten
    y = y @ params["fc1_w"] + params["fc1_b"]
    y = jnp.where(y >= 0, y, params["a4"] * y)
    y = y @ params["fc2_w"] + params["fc2_b"]
    y = jnp.where(y >= 0, y, params["a5"] * y)
    cond = jax.nn.sigmoid(y @ params["cond_w"] + params["cond_b"])
    off = y @ params["off_w"] + params["off_b"]
    return cond, off


# -----------------------------------------------------------------------------
# Deterministic parameter initialization (synthetic, PyTorch shapes).
# -----------------------------------------------------------------------------
def init_params(key):
    keys = jax.random.split(key, 20)
    k = iter(keys)

    def nrm(kk, shape, scale=0.1):
        return (scale * jax.random.normal(kk, shape)).astype(jnp.float32)

    def bn(kk, c):
        k1, k2, k3, k4 = jax.random.split(kk, 4)
        gamma = 1.0 + 0.1 * jax.random.normal(k1, (c,))
        beta = 0.1 * jax.random.normal(k2, (c,))
        mean = 0.1 * jax.random.normal(k3, (c,))
        var = 0.5 + jnp.abs(jax.random.normal(k4, (c,)))
        return (gamma.astype(jnp.float32), beta.astype(jnp.float32),
                mean.astype(jnp.float32), var.astype(jnp.float32))

    prelu_alpha = jnp.float32(0.25)  # PyTorch nn.PReLU() default init

    params = {
        # Conv2d(3, 28, 3), BN(28), PReLU
        "w1": nrm(next(k), (28, 3, 3, 3)), "b1": nrm(next(k), (28,)),
        "bn1": bn(next(k), 28), "a1": prelu_alpha,
        # Conv2d(28, 48, 3), BN(48), PReLU
        "w2": nrm(next(k), (48, 28, 3, 3)), "b2": nrm(next(k), (48,)),
        "bn2": bn(next(k), 48), "a2": prelu_alpha,
        # Conv2d(48, 64, 2), BN(64), PReLU
        "w3": nrm(next(k), (64, 48, 2, 2)), "b3": nrm(next(k), (64,)),
        "bn3": bn(next(k), 64), "a3": prelu_alpha,
        # Linear(256, 128), PReLU  (stored as (in, out))
        "fc1_w": nrm(next(k), (256, 128)), "fc1_b": nrm(next(k), (128,)),
        "a4": prelu_alpha,
        # Linear(128, 64), PReLU
        "fc2_w": nrm(next(k), (128, 64)), "fc2_b": nrm(next(k), (64,)),
        "a5": prelu_alpha,
        # cond: Linear(64, 1); offset: Linear(64, 4)
        "cond_w": nrm(next(k), (64, 1)), "cond_b": nrm(next(k), (1,)),
        "off_w": nrm(next(k), (64, 4)), "off_b": nrm(next(k), (4,)),
    }
    return params


if __name__ == "__main__":
    key = jax.random.PRNGKey(0)
    kx, kp = jax.random.split(key)
    # R-net canonical input: (N, 3, 24, 24) NCHW
    x = jax.random.normal(kx, (2, 3, 24, 24), dtype=jnp.float32)
    params = init_params(kp)

    cond, offset = jax.jit(rnet_forward)(x, params)
    jax.block_until_ready((cond, offset))

    assert cond.shape == (2, 1) and offset.shape == (2, 4)
    assert bool(jnp.all(jnp.isfinite(cond))) and bool(jnp.all(jnp.isfinite(offset)))
    assert bool(jnp.all((cond >= 0.0) & (cond <= 1.0)))

    # Cross-check against the pure-JAX reference.
    cond_r, off_r = jax.jit(rnet_reference)(x, params)
    assert bool(jnp.max(jnp.abs(cond - cond_r)) < 2e-3)
    assert bool(jnp.max(jnp.abs(offset - off_r)) < 2e-3)

    print("KERNEL_OK")
</pallas_src>

<mosaic_0001>
module attributes {stable_mosaic.version = 11 : i64} {
  func.func @_rnet_kernel(%arg0: i32, %arg1: memref<5xf32, #tpu.memory_space<smem>>, %arg2: memref<8x3x640xf32, #tpu.memory_space<vmem>>, %arg3: memref<28x72xf32, #tpu.memory_space<vmem>>, %arg4: memref<28x1xf32, #tpu.memory_space<vmem>>, %arg5: memref<48x288xf32, #tpu.memory_space<vmem>>, %arg6: memref<48x1xf32, #tpu.memory_space<vmem>>, %arg7: memref<64x192xf32, #tpu.memory_space<vmem>>, %arg8: memref<64x1xf32, #tpu.memory_space<vmem>>, %arg9: memref<128x256xf32, #tpu.memory_space<vmem>>, %arg10: memref<128x1xf32, #tpu.memory_space<vmem>>, %arg11: memref<64x128xf32, #tpu.memory_space<vmem>>, %arg12: memref<64x1xf32, #tpu.memory_space<vmem>>, %arg13: memref<8x64xf32, #tpu.memory_space<vmem>>, %arg14: memref<8x1xf32, #tpu.memory_space<vmem>>, %arg15: memref<8x8x1xf32, #tpu.memory_space<vmem>>, %arg16: memref<72x640xf32, #tpu.memory_space<vmem>>, %arg17: memref<28x640xf32, #tpu.memory_space<vmem>>, %arg18: memref<28x512xf32, #tpu.memory_space<vmem>>, %arg19: memref<288x384xf32, #tpu.memory_space<vmem>>, %arg20: memref<48x384xf32, #tpu.memory_space<vmem>>, %arg21: memref<48x256xf32, #tpu.memory_space<vmem>>, %arg22: memref<192x128xf32, #tpu.memory_space<vmem>>) attributes {dimension_semantics = [#tpu.dimension_semantics<parallel>], iteration_bounds = array<i64: 1>, scalar_prefetch = 0 : i64, scratch_operands = 7 : i64, tpu.core_type = #tpu.core_type<tc>, window_params = [{transform_indices = @transform_0, window_bounds = array<i64: 5>}, {transform_indices = @transform_1, window_bounds = array<i64: 8, 3, 640>}, {pipeline_mode = #tpu.pipeline_mode<synchronous>, transform_indices = @transform_2, window_bounds = array<i64: 28, 72>}, {pipeline_mode = #tpu.pipeline_mode<synchronous>, transform_indices = @transform_3, window_bounds = array<i64: 28, 1>}, {pipeline_mode = #tpu.pipeline_mode<synchronous>, transform_indices = @transform_4, window_bounds = array<i64: 48, 288>}, {pipeline_mode = #tpu.pipeline_mode<synchronous>, transform_indices = @transform_5, window_bounds = array<i64: 48, 1>}, {pipeline_mode = #tpu.pipeline_mode<synchronous>, transform_indices = @transform_6, window_bounds = array<i64: 64, 192>}, {pipeline_mode = #tpu.pipeline_mode<synchronous>, transform_indices = @transform_7, window_bounds = array<i64: 64, 1>}, {pipeline_mode = #tpu.pipeline_mode<synchronous>, transform_indices = @transform_8, window_bounds = array<i64: 128, 256>}, {pipeline_mode = #tpu.pipeline_mode<synchronous>, transform_indices = @transform_9, window_bounds = array<i64: 128, 1>}, {pipeline_mode = #tpu.pipeline_mode<synchronous>, transform_indices = @transform_10, window_bounds = array<i64: 64, 128>}, {pipeline_mode = #tpu.pipeline_mode<synchronous>, transform_indices = @transform_11, window_bounds = array<i64: 64, 1>}, {pipeline_mode = #tpu.pipeline_mode<synchronous>, transform_indices = @transform_12, window_bounds = array<i64: 8, 64>}, {pipeline_mode = #tpu.pipeline_mode<synchronous>, transform_indices = @transform_13, window_bounds = array<i64: 8, 1>}, {transform_indices = @transform_14, window_bounds = array<i64: 8, 8, 1>}]} {
    %cst = arith.constant 0.000000e+00 : f32
    %0 = vector.broadcast %cst : f32 to vector<72x640xf32>
    %c0 = arith.constant 0 : index
    %c0_0 = arith.constant 0 : index
    %1 = vector.load %arg16[%c0, %c0_0] : memref<72x640xf32, #tpu.memory_space<vmem>>, vector<72x640xf32>
    tpu.vector_store %arg16[%c0, %c0_0], %0 {strides = array<i32>} : memref<72x640xf32, #tpu.memory_space<vmem>>, vector<72x640xf32>,
    %cst_1 = arith.constant 0.000000e+00 : f32
    %2 = vector.broadcast %cst_1 : f32 to vector<288x384xf32>
    %c0_2 = arith.constant 0 : index
    %c0_3 = arith.constant 0 : index
    %3 = vector.load %arg19[%c0_2, %c0_3] : memref<288x384xf32, #tpu.memory_space<vmem>>, vector<288x384xf32>
    tpu.vector_store %arg19[%c0_2, %c0_3], %2 {strides = array<i32>} : memref<288x384xf32, #tpu.memory_space<vmem>>, vector<288x384xf32>,
    %c0_4 = arith.constant 0 : index
    %4 = memref.load %arg1[%c0_4] : memref<5xf32, #tpu.memory_space<smem>>
    %c1 = arith.constant 1 : index
    %5 = memref.load %arg1[%c1] : memref<5xf32, #tpu.memory_space<smem>>
    %c2 = arith.constant 2 : index
    %6 = memref.load %arg1[%c2] : memref<5xf32, #tpu.memory_space<smem>>
    %c3 = arith.constant 3 : index
    %7 = memref.load %arg1[%c3] : memref<5xf32, #tpu.memory_space<smem>>
    %c4 = arith.constant 4 : index
    %8 = memref.load %arg1[%c4] : memref<5xf32, #tpu.memory_space<smem>>
    %c0_5 = arith.constant 0 : index
    %c0_6 = arith.constant 0 : index
    %9 = vector.load %arg4[%c0_5, %c0_6] : memref<28x1xf32, #tpu.memory_space<vmem>>, vector<28x1xf32>
    %c0_7 = arith.constant 0 : index
    %c0_8 = arith.constant 0 : index
    %10 = vector.load %arg6[%c0_7, %c0_8] : memref<48x1xf32, #tpu.memory_space<vmem>>, vector<48x1xf32>
    %c0_9 = arith.constant 0 : index
    %c0_10 = arith.constant 0 : index
    %11 = vector.load %arg8[%c0_9, %c0_10] : memref<64x1xf32, #tpu.memory_space<vmem>>, vector<64x1xf32>
    %c0_11 = arith.constant 0 : index
    %c0_12 = arith.constant 0 : index
    %12 = vector.load %arg10[%c0_11, %c0_12] : memref<128x1xf32, #tpu.memory_space<vmem>>, vector<128x1xf32>
    %c0_13 = arith.constant 0 : index
    %c0_14 = arith.constant 0 : index
    %13 = vector.load %arg12[%c0_13, %c0_14] : memref<64x1xf32, #tpu.memory_space<vmem>>, vector<64x1xf32>
    %c0_15 = arith.constant 0 : index
    %c0_16 = arith.constant 0 : index
    %14 = vector.load %arg14[%c0_15, %c0_16] : memref<8x1xf32, #tpu.memory_space<vmem>>, vector<8x1xf32>
    %15 = tpu.iota {dimensions = array<i32: 0>} : vector<8x1xi32>
    %c0_i32 = arith.constant 0 : i32
    %c8_i32 = arith.constant 8 : i32
    %16 = arith.addi %c0_i32, %c8_i32 : i32
    %c1_i32 = arith.constant 1 : i32
    scf.for %arg23 = %c0_i32 to %16 step %c1_i32  : i32 {
      %17 = arith.index_cast %arg23 : i32 to index
      %c0_18 = arith.constant 0 : index
      %c0_19 = arith.constant 0 : index
      %18 = vector.load %arg2[%17, %c0_18, %c0_19] : memref<8x3x640xf32, #tpu.memory_space<vmem>>, vector<1x3x640xf32>
      %19 = vector.shape_cast %18 : vector<1x3x640xf32> to vector<3x640xf32>
      %20 = vector.extract_strided_slice %19 {offsets = [0, 0], sizes = [3, 576], strides = [1, 1]} : vector<3x640xf32> to vector<3x576xf32>
      %c0_20 = arith.constant 0 : index
      %c0_21 = arith.constant 0 : index
      %21 = vector.load %arg16[%c0_20, %c0_21] : memref<72x640xf32, #tpu.memory_space<vmem>>, vector<3x576xf32>
      tpu.vector_store %arg16[%c0_20, %c0_21], %20 {strides = array<i32>} : memref<72x640xf32, #tpu.memory_space<vmem>>, vector<3x576xf32>,
      %22 = vector.extract_strided_slice %19 {offsets = [0, 1], sizes = [3, 576], strides = [1, 1]} : vector<3x640xf32> to vector<3x576xf32>
      %c8 = arith.constant 8 : index
      %c0_22 = arith.constant 0 : index
      %23 = vector.load %arg16[%c8, %c0_22] : memref<72x640xf32, #tpu.memory_space<vmem>>, vector<3x576xf32>
      tpu.vector_store %arg16[%c8, %c0_22], %22 {strides = array<i32>} : memref<72x640xf32, #tpu.memory_space<vmem>>, vector<3x576xf32>,
      %24 = vector.extract_strided_slice %19 {offsets = [0, 2], sizes = [3, 576], strides = [1, 1]} : vector<3x640xf32> to vector<3x576xf32>
      %c16 = arith.constant 16 : index
      %c0_23 = arith.constant 0 : index
      %25 = vector.load %arg16[%c16, %c0_23] : memref<72x640xf32, #tpu.memory_space<vmem>>, vector<3x576xf32>
      tpu.vector_store %arg16[%c16, %c0_23], %24 {strides = array<i32>} : memref<72x640xf32, #tpu.memory_space<vmem>>, vector<3x576xf32>,
      %26 = vector.extract_strided_slice %19 {offsets = [0, 24], sizes = [3, 576], strides = [1, 1]} : vector<3x640xf32> to vector<3x576xf32>
      %c24 = arith.constant 24 : index
      %c0_24 = arith.constant 0 : index
      %27 = vector.load %arg16[%c24, %c0_24] : memref<72x640xf32, #tpu.memory_space<vmem>>, vector<3x576xf32>
      tpu.vector_store %arg16[%c24, %c0_24], %26 {strides = array<i32>} : memref<72x640xf32, #tpu.memory_space<vmem>>, vector<3x576xf32>,
      %28 = vector.extract_strided_slice %19 {offsets = [0, 25], sizes = [3, 576], strides = [1, 1]} : vector<3x640xf32> to vector<3x576xf32>
      %c32 = arith.constant 32 : index
      %c0_25 = arith.constant 0 : index
      %29 = vector.load %arg16[%c32, %c0_25] : memref<72x640xf32, #tpu.memory_space<vmem>>, vector<3x576xf32>
      tpu.vector_store %arg16[%c32, %c0_25], %28 {strides = array<i32>} : memref<72x640xf32, #tpu.memory_space<vmem>>, vector<3x576xf32>,
      %30 = vector.extract_strided_slice %19 {offsets = [0, 26], sizes = [3, 576], strides = [1, 1]} : vector<3x640xf32> to vector<3x576xf32>
      %c40 = arith.constant 40 : index
      %c0_26 = arith.constant 0 : index
      %31 = vector.load %arg16[%c40, %c0_26] : memref<72x640xf32, #tpu.memory_space<vmem>>, vector<3x576xf32>
      tpu.vector_store %arg16[%c40, %c0_26], %30 {strides = array<i32>} : memref<72x640xf32, #tpu.memory_space<vmem>>, vector<3x576xf32>,
      %32 = vector.extract_strided_slice %19 {offsets = [0, 48], sizes = [3, 576], strides = [1, 1]} : vector<3x640xf32> to vector<3x576xf32>
      %c48 = arith.constant 48 : index
      %c0_27 = arith.constant 0 : index
      %33 = vector.load %arg16[%c48, %c0_27] : memref<72x640xf32, #tpu.memory_space<vmem>>, vector<3x576xf32>
      tpu.vector_store %arg16[%c48, %c0_27], %32 {strides = array<i32>} : memref<72x640xf32, #tpu.memory_space<vmem>>, vector<3x576xf32>,
      %34 = vector.extract_strided_slice %19 {offsets = [0, 49], sizes = [3, 576], strides = [1, 1]} : vector<3x640xf32> to vector<3x576xf32>
      %c56 = arith.constant 56 : index
      %c0_28 = arith.constant 0 : index
      %35 = vector.load %arg16[%c56, %c0_28] : memref<72x640xf32, #tpu.memory_space<vmem>>, vector<3x576xf32>
      tpu.vector_store %arg16[%c56, %c0_28], %34 {strides = array<i32>} : memref<72x640xf32, #tpu.memory_space<vmem>>, vector<3x576xf32>,
      %36 = vector.extract_strided_slice %19 {offsets = [0, 50], sizes = [3, 576], strides = [1, 1]} : vector<3x640xf32> to vector<3x576xf32>
      %c64 = arith.constant 64 : index
      %c0_29 = arith.constant 0 : index
      %37 = vector.load %arg16[%c64, %c0_29] : memref<72x640xf32, #tpu.memory_space<vmem>>, vector<3x576xf32>
      tpu.vector_store %arg16[%c64, %c0_29], %36 {strides = array<i32>} : memref<72x640xf32, #tpu.memory_space<vmem>>, vector<3x576xf32>,
      %c0_30 = arith.constant 0 : index
      %c0_31 = arith.constant 0 : index
      %38 = vector.load %arg3[%c0_30, %c0_31] : memref<28x72xf32, #tpu.memory_space<vmem>>, vector<28x72xf32>
      %c0_32 = arith.constant 0 : index
      %c0_33 = arith.constant 0 : index
      %39 = vector.load %arg16[%c0_32, %c0_33] : memref<72x640xf32, #tpu.memory_space<vmem>>, vector<72x640xf32>
      %cst_34 = arith.constant dense<0.000000e+00> : vector<28x640xf32>
      %40 = tpu.matmul %38, %39, %cst_34 {dimension_numbers = #tpu.dot_dimension_numbers<[1], [0], [0], [1], [0, 0, 1, 1], [], []>} : vector<28x72xf32>, vector<72x640xf32>, vector<28x640xf32> -> vector<28x640xf32>
      %41 = vector.broadcast %9 : vector<28x1xf32> to vector<28x640xf32>
      %42 = arith.addf %40, %41 : vector<28x640xf32>
      %cst_35 = arith.constant 0.000000e+00 : f32
      %43 = vector.broadcast %cst_35 : f32 to vector<28x640xf32>
      %44 = arith.cmpf oge, %42, %43 : vector<28x640xf32>
      %45 = vector.broadcast %4 : f32 to vector<28x640xf32>
      %46 = arith.mulf %45, %42 : vector<28x640xf32>
      %47 = arith.select %44, %42, %46 : vector<28x640xi1>, vector<28x640xf32>
      %c0_36 = arith.constant 0 : index
      %c0_37 = arith.constant 0 : index
      %48 = vector.load %arg17[%c0_36, %c0_37] : memref<28x640xf32, #tpu.memory_space<vmem>>, vector<28x640xf32>
      tpu.vector_store %arg17[%c0_36, %c0_37], %47 {strides = array<i32>} : memref<28x640xf32, #tpu.memory_space<vmem>>, vector<28x640xf32>,
      %c0_38 = arith.constant 0 : index
      %c0_39 = arith.constant 0 : index
      %49 = vector.load %arg17[%c0_38, %c0_39] : memref<28x640xf32, #tpu.memory_space<vmem>>, vector<28x512xf32>
      %c0_40 = arith.constant 0 : index
      %c1_41 = arith.constant 1 : index
      %50 = vector.load %arg17[%c0_40, %c1_41] : memref<28x640xf32, #tpu.memory_space<vmem>>, vector<28x512xf32>
      %51 = arith.maximumf %49, %50 : vector<28x512xf32>
      %c0_42 = arith.constant 0 : index
      %c2_43 = arith.constant 2 : index
      %52 = vector.load %arg17[%c0_42, %c2_43] : memref<28x640xf32, #tpu.memory_space<vmem>>, vector<28x512xf32>
      %53 = arith.maximumf %51, %52 : vector<28x512xf32>
      %c0_44 = arith.constant 0 : index
      %c24_45 = arith.constant 24 : index
      %54 = vector.load %arg17[%c0_44, %c24_45] : memref<28x640xf32, #tpu.memory_space<vmem>>, vector<28x512xf32>
      %55 = arith.maximumf %53, %54 : vector<28x512xf32>
      %c0_46 = arith.constant 0 : index
      %c25 = arith.constant 25 : index
      %56 = vector.load %arg17[%c0_46, %c25] : memref<28x640xf32, #tpu.memory_space<vmem>>, vector<28x512xf32>
      %57 = arith.maximumf %55, %56 : vector<28x512xf32>
      %c0_47 = arith.constant 0 : index
      %c26 = arith.constant 26 : index
      %58 = vector.load %arg17[%c0_47, %c26] : memref<28x640xf32, #tpu.memory_space<vmem>>, vector<28x512xf32>
      %59 = arith.maximumf %57, %58 : vector<28x512xf32>
      %c0_48 = arith.constant 0 : index
      %c48_49 = arith.constant 48 : index
      %60 = vector.load %arg17[%c0_48, %c48_49] : memref<28x640xf32, #tpu.memory_space<vmem>>, vector<28x512xf32>
      %61 = arith.maximumf %59, %60 : vector<28x512xf32>
      %c0_50 = arith.constant 0 : index
      %c49 = arith.constant 49 : index
      %62 = vector.load %arg17[%c0_50, %c49] : memref<28x640xf32, #tpu.memory_space<vmem>>, vector<28x512xf32>
      %63 = arith.maximumf %61, %62 : vector<28x512xf32>
      %c0_51 = arith.constant 0 : index
      %c50 = arith.constant 50 : index
      %64 = vector.load %arg17[%c0_51, %c50] : memref<28x640xf32, #tpu.memory_space<vmem>>, vector<28x512xf32>
      %65 = arith.maximumf %63, %64 : vector<28x512xf32>
      %c0_52 = arith.constant 0 : index
      %c0_53 = arith.constant 0 : index
      %66 = vector.load %arg18[%c0_52, %c0_53] : memref<28x512xf32, #tpu.memory_space<vmem>>, vector<28x512xf32>
      tpu.vector_store %arg18[%c0_52, %c0_53], %65 {strides = array<i32>} : memref<28x512xf32, #tpu.memory_space<vmem>>, vector<28x512xf32>,
      %c0_54 = arith.constant 0 : index
      %c0_55 = arith.constant 0 : index
      %67 = vector.load %arg18[%c0_54, %c0_55] : memref<28x512xf32, #tpu.memory_space<vmem>>, vector<28x384xf32>
      %c0_56 = arith.constant 0 : index
      %c0_57 = arith.constant 0 : index
      %68 = vector.load %arg19[%c0_56, %c0_57] : memref<288x384xf32, #tpu.memory_space<vmem>>, vector<28x384xf32>
      tpu.vector_store %arg19[%c0_56, %c0_57], %67 {strides = array<i32>} : memref<288x384xf32, #tpu.memory_space<vmem>>, vector<28x384xf32>,
      %c0_58 = arith.constant 0 : index
      %c2_59 = arith.constant 2 : index
      %69 = vector.load %arg18[%c0_58, %c2_59] : memref<28x512xf32, #tpu.memory_space<vmem>>, vector<28x384xf32>
      %c32_60 = arith.constant 32 : index
      %c0_61 = arith.constant 0 : index
      %70 = vector.load %arg19[%c32_60, %c0_61] : memref<288x384xf32, #tpu.memory_space<vmem>>, vector<28x384xf32>
      tpu.vector_store %arg19[%c32_60, %c0_61], %69 {strides = array<i32>} : memref<288x384xf32, #tpu.memory_space<vmem>>, vector<28x384xf32>,
      %c0_62 = arith.constant 0 : index
      %c4_63 = arith.constant 4 : index
      %71 = vector.load %arg18[%c0_62, %c4_63] : memref<28x512xf32, #tpu.memory_space<vmem>>, vector<28x384xf32>
      %c64_64 = arith.constant 64 : index
      %c0_65 = arith.constant 0 : index
      %72 = vector.load %arg19[%c64_64, %c0_65] : memref<288x384xf32, #tpu.memory_space<vmem>>, vector<28x384xf32>
      tpu.vector_store %arg19[%c64_64, %c0_65], %71 {strides = array<i32>} : memref<288x384xf32, #tpu.memory_space<vmem>>, vector<28x384xf32>,
      %c0_66 = arith.constant 0 : index
      %c48_67 = arith.constant 48 : index
      %73 = vector.load %arg18[%c0_66, %c48_67] : memref<28x512xf32, #tpu.memory_space<vmem>>, vector<28x384xf32>
      %c96 = arith.constant 96 : index
      %c0_68 = arith.constant 0 : index
      %74 = vector.load %arg19[%c96, %c0_68] : memref<288x384xf32, #tpu.memory_space<vmem>>, vector<28x384xf32>
      tpu.vector_store %arg19[%c96, %c0_68], %73 {strides = array<i32>} : memref<288x384xf32, #tpu.memory_space<vmem>>, vector<28x384xf32>,
      %c0_69 = arith.constant 0 : index
      %c50_70 = arith.constant 50 : index
      %75 = vector.load %arg18[%c0_69, %c50_70] : memref<28x512xf32, #tpu.memory_space<vmem>>, vector<28x384xf32>
      %c128 = arith.constant 128 : index
      %c0_71 = arith.constant 0 : index
      %76 = vector.load %arg19[%c128, %c0_71] : memref<288x384xf32, #tpu.memory_space<vmem>>, vector<28x384xf32>
      tpu.vector_store %arg19[%c128, %c0_71], %75 {strides = array<i32>} : memref<288x384xf32, #tpu.memory_space<vmem>>, vector<28x384xf32>,
      %c0_72 = arith.constant 0 : index
      %c52 = arith.constant 52 : index
      %77 = vector.load %arg18[%c0_72, %c52] : memref<28x512xf32, #tpu.memory_space<vmem>>, vector<28x384xf32>
      %c160 = arith.constant 160 : index
      %c0_73 = arith.constant 0 : index
      %78 = vector.load %arg19[%c160, %c0_73] : memref<288x384xf32, #tpu.memory_space<vmem>>, vector<28x384xf32>
      tpu.vector_store %arg19[%c160, %c0_73], %77 {strides = array<i32>} : memref<288x384xf32, #tpu.memory_space<vmem>>, vector<28x384xf32>,
      %c0_74 = arith.constant 0 : index
      %c96_75 = arith.constant 96 : index
      %79 = vector.load %arg18[%c0_74, %c96_75] : memref<28x512xf32, #tpu.memory_space<vmem>>, vector<28x384xf32>
      %c192 = arith.constant 192 : index
      %c0_76 = arith.constant 0 : index
      %80 = vector.load %arg19[%c192, %c0_76] : memref<288x384xf32, #tpu.memory_space<vmem>>, vector<28x384xf32>
      tpu.vector_store %arg19[%c192, %c0_76], %79 {strides = array<i32>} : memref<288x384xf32, #tpu.memory_space<vmem>>, vector<28x384xf32>,
      %c0_77 = arith.constant 0 : index
      %c98 = arith.constant 98 : index
      %81 = vector.load %arg18[%c0_77, %c98] : memref<28x512xf32, #tpu.memory_space<vmem>>, vector<28x384xf32>
      %c224 = arith.constant 224 : index
      %c0_78 = arith.constant 0 : index
      %82 = vector.load %arg19[%c224, %c0_78] : memref<288x384xf32, #tpu.memory_space<vmem>>, vector<28x384xf32>
      tpu.vector_store %arg19[%c224, %c0_78], %81 {strides = array<i32>} : memref<288x384xf32, #tpu.memory_space<vmem>>, vector<28x384xf32>,
      %c0_79 = arith.constant 0 : index
      %c100 = arith.constant 100 : index
      %83 = vector.load %arg18[%c0_79, %c100] : memref<28x512xf32, #tpu.memory_space<vmem>>, vector<28x384xf32>
      %c256 = arith.constant 256 : index
      %c0_80 = arith.constant 0 : index
      %84 = vector.load %arg19[%c256, %c0_80] : memref<288x384xf32, #tpu.memory_space<vmem>>, vector<28x384xf32>
      tpu.vector_store %arg19[%c256, %c0_80], %83 {strides = array<i32>} : memref<288x384xf32, #tpu.memory_space<vmem>>, vector<28x384xf32>,
      %c0_81 = arith.constant 0 : index
      %c0_82 = arith.constant 0 : index
      %85 = vector.load %arg5[%c0_81, %c0_82] : memref<48x288xf32, #tpu.memory_space<vmem>>, vector<48x288xf32>
      %c0_83 = arith.constant 0 : index
      %c0_84 = arith.constant 0 : index
      %86 = vector.load %arg19[%c0_83, %c0_84] : memref<288x384xf32, #tpu.memory_space<vmem>>, vector<288x384xf32>
      %cst_85 = arith.constant dense<0.000000e+00> : vector<48x384xf32>
      %87 = tpu.matmul %85, %86, %cst_85 {dimension_numbers = #tpu.dot_dimension_numbers<[1], [0], [0], [1], [0, 0, 1, 1], [], []>} : vector<48x288xf32>, vector<288x384xf32>, vector<48x384xf32> -> vector<48x384xf32>
      %88 = vector.broadcast %10 : vector<48x1xf32> to vector<48x384xf32>
      %89 = arith.addf %87, %88 : vector<48x384xf32>
      %cst_86 = arith.constant 0.000000e+00 : f32
      %90 = vector.broadcast %cst_86 : f32 to vector<48x384xf32>
      %91 = arith.cmpf oge, %89, %90 : vector<48x384xf32>
      %92 = vector.broadcast %5 : f32 to vector<48x384xf32>
      %93 = arith.mulf %92, %89 : vector<48x384xf32>
      %94 = arith.select %91, %89, %93 : vector<48x384xi1>, vector<48x384xf32>
      %c0_87 = arith.constant 0 : index
      %c0_88 = arith.constant 0 : index
      %95 = vector.load %arg20[%c0_87, %c0_88] : memref<48x384xf32, #tpu.memory_space<vmem>>, vector<48x384xf32>
      tpu.vector_store %arg20[%c0_87, %c0_88], %94 {strides = array<i32>} : memref<48x384xf32, #tpu.memory_space<vmem>>, vector<48x384xf32>,
      %c0_89 = arith.constant 0 : index
      %c0_90 = arith.constant 0 : index
      %96 = vector.load %arg20[%c0_89, %c0_90] : memref<48x384xf32, #tpu.memory_space<vmem>>, vector<48x256xf32>
      %c0_91 = arith.constant 0 : index
      %c2_92 = arith.constant 2 : index
      %97 = vector.load %arg20[%c0_91, %c2_92] : memref<48x384xf32, #tpu.memory_space<vmem>>, vector<48x256xf32>
      %98 = arith.maximumf %96, %97 : vector<48x256xf32>
      %c0_93 = arith.constant 0 : index
      %c4_94 = arith.constant 4 : index
      %99 = vector.load %arg20[%c0_93, %c4_94] : memref<48x384xf32, #tpu.memory_space<vmem>>, vector<48x256xf32>
      %100 = arith.maximumf %98, %99 : vector<48x256xf32>
      %c0_95 = arith.constant 0 : index
      %c48_96 = arith.constant 48 : index
      %101 = vector.load %arg20[%c0_95, %c48_96] : memref<48x384xf32, #tpu.memory_space<vmem>>, vector<48x256xf32>
      %102 = arith.maximumf %100, %101 : vector<48x256xf32>
      %c0_97 = arith.constant 0 : index
      %c50_98 = arith.constant 50 : index
      %103 = vector.load %arg20[%c0_97, %c50_98] : memref<48x384xf32, #tpu.memory_space<vmem>>, vector<48x256xf32>
      %104 = arith.maximumf %102, %103 : vector<48x256xf32>
      %c0_99 = arith.constant 0 : index
      %c52_100 = arith.constant 52 : index
      %105 = vector.load %arg20[%c0_99, %c52_100] : memref<48x384xf32, #tpu.memory_space<vmem>>, vector<48x256xf32>
      %106 = arith.maximumf %104, %105 : vector<48x256xf32>
      %c0_101 = arith.constant 0 : index
      %c96_102 = arith.constant 96 : index
      %107 = vector.load %arg20[%c0_101, %c96_102] : memref<48x384xf32, #tpu.memory_space<vmem>>, vector<48x256xf32>
      %108 = arith.maximumf %106, %107 : vector<48x256xf32>
      %c0_103 = arith.constant 0 : index
      %c98_104 = arith.constant 98 : index
      %109 = vector.load %arg20[%c0_103, %c98_104] : memref<48x384xf32, #tpu.memory_space<vmem>>, vector<48x256xf32>
      %110 = arith.maximumf %108, %109 : vector<48x256xf32>
      %c0_105 = arith.constant 0 : index
      %c100_106 = arith.constant 100 : index
      %111 = vector.load %arg20[%c0_105, %c100_106] : memref<48x384xf32, #tpu.memory_space<vmem>>, vector<48x256xf32>
      %112 = arith.maximumf %110, %111 : vector<48x256xf32>
      %c0_107 = arith.constant 0 : index
      %c0_108 = arith.constant 0 : index
      %113 = vector.load %arg21[%c0_107, %c0_108] : memref<48x256xf32, #tpu.memory_space<vmem>>, vector<48x256xf32>
      tpu.vector_store %arg21[%c0_107, %c0_108], %112 {strides = array<i32>} : memref<48x256xf32, #tpu.memory_space<vmem>>, vector<48x256xf32>,
      %c0_109 = arith.constant 0 : index
      %c0_110 = arith.constant 0 : index
      %114 = vector.load %arg21[%c0_109, %c0_110] : memref<48x256xf32, #tpu.memory_space<vmem>>, vector<48x128xf32>
      %c0_111 = arith.constant 0 : index
      %c0_112 = arith.constant 0 : index
      %115 = vector.load %arg22[%c0_111, %c0_112] : memref<192x128xf32, #tpu.memory_space<vmem>>, vector<48x128xf32>
      tpu.vector_store %arg22[%c0_111, %c0_112], %114 {strides = array<i32>} : memref<192x128xf32, #tpu.memory_space<vmem>>, vector<48x128xf32>,
      %c0_113 = arith.constant 0 : index
      %c4_114 = arith.constant 4 : index
      %116 = vector.load %arg21[%c0_113, %c4_114] : memref<48x256xf32, #tpu.memory_space<vmem>>, vector<48x128xf32>
      %c48_115 = arith.constant 48 : index
      %c0_116 = arith.constant 0 : index
      %117 = vector.load %arg22[%c48_115, %c0_116] : memref<192x128xf32, #tpu.memory_space<vmem>>, vector<48x128xf32>
      tpu.vector_store %arg22[%c48_115, %c0_116], %116 {strides = array<i32>} : memref<192x128xf32, #tpu.memory_space<vmem>>, vector<48x128xf32>,
      %c0_117 = arith.constant 0 : index
      %c96_118 = arith.constant 96 : index
      %118 = vector.load %arg21[%c0_117, %c96_118] : memref<48x256xf32, #tpu.memory_space<vmem>>, vector<48x128xf32>
      %c96_119 = arith.constant 96 : index
      %c0_120 = arith.constant 0 : index
      %119 = vector.load %arg22[%c96_119, %c0_120] : memref<192x128xf32, #tpu.memory_space<vmem>>, vector<48x128xf32>
      tpu.vector_store %arg22[%c96_119, %c0_120], %118 {strides = array<i32>} : memref<192x128xf32, #tpu.memory_space<vmem>>, vector<48x128xf32>,
      %c0_121 = arith.constant 0 : index
      %c100_122 = arith.constant 100 : index
      %120 = vector.load %arg21[%c0_121, %c100_122] : memref<48x256xf32, #tpu.memory_space<vmem>>, vector<48x128xf32>
      %c144 = arith.constant 144 : index
      %c0_123 = arith.constant 0 : index
      %121 = vector.load %arg22[%c144, %c0_123] : memref<192x128xf32, #tpu.memory_space<vmem>>, vector<48x128xf32>
      tpu.vector_store %arg22[%c144, %c0_123], %120 {strides = array<i32>} : memref<192x128xf32, #tpu.memory_space<vmem>>, vector<48x128xf32>,
      %c0_124 = arith.constant 0 : index
      %c0_125 = arith.constant 0 : index
      %122 = vector.load %arg7[%c0_124, %c0_125] : memref<64x192xf32, #tpu.memory_space<vmem>>, vector<64x192xf32>
      %c0_126 = arith.constant 0 : index
      %c0_127 = arith.constant 0 : index
      %123 = vector.load %arg22[%c0_126, %c0_127] : memref<192x128xf32, #tpu.memory_space<vmem>>, vector<192x128xf32>
      %cst_128 = arith.constant dense<0.000000e+00> : vector<64x128xf32>
      %124 = tpu.matmul %122, %123, %cst_128 {dimension_numbers = #tpu.dot_dimension_numbers<[1], [0], [0], [1], [0, 0, 1, 1], [], []>} : vector<64x192xf32>, vector<192x128xf32>, vector<64x128xf32> -> vector<64x128xf32>
      %125 = vector.broadcast %11 : vector<64x1xf32> to vector<64x128xf32>
      %126 = arith.addf %124, %125 : vector<64x128xf32>
      %cst_129 = arith.constant 0.000000e+00 : f32
      %127 = vector.broadcast %cst_129 : f32 to vector<64x128xf32>
      %128 = arith.cmpf oge, %126, %127 : vector<64x128xf32>
      %129 = vector.broadcast %6 : f32 to vector<64x128xf32>
      %130 = arith.mulf %129, %126 : vector<64x128xf32>
      %131 = arith.select %128, %126, %130 : vector<64x128xi1>, vector<64x128xf32>
      %132 = vector.extract_strided_slice %131 {offsets = [0, 0], sizes = [64, 1], strides = [1, 1]} : vector<64x128xf32> to vector<64x1xf32>
      %133 = vector.extract_strided_slice %131 {offsets = [0, 4], sizes = [64, 1], strides = [1, 1]} : vector<64x128xf32> to vector<64x1xf32>
      %134 = vector.extract_strided_slice %131 {offsets = [0, 96], sizes = [64, 1], strides = [1, 1]} : vector<64x128xf32> to vector<64x1xf32>
      %135 = vector.extract_strided_slice %131 {offsets = [0, 100], sizes = [64, 1], strides = [1, 1]} : vector<64x128xf32> to vector<64x1xf32>
      %136 = tpu.concatenate %132, %133, %134, %135 in 0 : vector<64x1xf32>, vector<64x1xf32>, vector<64x1xf32>, vector<64x1xf32> -> vector<256x1xf32>
      %c0_130 = arith.constant 0 : index
      %c0_131 = arith.constant 0 : index
      %137 = vector.load %arg9[%c0_130, %c0_131] : memref<128x256xf32, #tpu.memory_space<vmem>>, vector<128x256xf32>
      %cst_132 = arith.constant dense<0.000000e+00> : vector<128x1xf32>
      %138 = tpu.matmul %137, %136, %cst_132 {dimension_numbers = #tpu.dot_dimension_numbers<[1], [0], [0], [1], [0, 0, 1, 1], [], []>} : vector<128x256xf32>, vector<256x1xf32>, vector<128x1xf32> -> vector<128x1xf32>
      %139 = arith.addf %138, %12 : vector<128x1xf32>
      %cst_133 = arith.constant 0.000000e+00 : f32
      %140 = vector.broadcast %cst_133 : f32 to vector<128x1xf32>
      %141 = arith.cmpf oge, %139, %140 : vector<128x1xf32>
      %142 = vector.broadcast %7 : f32 to vector<128x1xf32>
      %143 = arith.mulf %142, %139 : vector<128x1xf32>
      %144 = arith.select %141, %139, %143 : vector<128x1xi1>, vector<128x1xf32>
      %c0_134 = arith.constant 0 : index
      %c0_135 = arith.constant 0 : index
      %145 = vector.load %arg11[%c0_134, %c0_135] : memref<64x128xf32, #tpu.memory_space<vmem>>, vector<64x128xf32>
      %cst_136 = arith.constant dense<0.000000e+00> : vector<64x1xf32>
      %146 = tpu.matmul %145, %144, %cst_136 {dimension_numbers = #tpu.dot_dimension_numbers<[1], [0], [0], [1], [0, 0, 1, 1], [], []>} : vector<64x128xf32>, vector<128x1xf32>, vector<64x1xf32> -> vector<64x1xf32>
      %147 = arith.addf %146, %13 : vector<64x1xf32>
      %cst_137 = arith.constant 0.000000e+00 : f32
      %148 = vector.broadcast %cst_137 : f32 to vector<64x1xf32>
      %149 = arith.cmpf oge, %147, %148 : vector<64x1xf32>
      %150 = vector.broadcast %8 : f32 to vector<64x1xf32>
      %151 = arith.mulf %150, %147 : vector<64x1xf32>
      %152 = arith.select %149, %147, %151 : vector<64x1xi1>, vector<64x1xf32>
      %c0_138 = arith.constant 0 : index
      %c0_139 = arith.constant 0 : index
      %153 = vector.load %arg13[%c0_138, %c0_139] : memref<8x64xf32, #tpu.memory_space<vmem>>, vector<8x64xf32>
      %cst_140 = arith.constant dense<0.000000e+00> : vector<8x1xf32>
      %154 = tpu.matmul %153, %152, %cst_140 {dimension_numbers = #tpu.dot_dimension_numbers<[1], [0], [0], [1], [0, 0, 1, 1], [], []>} : vector<8x64xf32>, vector<64x1xf32>, vector<8x1xf32> -> vector<8x1xf32>
      %155 = arith.addf %154, %14 : vector<8x1xf32>
      %c0_i32_141 = arith.constant 0 : i32
      %156 = vector.broadcast %c0_i32_141 : i32 to vector<8x1xi32>
      %157 = arith.cmpi eq, %15, %156 : vector<8x1xi32>
      %cst_142 = arith.constant 5.000000e-01 : f32
      %158 = vector.broadcast %cst_142 : f32 to vector<8x1xf32>
      %159 = arith.mulf %158, %155 : vector<8x1xf32>
      %160 = math.tanh %159 : vector<8x1xf32>
      %cst_143 = arith.constant 1.000000e+00 : f32
      %161 = vector.broadcast %cst_143 : f32 to vector<8x1xf32>
      %162 = arith.addf %160, %161 : vector<8x1xf32>
      %cst_144 = arith.constant 5.000000e-01 : f32
      %163 = vector.broadcast %cst_144 : f32 to vector<8x1xf32>
      %164 = arith.mulf %163, %162 : vector<8x1xf32>
      %165 = arith.select %157, %164, %155 : vector<8x1xi1>, vector<8x1xf32>
      %166 = vector.shape_cast %165 : vector<8x1xf32> to vector<1x8x1xf32>
      %167 = arith.index_cast %arg23 : i32 to index
      %c0_145 = arith.constant 0 : index
      %c0_146 = arith.constant 0 : index
      %168 = vector.load %arg15[%167, %c0_145, %c0_146] : memref<8x8x1xf32, #tpu.memory_space<vmem>>, vector<1x8x1xf32>
      tpu.vector_store %arg15[%167, %c0_145, %c0_146], %166 {strides = array<i32>} : memref<8x8x1xf32, #tpu.memory_space<vmem>>, vector<1x8x1xf32>,
    }
    %c8_i32_17 = arith.constant 8 : i32
    return
  }
  func.func @transform_0(%arg0: i32) -> i32 {
    %c0_i32 = arith.constant 0 : i32
    %c0_i32_0 = arith.constant 0 : i32
    return %c0_i32 : i32
  }
  func.func @transform_1(%arg0: i32) -> (i32, i32, i32) {
    %c0_i32 = arith.constant 0 : i32
    %c0_i32_0 = arith.constant 0 : i32
    %c0_i32_1 = arith.constant 0 : i32
    return %arg0, %c0_i32, %c0_i32_0 : i32, i32, i32
  }
  func.func @transform_2(%arg0: i32) -> (i32, i32) {
    %c0_i32 = arith.constant 0 : i32
    %c0_i32_0 = arith.constant 0 : i32
    %c0_i32_1 = arith.constant 0 : i32
    return %c0_i32, %c0_i32_0 : i32, i32
  }
  func.func @transform_3(%arg0: i32) -> (i32, i32) {
    %c0_i32 = arith.constant 0 : i32
    %c0_i32_0 = arith.constant 0 : i32
    %c0_i32_1 = arith.constant 0 : i32
    return %c0_i32, %c0_i32_0 : i32, i32
  }
  func.func @transform_4(%arg0: i32) -> (i32, i32) {
    %c0_i32 = arith.constant 0 : i32
    %c0_i32_0 = arith.constant 0 : i32
    %c0_i32_1 = arith.constant 0 : i32
    return %c0_i32, %c0_i32_0 : i32, i32
  }
  func.func @transform_5(%arg0: i32) -> (i32, i32) {
    %c0_i32 = arith.constant 0 : i32
    %c0_i32_0 = arith.constant 0 : i32
    %c0_i32_1 = arith.constant 0 : i32
    return %c0_i32, %c0_i32_0 : i32, i32
  }
  func.func @transform_6(%arg0: i32) -> (i32, i32) {
    %c0_i32 = arith.constant 0 : i32
    %c0_i32_0 = arith.constant 0 : i32
    %c0_i32_1 = arith.constant 0 : i32
    return %c0_i32, %c0_i32_0 : i32, i32
  }
  func.func @transform_7(%arg0: i32) -> (i32, i32) {
    %c0_i32 = arith.constant 0 : i32
    %c0_i32_0 = arith.constant 0 : i32
    %c0_i32_1 = arith.constant 0 : i32
    return %c0_i32, %c0_i32_0 : i32, i32
  }
  func.func @transform_8(%arg0: i32) -> (i32, i32) {
    %c0_i32 = arith.constant 0 : i32
    %c0_i32_0 = arith.constant 0 : i32
    %c0_i32_1 = arith.constant 0 : i32
    return %c0_i32, %c0_i32_0 : i32, i32
  }
  func.func @transform_9(%arg0: i32) -> (i32, i32) {
    %c0_i32 = arith.constant 0 : i32
    %c0_i32_0 = arith.constant 0 : i32
    %c0_i32_1 = arith.constant 0 : i32
    return %c0_i32, %c0_i32_0 : i32, i32
  }
  func.func @transform_10(%arg0: i32) -> (i32, i32) {
    %c0_i32 = arith.constant 0 : i32
    %c0_i32_0 = arith.constant 0 : i32
    %c0_i32_1 = arith.constant 0 : i32
    return %c0_i32, %c0_i32_0 : i32, i32
  }
  func.func @transform_11(%arg0: i32) -> (i32, i32) {
    %c0_i32 = arith.constant 0 : i32
    %c0_i32_0 = arith.constant 0 : i32
    %c0_i32_1 = arith.constant 0 : i32
    return %c0_i32, %c0_i32_0 : i32, i32
  }
  func.func @transform_12(%arg0: i32) -> (i32, i32) {
    %c0_i32 = arith.constant 0 : i32
    %c0_i32_0 = arith.constant 0 : i32
    %c0_i32_1 = arith.constant 0 : i32
    return %c0_i32, %c0_i32_0 : i32, i32
  }
  func.func @transform_13(%arg0: i32) -> (i32, i32) {
    %c0_i32 = arith.constant 0 : i32
    %c0_i32_0 = arith.constant 0 : i32
    %c0_i32_1 = arith.constant 0 : i32
    return %c0_i32, %c0_i32_0 : i32, i32
  }
  func.func @transform_14(%arg0: i32) -> (i32, i32, i32) {
    %c0_i32 = arith.constant 0 : i32
    %c0_i32_0 = arith.constant 0 : i32
    %c0_i32_1 = arith.constant 0 : i32
    return %arg0, %c0_i32, %c0_i32_0 : i32, i32, i32
  }
}

</mosaic_0001>

<llo_original>
// kernel: rnet_forward.1
$region0: #{rnet_forward.1}
  #allocation0 [shape = 'u32[]', space=smem, size = 0x4, offset = 0x4, fixed_abs, tag = 'smem constant byte address 0x4 - core index']
  #allocation1 [shape = 'u32[144,128]{1,0:T(1,128)}', space=vmem, size = 0x12000, scoped, tag = 'internal scratch']
  #allocation2 [shape = 'f32[72,640]{1,0:T(8,128)}', space=vmem, size = 0x2d000, scoped, tag = 'scratch operand']
  #allocation3 [shape = 'f32[28,640]{1,0:T(8,128)}', space=vmem, size = 0x14000, scoped, tag = 'scratch operand']
  #allocation4 [shape = 'f32[28,512]{1,0:T(8,128)}', space=vmem, size = 0x10000, scoped, tag = 'scratch operand']
  #allocation5 [shape = 'f32[288,384]{1,0:T(8,128)}', space=vmem, size = 0x6c000, scoped, tag = 'scratch operand']
  #allocation6 [shape = 'f32[48,384]{1,0:T(8,128)}', space=vmem, size = 0x12000, scoped, tag = 'scratch operand']
  #allocation7 [shape = 'f32[48,256]{1,0:T(8,128)}', space=vmem, size = 0xc000, scoped, tag = 'scratch operand']
  #allocation8 [shape = 'f32[192,128]{1,0:T(8,128)}', space=vmem, size = 0x18000, scoped, tag = 'scratch operand']
  %s0 = inlined_call_operand.vmem [shape: f32[5], index: 0, kind: input, shape index: {}]
  %s1 = inlined_call_operand.vmem [shape: f32[8,3,640], index: 1, kind: input, shape index: {}]
  %s2 = inlined_call_operand.vmem [shape: f32[28,72], index: 2, kind: input, shape index: {}]
  %s3 = inlined_call_operand.vmem [shape: f32[28,1], index: 3, kind: input, shape index: {}]
  %s4 = inlined_call_operand.vmem [shape: f32[48,288], index: 4, kind: input, shape index: {}]
  %s5 = inlined_call_operand.vmem [shape: f32[48,1], index: 5, kind: input, shape index: {}]
  %s6 = inlined_call_operand.vmem [shape: f32[64,192], index: 6, kind: input, shape index: {}]
  %s7 = inlined_call_operand.vmem [shape: f32[64,1], index: 7, kind: input, shape index: {}]
  %s8 = inlined_call_operand.vmem [shape: f32[128,256], index: 8, kind: input, shape index: {}]
  %s9 = inlined_call_operand.vmem [shape: f32[128,1], index: 9, kind: input, shape index: {}]
  %s10 = inlined_call_operand.vmem [shape: f32[64,128], index: 10, kind: input, shape index: {}]
  %s11 = inlined_call_operand.vmem [shape: f32[64,1], index: 11, kind: input, shape index: {}]
  %s12 = inlined_call_operand.vmem [shape: f32[8,64], index: 12, kind: input, shape index: {}]
  %s13 = inlined_call_operand.vmem [shape: f32[8,1], index: 13, kind: input, shape index: {}]
  %s14 = inlined_call_operand.vmem [shape: f32[8,8,1], index: 14, kind: output, shape index: {}]
  %s15 = sld [smem:[#allocation0]]
  $region77: #{rnet_forward.1} parent=0
    _
  %s17 = ssub.s32 1, %s15
  %s18 = scalar_select 0, %s17, %s15
  $region1: #{rnet_forward.1} parent=0
    #allocation9 [shape = 'u8[512]{0}', space=smem, size = 0x200, scoped, tag = 'input window, operand 0, single buffered']
    #allocation10 [shape = 's32[1]{0}', space=sflag, size = 0x4, scoped, tag = 'scoped memory for rnet_forward.1']
    %19 = vsyncpa [#allocation10], 0
    // Predicated region
    $region2: #{rnet_forward.1} parent=1 // pred_check
      _
    $region3: #{rnet_forward.1} parent=1 // pred_check_branch
      %21 = sbr.rel (0) target = $region5
    $region4: #{rnet_forward.1} parent=1 // pred_region
      %s23 = ssub.s32 16, 16
      %24 = vsyncadd [#allocation10], %s23
      %s26 = sshll.u32 %s0, 4
      %s27 = int_to_ptr.vmem [resolvable:$true] %s26
      %29 = dma.vmem_to_smem %s27, 16, [#allocation9], [#allocation10]
    $region5: #{rnet_forward.1} parent=1 // pred_fallthru
      _
    // Predicated region
    $region6: #{rnet_forward.1} parent=1 // pred_check
      _
    $region7: #{rnet_forward.1} parent=1 // pred_check_branch
      %31 = sbr.rel (0) target = $region9
    $region8: #{rnet_forward.1} parent=1 // pred_region
      _
    $region9: #{rnet_forward.1} parent=1 // pred_fallthru
      _
    // Predicated region
    $region10: #{rnet_forward.1} parent=1 // pred_check
      _
    $region11: #{rnet_forward.1} parent=1 // pred_check_branch
      %33 = sbr.rel (0) target = $region13
    $region12: #{rnet_forward.1} parent=1 // pred_region
      _
    $region13: #{rnet_forward.1} parent=1 // pred_fallthru
      _
    // Predicated region
    $region14: #{rnet_forward.1} parent=1 // pred_check
      _
    $region15: #{rnet_forward.1} parent=1 // pred_check_branch
      %35 = sbr.rel (0) target = $region17
    $region16: #{rnet_forward.1} parent=1 // pred_region
      _
    $region17: #{rnet_forward.1} parent=1 // pred_fallthru
      _
    // Predicated region
    $region18: #{rnet_forward.1} parent=1 // pred_check
      _
    $region19: #{rnet_forward.1} parent=1 // pred_check_branch
      %37 = sbr.rel (0) target = $region21
    $region20: #{rnet_forward.1} parent=1 // pred_region
      _
    $region21: #{rnet_forward.1} parent=1 // pred_fallthru
      _
    // Predicated region
    $region22: #{rnet_forward.1} parent=1 // pred_check
      _
    $region23: #{rnet_forward.1} parent=1 // pred_check_branch
      %39 = sbr.rel (0) target = $region25
    $region24: #{rnet_forward.1} parent=1 // pred_region
      _
    $region25: #{rnet_forward.1} parent=1 // pred_fallthru
      _
    // Predicated region
    $region26: #{rnet_forward.1} parent=1 // pred_check
      _
    $region27: #{rnet_forward.1} parent=1 // pred_check_branch
      %41 = sbr.rel (0) target = $region29
    $region28: #{rnet_forward.1} parent=1 // pred_region
      _
    $region29: #{rnet_forward.1} parent=1 // pred_fallthru
      _
    // Predicated region
    $region30: #{rnet_forward.1} parent=1 // pred_check
      _
    $region31: #{rnet_forward.1} parent=1 // pred_check_branch
      %43 = sbr.rel (0) target = $region33
    $region32: #{rnet_forward.1} parent=1 // pred_region
      _
    $region33: #{rnet_forward.1} parent=1 // pred_fallthru
      _
    // Predicated region
    $region34: #{rnet_forward.1} parent=1 // pred_check
      _
    $region35: #{rnet_forward.1} parent=1 // pred_check_branch
      %45 = sbr.rel (0) target = $region37
    $region36: #{rnet_forward.1} parent=1 // pred_region
      _
    $region37: #{rnet_forward.1} parent=1 // pred_fallthru
      _
    // Predicated region
    $region38: #{rnet_forward.1} parent=1 // pred_check
      _
    $region39: #{rnet_forward.1} parent=1 // pred_check_branch
      %47 = sbr.rel (0) target = $region41
    $region40: #{rnet_forward.1} parent=1 // pred_region
      _
    $region41: #{rnet_forward.1} parent=1 // pred_fallthru
      _
    // Predicated region
    $region42: #{rnet_forward.1} parent=1 // pred_check
      _
    $region43: #{rnet_forward.1} parent=1 // pred_check_branch
      %49 = sbr.rel (0) target = $region45
    $region44: #{rnet_forward.1} parent=1 // pred_region
      _
    $region45: #{rnet_forward.1} parent=1 // pred_fallthru
      _
    // Predicated region
    $region46: #{rnet_forward.1} parent=1 // pred_check
      _
    $region47: #{rnet_forward.1} parent=1 // pred_check_branch
      %51 = sbr.rel (0) target = $region49
    $region48: #{rnet_forward.1} parent=1 // pred_region
      _
    $region49: #{rnet_forward.1} parent=1 // pred_fallthru
      _
    // Predicated region
    $region50: #{rnet_forward.1} parent=1 // pred_check
      _
    $region51: #{rnet_forward.1} parent=1 // pred_check_branch
      %53 = sbr.rel (0) target = $region53
    $region52: #{rnet_forward.1} parent=1 // pred_region
      _
    $region53: #{rnet_forward.1} parent=1 // pred_fallthru
      _
    // Predicated region
    $region54: #{rnet_forward.1} parent=1 // pred_check
      _
    $region55: #{rnet_forward.1} parent=1 // pred_check_branch
      %55 = sbr.rel (0) target = $region57
    $region56: #{rnet_forward.1} parent=1 // pred_region
      _
    $region57: #{rnet_forward.1} parent=1 // pred_fallthru
      _
    // Predicated region
    $region58: #{rnet_forward.1} parent=1 // pred_check
      _
    $region59: #{rnet_forward.1} parent=1 // pred_check_branch
      %57 = sbr.rel (0) target = $region61
    $region60: #{rnet_forward.1} parent=1 // pred_region
      %58 = dma.done [#allocation10], 16
    $region61: #{rnet_forward.1} parent=1 // pred_fallthru
      _
    %59 = sfence
    %60 = vst [vmem:[#allocation2] sm:$0xff] 0.0
    %61 = vst [vmem:[#allocation2 + $0x8] sm:$0xff] 0.0
    %62 = vst [vmem:[#allocation2 + $0x10] sm:$0xff] 0.0
    %63 = vst [vmem:[#allocation2 + $0x18] sm:$0xff] 0.0
    %64 = vst [vmem:[#allocation2 + $0x20] sm:$0xff] 0.0
    %65 = vst [vmem:[#allocation2 + $0x28] sm:$0xff] 0.0
    %66 = vst [vmem:[#allocation2 + $0x30] sm:$0xff] 0.0
    %67 = vst [vmem:[#allocation2 + $0x38] sm:$0xff] 0.0
    %68 = vst [vmem:[#allocation2 + $0x40] sm:$0xff] 0.0
    %69 = vst [vmem:[#allocation2 + $0x48] sm:$0xff] 0.0
    %70 = vst [vmem:[#allocation2 + $0x50] sm:$0xff] 0.0
    %71 = vst [vmem:[#allocation2 + $0x58] sm:$0xff] 0.0
    %72 = vst [vmem:[#allocation2 + $0x60] sm:$0xff] 0.0
    %73 = vst [vmem:[#allocation2 + $0x68] sm:$0xff] 0.0
    %74 = vst [vmem:[#allocation2 + $0x70] sm:$0xff] 0.0
    %75 = vst [vmem:[#allocation2 + $0x78] sm:$0xff] 0.0
    %76 = vst [vmem:[#allocation2 + $0x80] sm:$0xff] 0.0
    %77 = vst [vmem:[#allocation2 + $0x88] sm:$0xff] 0.0
    %78 = vst [vmem:[#allocation2 + $0x90] sm:$0xff] 0.0
    %79 = vst [vmem:[#allocation2 + $0x98] sm:$0xff] 0.0
    %80 = vst [vmem:[#allocation2 + $0xa0] sm:$0xff] 0.0
    %81 = vst [vmem:[#allocation2 + $0xa8] sm:$0xff] 0.0
    %82 = vst [vmem:[#allocation2 + $0xb0] sm:$0xff] 0.0
    %83 = vst [vmem:[#allocation2 + $0xb8] sm:$0xff] 0.0
    %84 = vst [vmem:[#allocation2 + $0xc0] sm:$0xff] 0.0
    %85 = vst [vmem:[#allocation2 + $0xc8] sm:$0xff] 0.0
    %86 = vst [vmem:[#allocation2 + $0xd0] sm:$0xff] 0.0
    %87 = vst [vmem:[#allocation2 + $0xd8] sm:$0xff] 0.0
    %88 = vst [vmem:[#allocation2 + $0xe0] sm:$0xff] 0.0
    %89 = vst [vmem:[#allocation2 + $0xe8] sm:$0xff] 0.0
    %90 = vst [vmem:[#allocation2 + $0xf0] sm:$0xff] 0.0
    %91 = vst [vmem:[#allocation2 + $0xf8] sm:$0xff] 0.0
    %92 = vst [vmem:[#allocation2 + $0x100] sm:$0xff] 0.0
    %93 = vst [vmem:[#allocation2 + $0x108] sm:$0xff] 0.0
    %94 = vst [vmem:[#allocation2 + $0x110] sm:$0xff] 0.0
    %95 = vst [vmem:[#allocation2 + $0x118] sm:$0xff] 0.0
    %96 = vst [vmem:[#allocation2 + $0x120] sm:$0xff] 0.0
    %97 = vst [vmem:[#allocation2 + $0x128] sm:$0xff] 0.0
    %98 = vst [vmem:[#allocation2 + $0x130] sm:$0xff] 0.0
    %99 = vst [vmem:[#allocation2 + $0x138] sm:$0xff] 0.0
    %100 = vst [vmem:[#allocation2 + $0x140] sm:$0xff] 0.0
    %101 = vst [vmem:[#allocation2 + $0x148] sm:$0xff] 0.0
    %102 = vst [vmem:[#allocation2 + $0x150] sm:$0xff] 0.0
    %103 = vst [vmem:[#allocation2 + $0x158] sm:$0xff] 0.0
    %104 = vst [vmem:[#allocation2 + $0x160] sm:$0xff] 0.0
    %105 = vst [vmem:[#allocation5] sm:$0xff] 0.0
    %106 = vst [vmem:[#allocation5 + $0x8] sm:$0xff] 0.0
    %107 = vst [vmem:[#allocation5 + $0x10] sm:$0xff] 0.0
    %108 = vst [vmem:[#allocation5 + $0x18] sm:$0xff] 0.0
    %109 = vst [vmem:[#allocation5 + $0x20] sm:$0xff] 0.0
    %110 = vst [vmem:[#allocation5 + $0x28] sm:$0xff] 0.0
    %111 = vst [vmem:[#allocation5 + $0x30] sm:$0xff] 0.0
    %112 = vst [vmem:[#allocation5 + $0x38] sm:$0xff] 0.0
    %113 = vst [vmem:[#allocation5 + $0x40] sm:$0xff] 0.0
    %114 = vst [vmem:[#allocation5 + $0x48] sm:$0xff] 0.0
    %115 = vst [vmem:[#allocation5 + $0x50] sm:$0xff] 0.0
    %116 = vst [vmem:[#allocation5 + $0x58] sm:$0xff] 0.0
    %117 = vst [vmem:[#allocation5 + $0x60] sm:$0xff] 0.0
    %118 = vst [vmem:[#allocation5 + $0x68] sm:$0xff] 0.0
    %119 = vst [vmem:[#allocation5 + $0x70] sm:$0xff] 0.0
    %120 = vst [vmem:[#allocation5 + $0x78] sm:$0xff] 0.0
    %121 = vst [vmem:[#allocation5 + $0x80] sm:$0xff] 0.0
    %122 = vst [vmem:[#allocation5 + $0x88] sm:$0xff] 0.0
    %123 = vst [vmem:[#allocation5 + $0x90] sm:$0xff] 0.0
    %124 = vst [vmem:[#allocation5 + $0x98] sm:$0xff] 0.0
    %125 = vst [vmem:[#allocation5 + $0xa0] sm:$0xff] 0.0
    %126 = vst [vmem:[#allocation5 + $0xa8] sm:$0xff] 0.0
    %127 = vst [vmem:[#allocation5 + $0xb0] sm:$0xff] 0.0
    %128 = vst [vmem:[#allocation5 + $0xb8] sm:$0xff] 0.0
    %129 = vst [vmem:[#allocation5 + $0xc0] sm:$0xff] 0.0
    %130 = vst [vmem:[#allocation5 + $0xc8] sm:$0xff] 0.0
    %131 = vst [vmem:[#allocation5 + $0xd0] sm:$0xff] 0.0
    %132 = vst [vmem:[#allocation5 + $0xd8] sm:$0xff] 0.0
    %133 = vst [vmem:[#allocation5 + $0xe0] sm:$0xff] 0.0
    %134 = vst [vmem:[#allocation5 + $0xe8] sm:$0xff] 0.0
    %135 = vst [vmem:[#allocation5 + $0xf0] sm:$0xff] 0.0
    %136 = vst [vmem:[#allocation5 + $0xf8] sm:$0xff] 0.0
    %137 = vst [vmem:[#allocation5 + $0x100] sm:$0xff] 0.0
    %138 = vst [vmem:[#allocation5 + $0x108] sm:$0xff] 0.0
    %139 = vst [vmem:[#allocation5 + $0x110] sm:$0xff] 0.0
    %140 = vst [vmem:[#allocation5 + $0x118] sm:$0xff] 0.0
    %141 = vst [vmem:[#allocation5 + $0x120] sm:$0xff] 0.0
    %142 = vst [vmem:[#allocation5 + $0x128] sm:$0xff] 0.0
    %143 = vst [vmem:[#allocation5 + $0x130] sm:$0xff] 0.0
    %144 = vst [vmem:[#allocation5 + $0x138] sm:$0xff] 0.0
    %145 = vst [vmem:[#allocation5 + $0x140] sm:$0xff] 0.0
    %146 = vst [vmem:[#allocation5 + $0x148] sm:$0xff] 0.0
    %147 = vst [vmem:[#allocation5 + $0x150] sm:$0xff] 0.0
    %148 = vst [vmem:[#allocation5 + $0x158] sm:$0xff] 0.0
    %149 = vst [vmem:[#allocation5 + $0x160] sm:$0xff] 0.0
    %150 = vst [vmem:[#allocation5 + $0x168] sm:$0xff] 0.0
    %151 = vst [vmem:[#allocation5 + $0x170] sm:$0xff] 0.0
    %152 = vst [vmem:[#allocation5 + $0x178] sm:$0xff] 0.0
    %153 = vst [vmem:[#allocation5 + $0x180] sm:$0xff] 0.0
    %154 = vst [vmem:[#allocation5 + $0x188] sm:$0xff] 0.0
    %155 = vst [vmem:[#allocation5 + $0x190] sm:$0xff] 0.0
    %156 = vst [vmem:[#allocation5 + $0x198] sm:$0xff] 0.0
    %157 = vst [vmem:[#allocation5 + $0x1a0] sm:$0xff] 0.0
    %158 = vst [vmem:[#allocation5 + $0x1a8] sm:$0xff] 0.0
    %159 = vst [vmem:[#allocation5 + $0x1b0] sm:$0xff] 0.0
    %160 = vst [vmem:[#allocation5 + $0x1b8] sm:$0xff] 0.0
    %161 = vst [vmem:[#allocation5 + $0x1c0] sm:$0xff] 0.0
    %162 = vst [vmem:[#allocation5 + $0x1c8] sm:$0xff] 0.0
    %163 = vst [vmem:[#allocation5 + $0x1d0] sm:$0xff] 0.0
    %164 = vst [vmem:[#allocation5 + $0x1d8] sm:$0xff] 0.0
    %165 = vst [vmem:[#allocation5 + $0x1e0] sm:$0xff] 0.0
    %166 = vst [vmem:[#allocation5 + $0x1e8] sm:$0xff] 0.0
    %167 = vst [vmem:[#allocation5 + $0x1f0] sm:$0xff] 0.0
    %168 = vst [vmem:[#allocation5 + $0x1f8] sm:$0xff] 0.0
    %169 = vst [vmem:[#allocation5 + $0x200] sm:$0xff] 0.0
    %170 = vst [vmem:[#allocation5 + $0x208] sm:$0xff] 0.0
    %171 = vst [vmem:[#allocation5 + $0x210] sm:$0xff] 0.0
    %172 = vst [vmem:[#allocation5 + $0x218] sm:$0xff] 0.0
    %173 = vst [vmem:[#allocation5 + $0x220] sm:$0xff] 0.0
    %174 = vst [vmem:[#allocation5 + $0x228] sm:$0xff] 0.0
    %175 = vst [vmem:[#allocation5 + $0x230] sm:$0xff] 0.0
    %176 = vst [vmem:[#allocation5 + $0x238] sm:$0xff] 0.0
    %177 = vst [vmem:[#allocation5 + $0x240] sm:$0xff] 0.0
    %178 = vst [vmem:[#allocation5 + $0x248] sm:$0xff] 0.0
    %179 = vst [vmem:[#allocation5 + $0x250] sm:$0xff] 0.0
    %180 = vst [vmem:[#allocation5 + $0x258] sm:$0xff] 0.0
    %181 = vst [vmem:[#allocation5 + $0x260] sm:$0xff] 0.0
    %182 = vst [vmem:[#allocation5 + $0x268] sm:$0xff] 0.0
    %183 = vst [vmem:[#allocation5 + $0x270] sm:$0xff] 0.0
    %184 = vst [vmem:[#allocation5 + $0x278] sm:$0xff] 0.0
    %185 = vst [vmem:[#allocation5 + $0x280] sm:$0xff] 0.0
    %186 = vst [vmem:[#allocation5 + $0x288] sm:$0xff] 0.0
    %187 = vst [vmem:[#allocation5 + $0x290] sm:$0xff] 0.0
    %188 = vst [vmem:[#allocation5 + $0x298] sm:$0xff] 0.0
    %189 = vst [vmem:[#allocation5 + $0x2a0] sm:$0xff] 0.0
    %190 = vst [vmem:[#allocation5 + $0x2a8] sm:$0xff] 0.0
    %191 = vst [vmem:[#allocation5 + $0x2b0] sm:$0xff] 0.0
    %192 = vst [vmem:[#allocation5 + $0x2b8] sm:$0xff] 0.0
    %193 = vst [vmem:[#allocation5 + $0x2c0] sm:$0xff] 0.0
    %194 = vst [vmem:[#allocation5 + $0x2c8] sm:$0xff] 0.0
    %195 = vst [vmem:[#allocation5 + $0x2d0] sm:$0xff] 0.0
    %196 = vst [vmem:[#allocation5 + $0x2d8] sm:$0xff] 0.0
    %197 = vst [vmem:[#allocation5 + $0x2e0] sm:$0xff] 0.0
    %198 = vst [vmem:[#allocation5 + $0x2e8] sm:$0xff] 0.0
    %199 = vst [vmem:[#allocation5 + $0x2f0] sm:$0xff] 0.0
    %200 = vst [vmem:[#allocation5 + $0x2f8] sm:$0xff] 0.0
    %201 = vst [vmem:[#allocation5 + $0x300] sm:$0xff] 0.0
    %202 = vst [vmem:[#allocation5 + $0x308] sm:$0xff] 0.0
    %203 = vst [vmem:[#allocation5 + $0x310] sm:$0xff] 0.0
    %204 = vst [vmem:[#allocation5 + $0x318] sm:$0xff] 0.0
    %205 = vst [vmem:[#allocation5 + $0x320] sm:$0xff] 0.0
    %206 = vst [vmem:[#allocation5 + $0x328] sm:$0xff] 0.0
    %207 = vst [vmem:[#allocation5 + $0x330] sm:$0xff] 0.0
    %208 = vst [vmem:[#allocation5 + $0x338] sm:$0xff] 0.0
    %209 = vst [vmem:[#allocation5 + $0x340] sm:$0xff] 0.0
    %210 = vst [vmem:[#allocation5 + $0x348] sm:$0xff] 0.0
    %211 = vst [vmem:[#allocation5 + $0x350] sm:$0xff] 0.0
    %212 = vst [vmem:[#allocation5 + $0x358] sm:$0xff] 0.0
    %s213 = sld [smem:[#allocation9]]
    %s214 = sld [smem:[#allocation9 + $0x1]]
    %s215 = sld [smem:[#allocation9 + $0x2]]
    %s216 = sld [smem:[#allocation9 + $0x3]]
    %s217 = sld [smem:[#allocation9 + $0x4]]
    %v218 = vld [vmem:[%s3] sm:$0xff]
    %v219 = vld [vmem:[%s3 + $0x8] sm:$0xff]
    %v220 = vld [vmem:[%s3 + $0x10] sm:$0xff]
    %v221 = vld [vmem:[%s3 + $0x18] sm:$0xf]
    %v222 = vld [vmem:[%s5] sm:$0xff]
    %v223 = vld [vmem:[%s5 + $0x8] sm:$0xff]
    %v224 = vld [vmem:[%s5 + $0x10] sm:$0xff]
    %v225 = vld [vmem:[%s5 + $0x18] sm:$0xff]
    %v226 = vld [vmem:[%s5 + $0x20] sm:$0xff]
    %v227 = vld [vmem:[%s5 + $0x28] sm:$0xff]
    %v228 = vld [vmem:[%s7] sm:$0xff]
    %v229 = vld [vmem:[%s7 + $0x8] sm:$0xff]
    %v230 = vld [vmem:[%s7 + $0x10] sm:$0xff]
    %v231 = vld [vmem:[%s7 + $0x18] sm:$0xff]
    %v232 = vld [vmem:[%s7 + $0x20] sm:$0xff]
    %v233 = vld [vmem:[%s7 + $0x28] sm:$0xff]
    %v234 = vld [vmem:[%s7 + $0x30] sm:$0xff]
    %v235 = vld [vmem:[%s7 + $0x38] sm:$0xff]
    %v236 = vld [vmem:[%s9] sm:$0xff]
    %v237 = vld [vmem:[%s9 + $0x8] sm:$0xff]
    %v238 = vld [vmem:[%s9 + $0x10] sm:$0xff]
    %v239 = vld [vmem:[%s9 + $0x18] sm:$0xff]
    %v240 = vld [vmem:[%s9 + $0x20] sm:$0xff]
    %v241 = vld [vmem:[%s9 + $0x28] sm:$0xff]
    %v242 = vld [vmem:[%s9 + $0x30] sm:$0xff]
    %v243 = vld [vmem:[%s9 + $0x38] sm:$0xff]
    %v244 = vld [vmem:[%s9 + $0x40] sm:$0xff]
    %v245 = vld [vmem:[%s9 + $0x48] sm:$0xff]
    %v246 = vld [vmem:[%s9 + $0x50] sm:$0xff]
    %v247 = vld [vmem:[%s9 + $0x58] sm:$0xff]
    %v248 = vld [vmem:[%s9 + $0x60] sm:$0xff]
    %v249 = vld [vmem:[%s9 + $0x68] sm:$0xff]
    %v250 = vld [vmem:[%s9 + $0x70] sm:$0xff]
    %v251 = vld [vmem:[%s9 + $0x78] sm:$0xff]
    %v252 = vld [vmem:[%s11] sm:$0xff]
    %v253 = vld [vmem:[%s11 + $0x8] sm:$0xff]
    %v254 = vld [vmem:[%s11 + $0x10] sm:$0xff]
    %v255 = vld [vmem:[%s11 + $0x18] sm:$0xff]
    %v256 = vld [vmem:[%s11 + $0x20] sm:$0xff]
    %v257 = vld [vmem:[%s11 + $0x28] sm:$0xff]
    %v258 = vld [vmem:[%s11 + $0x30] sm:$0xff]
    %v259 = vld [vmem:[%s11 + $0x38] sm:$0xff]
    %v260 = vld [vmem:[%s13] sm:$0xff]
    %v261 = vlaneseq
    %v262 = vshrl.u32 %v261, 7
    loop: start=0, step=1, limit=8
    $region62: #{rnet_forward.1} parent=1 // loop_pre_header
      _
    $region63: #{rnet_forward.1} parent=1 // loop_header
      %s264 = sphi 0, %s268
      %p265 = scmp.ge.s32.totalorder %s264, 8
    $region64: #{rnet_forward.1} parent=1 // loop_header_branch
      %267 = sbr.rel (%p265) target = $region68
    $region65: #{rnet_forward.1} parent=1 // loop_body
      %s269 = smul.u32 %s264, 5
      %s270 = smul.addr %s269, 4
      %s271 = scalar_lea.vmem %s1, %s270
      %v272 = vld [vmem:[%s271] sm:$0x77]
      %v273 = vld [vmem:[%s271 + $0x8] sm:$0x77]
      %v274 = vld [vmem:[%s271 + $0x10] sm:$0x7]
      %v278 = vcombine.high %v272, %v272
      %v279 = vcombine.high %v273, %v273
      %282 = vst [vmem:[#allocation2] sm:$0x7] %v272
      %283 = vst [vmem:[#allocation2 + $0x8] sm:$0x7] %v278
      %284 = vst [vmem:[#allocation2 + $0x10] sm:$0x7] %v273
      %285 = vst [vmem:[#allocation2 + $0x18] sm:$0x7] %v279
      %vm286 = vcmask 518144
      %287 = vst.msk [vmem:[#allocation2 + $0x20] sm:$0x7] %vm286, %v274
      %288 = vrot.lane.b32.xlu0 %v272, 127
      %v289 = vpop.permute.xlu0 %288
      %290 = vrot.lane.b32.xlu0 %v278, 127
      %v291 = vpop.permute.xlu0 %290
      %292 = vrot.lane.b32.xlu0 %v273, 127
      %v293 = vpop.permute.xlu0 %292
      %294 = vrot.lane.b32.xlu0 %v279, 127
      %v295 = vpop.permute.xlu0 %294
      %296 = vrot.lane.b32.xlu0 %v274, 127
      %v297 = vpop.permute.xlu0 %296
      %vm298 = vcmask 1039360
      %v299 = vsel %vm298, %v289, %v291
      %v300 = vsel %vm298, %v291, %v293
      %v301 = vsel %vm298, %v293, %v295
      %v302 = vsel %vm298, %v295, %v297
      %308 = vst [vmem:[#allocation2 + $0x28] sm:$0x7] %v299
      %309 = vst [vmem:[#allocation2 + $0x30] sm:$0x7] %v300
      %310 = vst [vmem:[#allocation2 + $0x38] sm:$0x7] %v301
      %311 = vst [vmem:[#allocation2 + $0x40] sm:$0x7] %v302
      %312 = vst.msk [vmem:[#allocation2 + $0x48] sm:$0x7] %vm286, %v297
      %313 = vrot.lane.b32.xlu0 %v272, 126
      %v314 = vpop.permute.xlu0 %313
      %315 = vrot.lane.b32.xlu0 %v278, 126
      %v316 = vpop.permute.xlu0 %315
      %317 = vrot.lane.b32.xlu0 %v273, 126
      %v318 = vpop.permute.xlu0 %317
      %319 = vrot.lane.b32.xlu0 %v279, 126
      %v320 = vpop.permute.xlu0 %319
      %321 = vrot.lane.b32.xlu0 %v274, 126
      %v322 = vpop.permute.xlu0 %321
      %vm323 = vcmask 1031168
      %v324 = vsel %vm323, %v314, %v316
      %v325 = vsel %vm323, %v316, %v318
      %v326 = vsel %vm323, %v318, %v320
      %v327 = vsel %vm323, %v320, %v322
      %333 = vst [vmem:[#allocation2 + $0x50] sm:$0x7] %v324
      %334 = vst [vmem:[#allocation2 + $0x58] sm:$0x7] %v325
      %335 = vst [vmem:[#allocation2 + $0x60] sm:$0x7] %v326
      %336 = vst [vmem:[#allocation2 + $0x68] sm:$0x7] %v327
      %337 = vst.msk [vmem:[#allocation2 + $0x70] sm:$0x7] %vm286, %v322
      %338 = vrot.lane.b32.xlu0 %v272, 104
      %v339 = vpop.permute.xlu0 %338
      %340 = vrot.lane.b32.xlu0 %v278, 104
      %v341 = vpop.permute.xlu0 %340
      %342 = vrot.lane.b32.xlu0 %v273, 104
      %v343 = vpop.permute.xlu0 %342
      %344 = vrot.lane.b32.xlu0 %v279, 104
      %v345 = vpop.permute.xlu0 %344
      %346 = vrot.lane.b32.xlu0 %v274, 104
      %v347 = vpop.permute.xlu0 %346
      %vm348 = vcmask 850944
      %v349 = vsel %vm348, %v339, %v341
      %v350 = vsel %vm348, %v341, %v343
      %v351 = vsel %vm348, %v343, %v345
      %v352 = vsel %vm348, %v345, %v347
      %358 = vst [vmem:[#allocation2 + $0x78] sm:$0x7] %v349
      %359 = vst [vmem:[#allocation2 + $0x80] sm:$0x7] %v350
      %360 = vst [vmem:[#allocation2 + $0x88] sm:$0x7] %v351
      %361 = vst [vmem:[#allocation2 + $0x90] sm:$0x7] %v352
      %362 = vst.msk [vmem:[#allocation2 + $0x98] sm:$0x7] %vm286, %v347
      %363 = vrot.lane.b32.xlu0 %v272, 103
      %v364 = vpop.permute.xlu0 %363
      %365 = vrot.lane.b32.xlu0 %v278, 103
      %v366 = vpop.permute.xlu0 %365
      %367 = vrot.lane.b32.xlu0 %v273, 103
      %v368 = vpop.permute.xlu0 %367
      %369 = vrot.lane.b32.xlu0 %v279, 103
      %v370 = vpop.permute.xlu0 %369
      %371 = vrot.lane.b32.xlu0 %v274, 103
      %v372 = vpop.permute.xlu0 %371
      %vm373 = vcmask 842752
      %v374 = vsel %vm373, %v364, %v366
      %v375 = vsel %vm373, %v366, %v368
      %v376 = vsel %vm373, %v368, %v370
      %v377 = vsel %vm373, %v370, %v372
      %383 = vst [vmem:[#allocation2 + $0xa0] sm:$0x7] %v374
      %384 = vst [vmem:[#allocation2 + $0xa8] sm:$0x7] %v375
      %385 = vst [vmem:[#allocation2 + $0xb0] sm:$0x7] %v376
      %386 = vst [vmem:[#allocation2 + $0xb8] sm:$0x7] %v377
      %387 = vst.msk [vmem:[#allocation2 + $0xc0] sm:$0x7] %vm286, %v372
      %388 = vrot.lane.b32.xlu0 %v272, 102
      %v389 = vpop.permute.xlu0 %388
      %390 = vrot.lane.b32.xlu0 %v278, 102
      %v391 = vpop.permute.xlu0 %390
      %392 = vrot.lane.b32.xlu0 %v273, 102
      %v393 = vpop.permute.xlu0 %392
      %394 = vrot.lane.b32.xlu0 %v279, 102
      %v395 = vpop.permute.xlu0 %394
      %396 = vrot.lane.b32.xlu0 %v274, 102
      %v397 = vpop.permute.xlu0 %396
      %vm398 = vcmask 834560
      %v399 = vsel %vm398, %v389, %v391
      %v400 = vsel %vm398, %v391, %v393
      %v401 = vsel %vm398, %v393, %v395
      %v402 = vsel %vm398, %v395, %v397
      %408 = vst [vmem:[#allocation2 + $0xc8] sm:$0x7] %v399
      %409 = vst [vmem:[#allocation2 + $0xd0] sm:$0x7] %v400
      %410 = vst [vmem:[#allocation2 + $0xd8] sm:$0x7] %v401
      %411 = vst [vmem:[#allocation2 + $0xe0] sm:$0x7] %v402
      %412 = vst.msk [vmem:[#allocation2 + $0xe8] sm:$0x7] %vm286, %v397
      %413 = vrot.lane.b32.xlu0 %v272, 80
      %v414 = vpop.permute.xlu0 %413
      %415 = vrot.lane.b32.xlu0 %v278, 80
      %v416 = vpop.permute.xlu0 %415
      %417 = vrot.lane.b32.xlu0 %v273, 80
      %v418 = vpop.permute.xlu0 %417
      %419 = vrot.lane.b32.xlu0 %v279, 80
      %v420 = vpop.permute.xlu0 %419
      %421 = vrot.lane.b32.xlu0 %v274, 80
      %v422 = vpop.permute.xlu0 %421
      %vm423 = vcmask 654336
      %v424 = vsel %vm423, %v414, %v416
      %v425 = vsel %vm423, %v416, %v418
      %v426 = vsel %vm423, %v418, %v420
      %v427 = vsel %vm423, %v420, %v422
      %433 = vst [vmem:[#allocation2 + $0xf0] sm:$0x7] %v424
      %434 = vst [vmem:[#allocation2 + $0xf8] sm:$0x7] %v425
      %435 = vst [vmem:[#allocation2 + $0x100] sm:$0x7] %v426
      %436 = vst [vmem:[#allocation2 + $0x108] sm:$0x7] %v427
      %437 = vst.msk [vmem:[#allocation2 + $0x110] sm:$0x7] %vm286, %v422
      %438 = vrot.lane.b32.xlu0 %v272, 79
      %v439 = vpop.permute.xlu0 %438
      %440 = vrot.lane.b32.xlu0 %v278, 79
      %v441 = vpop.permute.xlu0 %440
      %442 = vrot.lane.b32.xlu0 %v273, 79
      %v443 = vpop.permute.xlu0 %442
      %444 = vrot.lane.b32.xlu0 %v279, 79
      %v445 = vpop.permute.xlu0 %444
      %446 = vrot.lane.b32.xlu0 %v274, 79
      %v447 = vpop.permute.xlu0 %446
      %vm448 = vcmask 646144
      %v449 = vsel %vm448, %v439, %v441
      %v450 = vsel %vm448, %v441, %v443
      %v451 = vsel %vm448, %v443, %v445
      %v452 = vsel %vm448, %v445, %v447
      %458 = vst [vmem:[#allocation2 + $0x118] sm:$0x7] %v449
      %459 = vst [vmem:[#allocation2 + $0x120] sm:$0x7] %v450
      %460 = vst [vmem:[#allocation2 + $0x128] sm:$0x7] %v451
      %461 = vst [vmem:[#allocation2 + $0x130] sm:$0x7] %v452
      %462 = vst.msk [vmem:[#allocation2 + $0x138] sm:$0x7] %vm286, %v447
      %463 = vrot.lane.b32.xlu0 %v272, 78
      %v464 = vpop.permute.xlu0 %463
      %465 = vrot.lane.b32.xlu0 %v278, 78
      %v466 = vpop.permute.xlu0 %465
      %467 = vrot.lane.b32.xlu0 %v273, 78
      %v468 = vpop.permute.xlu0 %467
      %469 = vrot.lane.b32.xlu0 %v279, 78
      %v470 = vpop.permute.xlu0 %469
      %471 = vrot.lane.b32.xlu0 %v274, 78
      %v472 = vpop.permute.xlu0 %471
      %vm473 = vcmask 637952
      %v474 = vsel %vm473, %v464, %v466
      %v475 = vsel %vm473, %v466, %v468
      %v476 = vsel %vm473, %v468, %v470
      %v477 = vsel %vm473, %v470, %v472
      %483 = vst [vmem:[#allocation2 + $0x140] sm:$0x7] %v474
      %484 = vst [vmem:[#allocation2 + $0x148] sm:$0x7] %v475
      %485 = vst [vmem:[#allocation2 + $0x150] sm:$0x7] %v476
      %486 = vst [vmem:[#allocation2 + $0x158] sm:$0x7] %v477
      %487 = vst.msk [vmem:[#allocation2 + $0x160] sm:$0x7] %vm286, %v472
      %v488 = vld [vmem:[%s2] sm:$0xff]
      %v489 = vld [vmem:[%s2 + $0x8] sm:$0xff]
      %v490 = vld [vmem:[%s2 + $0x10] sm:$0xff]
      %v491 = vld [vmem:[%s2 + $0x18] sm:$0xf]
      %v492 = vld [vmem:[#allocation2] sm:$0xff]
      %v493 = vld [vmem:[#allocation2 + $0x8] sm:$0xff]
      %v494 = vld [vmem:[#allocation2 + $0x10] sm:$0xff]
      %v495 = vld [vmem:[#allocation2 + $0x18] sm:$0xff]
      %v496 = vld [vmem:[#allocation2 + $0x20] sm:$0xff]
      %v497 = vld [vmem:[#allocation2 + $0x28] sm:$0xff]
      %v498 = vld [vmem:[#allocation2 + $0x30] sm:$0xff]
      %v499 = vld [vmem:[#allocation2 + $0x38] sm:$0xff]
      %v500 = vld [vmem:[#allocation2 + $0x40] sm:$0xff]
      %v501 = vld [vmem:[#allocation2 + $0x48] sm:$0xff]
      %v502 = vld [vmem:[#allocation2 + $0x50] sm:$0xff]
      %v503 = vld [vmem:[#allocation2 + $0x58] sm:$0xff]
      %v504 = vld [vmem:[#allocation2 + $0x60] sm:$0xff]
      %v505 = vld [vmem:[#allocation2 + $0x68] sm:$0xff]
      %v506 = vld [vmem:[#allocation2 + $0x70] sm:$0xff]
      %v507 = vld [vmem:[#allocation2 + $0x78] sm:$0xff]
      %v508 = vld [vmem:[#allocation2 + $0x80] sm:$0xff]
      %v509 = vld [vmem:[#allocation2 + $0x88] sm:$0xff]
      %v510 = vld [vmem:[#allocation2 + $0x90] sm:$0xff]
      %v511 = vld [vmem:[#allocation2 + $0x98] sm:$0xff]
      %v512 = vld [vmem:[#allocation2 + $0xa0] sm:$0xff]
      %v513 = vld [vmem:[#allocation2 + $0xa8] sm:$0xff]
      %v514 = vld [vmem:[#allocation2 + $0xb0] sm:$0xff]
      %v515 = vld [vmem:[#allocation2 + $0xb8] sm:$0xff]
      %v516 = vld [vmem:[#allocation2 + $0xc0] sm:$0xff]
      %v517 = vld [vmem:[#allocation2 + $0xc8] sm:$0xff]
      %v518 = vld [vmem:[#allocation2 + $0xd0] sm:$0xff]
      %v519 = vld [vmem:[#allocation2 + $0xd8] sm:$0xff]
      %v520 = vld [vmem:[#allocation2 + $0xe0] sm:$0xff]
      %v521 = vld [vmem:[#allocation2 + $0xe8] sm:$0xff]
      %v522 = vld [vmem:[#allocation2 + $0xf0] sm:$0xff]
      %v523 = vld [vmem:[#allocation2 + $0xf8] sm:$0xff]
      %v524 = vld [vmem:[#allocation2 + $0x100] sm:$0xff]
      %v525 = vld [vmem:[#allocation2 + $0x108] sm:$0xff]
      %v526 = vld [vmem:[#allocation2 + $0x110] sm:$0xff]
      %v527 = vld [vmem:[#allocation2 + $0x118] sm:$0xff]
      %v528 = vld [vmem:[#allocation2 + $0x120] sm:$0xff]
      %v529 = vld [vmem:[#allocation2 + $0x128] sm:$0xff]
      %v530 = vld [vmem:[#allocation2 + $0x130] sm:$0xff]
      %v531 = vld [vmem:[#allocation2 + $0x138] sm:$0xff]
      %v532 = vld [vmem:[#allocation2 + $0x140] sm:$0xff]
      %v533 = vld [vmem:[#allocation2 + $0x148] sm:$0xff]
      %v534 = vld [vmem:[#allocation2 + $0x150] sm:$0xff]
      %v535 = vld [vmem:[#allocation2 + $0x158] sm:$0xff]
      %v536 = vld [vmem:[#allocation2 + $0x160] sm:$0xff]
      %538 = vset.pattern.permute.xlu0 0
      %539 = vperm.xlu0 %538, %v218
      %v540 = vpop.permute.xlu0 %539
      %543 = vset.pattern.permute.xlu0 0
      %544 = vperm.xlu0 %543, %v219
      %v545 = vpop.permute.xlu0 %544
      %548 = vset.pattern.permute.xlu0 0
      %549 = vperm.xlu0 %548, %v220
      %v550 = vpop.permute.xlu0 %549
      %553 = vset.pattern.permute.xlu0 0
      %554 = vperm.xlu0 %553, %v221
      %v555 = vpop.permute.xlu0 %554
      %vm557 = vcmask 588800
      %v559 = vsel %vm557, %v488, 0
      %v562 = vsel %vm557, %v489, 0
      %v565 = vsel %vm557, %v490, 0
      %v568 = vsel %vm557, %v491, 0
      %570 = vmatprep.subr.mxu0 %v493
      %571 = vmatpush1.msra.mxu0 %v492
      %572 = vmatprep.subr.mxu0 %v498
      %573 = vmatpush1.msra.mxu0 %v497
      %574 = vmatprep.subr.mxu0 %v503
      %575 = vmatpush1.msra.mxu0 %v502
      %576 = vmatprep.subr.mxu0 %v508
      %577 = vmatpush1.msra.mxu0 %v507
      %578 = vmatprep.subr.mxu0 %v513
      %579 = vmatpush1.msra.mxu0 %v512
      %580 = vmatprep.subr.mxu0 %v518
      %581 = vmatpush1.msra.mxu0 %v517
      %582 = vmatprep.subr.mxu0 %v523
      %583 = vmatpush1.msra.mxu0 %v522
      %584 = vmatprep.subr.mxu0 %v528
      %585 = vmatpush1.msra.mxu0 %v527
      %586 = vmatprep.subr.mxu0 %v533
      %587 = vmatpush1.msra.mxu0 %v532
      %588 = vmatprep.subr.mxu0 0.0
      %589 = vmatpush1.msra.mxu0 0.0
      %590 = vmatprep.subr.mxu0 0.0
      %591 = vmatpush1.msra.mxu0 0.0
      %592 = vmatprep.subr.mxu0 0.0
      %593 = vmatpush1.msra.mxu0 0.0
      %594 = vmatprep.subr.mxu0 0.0
      %595 = vmatpush1.msra.mxu0 0.0
      %596 = vmatprep.subr.mxu0 0.0
      %597 = vmatpush1.msra.mxu0 0.0
      %598 = vmatprep.subr.mxu0 0.0
      %599 = vmatpush1.msra.mxu0 0.0
      %600 = vmatprep.subr.mxu0 0.0
      %601 = vmatpush1.msra.mxu0 0.0
      %602 = vmatprep.subr.mxu0 0.0
      %603 = vmatpush1.msra.mxu0 0.0
      %604 = vmatprep.subr.mxu0 0.0
      %605 = vmatpush1.msra.mxu0 0.0
      %606 = vmatprep.subr.mxu0 0.0
      %607 = vmatpush1.msra.mxu0 0.0
      %608 = vmatprep.subr.mxu0 0.0
      %609 = vmatpush1.msra.mxu0 0.0
      %610 = vmatprep.subr.mxu0 0.0
      %611 = vmatpush1.msra.mxu0 0.0
      %612 = vmatprep.subr.mxu0 0.0
      %613 = vmatpush1.msra.mxu0 0.0
      %614 = vmatprep.subr.mxu0 0.0
      %615 = vmatpush1.msra.mxu0 0.0
      %616 = vmatprep.subr.mxu0 0.0
      %617 = vmatpush1.msra.mxu0 0.0
      %618 = vmatprep.subr.mxu0 0.0
      %619 = vmatpush1.msra.mxu0 0.0
      %620 = vmatprep.subr.mxu0 0.0
      %621 = vmatpush1.msra.mxu0 0.0
      %622 = vmatprep.subr.mxu0 0.0
      %623 = vmatpush1.msra.mxu0 0.0
      %624 = vmatprep.subr.mxu0 0.0
      %625 = vmatpush1.msra.mxu0 0.0
      %626 = vmatprep.subr.mxu0 0.0
      %627 = vmatpush1.msra.mxu0 0.0
      %628 = vmatprep.subr.mxu0 0.0
      %629 = vmatpush1.msra.mxu0 0.0
      %630 = vmatprep.subr.mxu0 0.0
      %631 = vmatpush1.msra.mxu0 0.0
      %632 = vmatprep.subr.mxu0 0.0
      %633 = vmatpush1.msra.mxu0 0.0
      %634 = vmatprep.mubr.f32.mxu0 0.0
      %635 = vmatmul.mubr.f32.gmra.mrb[0].mxu0 %v559
      %v636 = vpop.f32.mrb[0].mxu0
      %v637 = vadd.f32 %v540, %v636
      %v638 = vpop.f32.mrb[0].mxu0
      %v639 = vadd.f32 %v540, %v638
      %640 = vmatprep.mubr.f32.mxu0 0.0
      %641 = vmatmul.mubr.f32.gmra.mrb[0].mxu0 %v562
      %v642 = vpop.f32.mrb[0].mxu0
      %v643 = vadd.f32 %v545, %v642
      %v644 = vpop.f32.mrb[0].mxu0
      %v645 = vadd.f32 %v545, %v644
      %646 = vmatprep.mubr.f32.mxu0 0.0
      %647 = vmatmul.mubr.f32.gmra.mrb[0].mxu0 %v565
      %v648 = vpop.f32.mrb[0].mxu0
      %v649 = vadd.f32 %v550, %v648
      %v650 = vpop.f32.mrb[0].mxu0
      %v651 = vadd.f32 %v550, %v650
      %652 = vmatprep.mubr.f32.mxu0 0.0
      %653 = vmatmul.mubr.f32.gmra.mrb[0].mxu0 %v568
      %v654 = vpop.f32.mrb[0].mxu0
      %v655 = vadd.f32 %v555, %v654
      %v656 = vpop.f32.mrb[0].mxu0
      %v657 = vadd.f32 %v555, %v656
      %658 = vdwg.mxu0
      %659 = vmatprep.subr.mxu0 %v495
      %660 = vmatpush1.msra.mxu0 %v494
      %661 = vmatprep.subr.mxu0 %v500
      %662 = vmatpush1.msra.mxu0 %v499
      %663 = vmatprep.subr.mxu0 %v505
      %664 = vmatpush1.msra.mxu0 %v504
      %665 = vmatprep.subr.mxu0 %v510
      %666 = vmatpush1.msra.mxu0 %v509
      %667 = vmatprep.subr.mxu0 %v515
      %668 = vmatpush1.msra.mxu0 %v514
      %669 = vmatprep.subr.mxu0 %v520
      %670 = vmatpush1.msra.mxu0 %v519
      %671 = vmatprep.subr.mxu0 %v525
      %672 = vmatpush1.msra.mxu0 %v524
      %673 = vmatprep.subr.mxu0 %v530
      %674 = vmatpush1.msra.mxu0 %v529
      %675 = vmatprep.subr.mxu0 %v535
      %676 = vmatpush1.msra.mxu0 %v534
      %677 = vmatprep.subr.mxu0 0.0
      %678 = vmatpush1.msra.mxu0 0.0
      %679 = vmatprep.subr.mxu0 0.0
      %680 = vmatpush1.msra.mxu0 0.0
      %681 = vmatprep.subr.mxu0 0.0
      %682 = vmatpush1.msra.mxu0 0.0
      %683 = vmatprep.subr.mxu0 0.0
      %684 = vmatpush1.msra.mxu0 0.0
      %685 = vmatprep.subr.mxu0 0.0
      %686 = vmatpush1.msra.mxu0 0.0
      %687 = vmatprep.subr.mxu0 0.0
      %688 = vmatpush1.msra.mxu0 0.0
      %689 = vmatprep.subr.mxu0 0.0
      %690 = vmatpush1.msra.mxu0 0.0
      %691 = vmatprep.subr.mxu0 0.0
      %692 = vmatpush1.msra.mxu0 0.0
      %693 = vmatprep.subr.mxu0 0.0
      %694 = vmatpush1.msra.mxu0 0.0
      %695 = vmatprep.subr.mxu0 0.0
      %696 = vmatpush1.msra.mxu0 0.0
      %697 = vmatprep.subr.mxu0 0.0
      %698 = vmatpush1.msra.mxu0 0.0
      %699 = vmatprep.subr.mxu0 0.0
      %700 = vmatpush1.msra.mxu0 0.0
      %701 = vmatprep.subr.mxu0 0.0
      %702 = vmatpush1.msra.mxu0 0.0
      %703 = vmatprep.subr.mxu0 0.0
      %704 = vmatpush1.msra.mxu0 0.0
      %705 = vmatprep.subr.mxu0 0.0
      %706 = vmatpush1.msra.mxu0 0.0
      %707 = vmatprep.subr.mxu0 0.0
      %708 = vmatpush1.msra.mxu0 0.0
      %709 = vmatprep.subr.mxu0 0.0
      %710 = vmatpush1.msra.mxu0 0.0
      %711 = vmatprep.subr.mxu0 0.0
      %712 = vmatpush1.msra.mxu0 0.0
      %713 = vmatprep.subr.mxu0 0.0
      %714 = vmatpush1.msra.mxu0 0.0
      %715 = vmatprep.subr.mxu0 0.0
      %716 = vmatpush1.msra.mxu0 0.0
      %717 = vmatprep.subr.mxu0 0.0
      %718 = vmatpush1.msra.mxu0 0.0
      %719 = vmatprep.subr.mxu0 0.0
      %720 = vmatpush1.msra.mxu0 0.0
      %721 = vmatprep.subr.mxu0 0.0
      %722 = vmatpush1.msra.mxu0 0.0
      %723 = vmatprep.mubr.f32.mxu0 0.0
      %724 = vmatmul.mubr.f32.gmra.mrb[0].mxu0 %v559
      %v725 = vpop.f32.mrb[0].mxu0
      %v726 = vadd.f32 %v540, %v725
      %v727 = vpop.f32.mrb[0].mxu0
      %v728 = vadd.f32 %v540, %v727
      %729 = vmatprep.mubr.f32.mxu0 0.0
      %730 = vmatmul.mubr.f32.gmra.mrb[0].mxu0 %v562
      %v731 = vpop.f32.mrb[0].mxu0
      %v732 = vadd.f32 %v545, %v731
      %v733 = vpop.f32.mrb[0].mxu0
      %v734 = vadd.f32 %v545, %v733
      %735 = vmatprep.mubr.f32.mxu0 0.0
      %736 = vmatmul.mubr.f32.gmra.mrb[0].mxu0 %v565
      %v737 = vpop.f32.mrb[0].mxu0
      %v738 = vadd.f32 %v550, %v737
      %v739 = vpop.f32.mrb[0].mxu0
      %v740 = vadd.f32 %v550, %v739
      %741 = vmatprep.mubr.f32.mxu0 0.0
      %742 = vmatmul.mubr.f32.gmra.mrb[0].mxu0 %v568
      %v743 = vpop.f32.mrb[0].mxu0
      %v744 = vadd.f32 %v555, %v743
      %v745 = vpop.f32.mrb[0].mxu0
      %v746 = vadd.f32 %v555, %v745
      %747 = vdwg.mxu0
      %748 = vmatprep.subr.mxu0 0.0
      %749 = vmatpush1.msra.mxu0 %v496
      %750 = vmatprep.subr.mxu0 0.0
      %751 = vmatpush1.msra.mxu0 %v501
      %752 = vmatprep.subr.mxu0 0.0
      %753 = vmatpush1.msra.mxu0 %v506
      %754 = vmatprep.subr.mxu0 0.0
      %755 = vmatpush1.msra.mxu0 %v511
      %756 = vmatprep.subr.mxu0 0.0
      %757 = vmatpush1.msra.mxu0 %v516
      %758 = vmatprep.subr.mxu0 0.0
      %759 = vmatpush1.msra.mxu0 %v521
      %760 = vmatprep.subr.mxu0 0.0
      %761 = vmatpush1.msra.mxu0 %v526
      %762 = vmatprep.subr.mxu0 0.0
      %763 = vmatpush1.msra.mxu0 %v531
      %764 = vmatprep.subr.mxu0 0.0
      %765 = vmatpush1.msra.mxu0 %v536
      %766 = vmatprep.subr.mxu0 0.0
      %767 = vmatpush1.msra.mxu0 0.0
      %768 = vmatprep.subr.mxu0 0.0
      %769 = vmatpush1.msra.mxu0 0.0
      %770 = vmatprep.subr.mxu0 0.0
      %771 = vmatpush1.msra.mxu0 0.0
      %772 = vmatprep.subr.mxu0 0.0
      %773 = vmatpush1.msra.mxu0 0.0
      %774 = vmatprep.subr.mxu0 0.0
      %775 = vmatpush1.msra.mxu0 0.0
      %776 = vmatprep.subr.mxu0 0.0
      %777 = vmatpush1.msra.mxu0 0.0
      %778 = vmatprep.subr.mxu0 0.0
      %779 = vmatpush1.msra.mxu0 0.0
      %780 = vmatprep.subr.mxu0 0.0
      %781 = vmatpush1.msra.mxu0 0.0
      %782 = vmatprep.subr.mxu0 0.0
      %783 = vmatpush1.msra.mxu0 0.0
      %784 = vmatprep.subr.mxu0 0.0
      %785 = vmatpush1.msra.mxu0 0.0
      %786 = vmatprep.subr.mxu0 0.0
      %787 = vmatpush1.msra.mxu0 0.0
      %788 = vmatprep.subr.mxu0 0.0
      %789 = vmatpush1.msra.mxu0 0.0
      %790 = vmatprep.subr.mxu0 0.0
      %791 = vmatpush1.msra.mxu0 0.0
      %792 = vmatprep.subr.mxu0 0.0
      %793 = vmatpush1.msra.mxu0 0.0
      %794 = vmatprep.subr.mxu0 0.0
      %795 = vmatpush1.msra.mxu0 0.0
      %796 = vmatprep.subr.mxu0 0.0
      %797 = vmatpush1.msra.mxu0 0.0
      %798 = vmatprep.subr.mxu0 0.0
      %799 = vmatpush1.msra.mxu0 0.0
      %800 = vmatprep.subr.mxu0 0.0
      %801 = vmatpush1.msra.mxu0 0.0
      %802 = vmatprep.subr.mxu0 0.0
      %803 = vmatpush1.msra.mxu0 0.0
      %804 = vmatprep.subr.mxu0 0.0
      %805 = vmatpush1.msra.mxu0 0.0
      %806 = vmatprep.subr.mxu0 0.0
      %807 = vmatpush1.msra.mxu0 0.0
      %808 = vmatprep.subr.mxu0 0.0
      %809 = vmatpush1.msra.mxu0 0.0
      %810 = vmatprep.subr.mxu0 0.0
      %811 = vmatpush1.msra.mxu0 0.0
      %812 = vmatprep.mubr.f32.mxu0 0.0
      %813 = vmatmul.mubr.f32.gmra.mrb[0].mxu0 %v559
      %v814 = vpop.f32.mrb[0].mxu0
      %v815 = vadd.f32 %v540, %v814
      %v816 = vpop.f32.mrb[0].mxu0
      %817 = vmatprep.mubr.f32.mxu0 0.0
      %818 = vmatmul.mubr.f32.gmra.mrb[0].mxu0 %v562
      %v819 = vpop.f32.mrb[0].mxu0
      %v820 = vadd.f32 %v545, %v819
      %v821 = vpop.f32.mrb[0].mxu0
      %822 = vmatprep.mubr.f32.mxu0 0.0
      %823 = vmatmul.mubr.f32.gmra.mrb[0].mxu0 %v565
      %v824 = vpop.f32.mrb[0].mxu0
      %v825 = vadd.f32 %v550, %v824
      %v826 = vpop.f32.mrb[0].mxu0
      %827 = vmatprep.mubr.f32.mxu0 0.0
      %828 = vmatmul.mubr.f32.gmra.mrb[0].mxu0 %v568
      %v829 = vpop.f32.mrb[0].mxu0
      %v830 = vadd.f32 %v555, %v829
      %v831 = vpop.f32.mrb[0].mxu0
      %832 = vdwg.mxu0
      %vm833 = vcmp.ge.f32.partialorder %v637, 0.0
      %vm834 = vcmp.ge.f32.partialorder %v639, 0.0
      %vm835 = vcmp.ge.f32.partialorder %v726, 0.0
      %vm836 = vcmp.ge.f32.partialorder %v728, 0.0
      %vm837 = vcmp.ge.f32.partialorder %v815, 0.0
      %vm838 = vcmp.ge.f32.partialorder %v643, 0.0
      %vm839 = vcmp.ge.f32.partialorder %v645, 0.0
      %vm840 = vcmp.ge.f32.partialorder %v732, 0.0
      %vm841 = vcmp.ge.f32.partialorder %v734, 0.0
      %vm842 = vcmp.ge.f32.partialorder %v820, 0.0
      %vm843 = vcmp.ge.f32.partialorder %v649, 0.0
      %vm844 = vcmp.ge.f32.partialorder %v651, 0.0
      %vm845 = vcmp.ge.f32.partialorder %v738, 0.0
      %vm846 = vcmp.ge.f32.partialorder %v740, 0.0
      %vm847 = vcmp.ge.f32.partialorder %v825, 0.0
      %vm848 = vcmp.ge.f32.partialorder %v655, 0.0
      %vm849 = vcmp.ge.f32.partialorder %v657, 0.0
      %vm850 = vcmp.ge.f32.partialorder %v744, 0.0
      %vm851 = vcmp.ge.f32.partialorder %v746, 0.0
      %vm852 = vcmp.ge.f32.partialorder %v830, 0.0
      %v853 = vstv %s213
      %v854 = vmul.f32 %v853, %v637
      %v855 = vmul.f32 %v853, %v639
      %v856 = vmul.f32 %v853, %v726
      %v857 = vmul.f32 %v853, %v728
      %v858 = vmul.f32 %v853, %v815
      %v859 = vmul.f32 %v853, %v643
      %v860 = vmul.f32 %v853, %v645
      %v861 = vmul.f32 %v853, %v732
      %v862 = vmul.f32 %v853, %v734
      %v863 = vmul.f32 %v853, %v820
      %v864 = vmul.f32 %v853, %v649
      %v865 = vmul.f32 %v853, %v651
      %v866 = vmul.f32 %v853, %v738
      %v867 = vmul.f32 %v853, %v740
      %v868 = vmul.f32 %v853, %v825
      %v869 = vmul.f32 %v853, %v655
      %v870 = vmul.f32 %v853, %v657
      %v871 = vmul.f32 %v853, %v744
      %v872 = vmul.f32 %v853, %v746
      %v873 = vmul.f32 %v853, %v830
      %v874 = vsel %vm833, %v637, %v854
      %v875 = vsel %vm834, %v639, %v855
      %v876 = vsel %vm835, %v726, %v856
      %v877 = vsel %vm836, %v728, %v857
      %v878 = vsel %vm837, %v815, %v858
      %v879 = vsel %vm838, %v643, %v859
      %v880 = vsel %vm839, %v645, %v860
      %v881 = vsel %vm840, %v732, %v861
      %v882 = vsel %vm841, %v734, %v862
      %v883 = vsel %vm842, %v820, %v863
      %v884 = vsel %vm843, %v649, %v864
      %v885 = vsel %vm844, %v651, %v865
      %v886 = vsel %vm845, %v738, %v866
      %v887 = vsel %vm846, %v740, %v867
      %v888 = vsel %vm847, %v825, %v868
      %v889 = vsel %vm848, %v655, %v869
      %v890 = vsel %vm849, %v657, %v870
      %v891 = vsel %vm850, %v744, %v871
      %v892 = vsel %vm851, %v746, %v872
      %v893 = vsel %vm852, %v830, %v873
      %894 = vst [vmem:[#allocation3] sm:$0xff] %v874
      %895 = vst [vmem:[#allocation3 + $0x8] sm:$0xff] %v875
      %896 = vst [vmem:[#allocation3 + $0x10] sm:$0xff] %v876
      %897 = vst [vmem:[#allocation3 + $0x18] sm:$0xff] %v877
      %898 = vst [vmem:[#allocation3 + $0x20] sm:$0xff] %v878
      %899 = vst [vmem:[#allocation3 + $0x28] sm:$0xff] %v879
      %900 = vst [vmem:[#allocation3 + $0x30] sm:$0xff] %v880
      %901 = vst [vmem:[#allocation3 + $0x38] sm:$0xff] %v881
      %902 = vst [vmem:[#allocation3 + $0x40] sm:$0xff] %v882
      %903 = vst [vmem:[#allocation3 + $0x48] sm:$0xff] %v883
      %904 = vst [vmem:[#allocation3 + $0x50] sm:$0xff] %v884
      %905 = vst [vmem:[#allocation3 + $0x58] sm:$0xff] %v885
      %906 = vst [vmem:[#allocation3 + $0x60] sm:$0xff] %v886
      %907 = vst [vmem:[#allocation3 + $0x68] sm:$0xff] %v887
      %908 = vst [vmem:[#allocation3 + $0x70] sm:$0xff] %v888
      %909 = vst [vmem:[#allocation3 + $0x78] sm:$0xf] %v889
      %910 = vst [vmem:[#allocation3 + $0x80] sm:$0xf] %v890
      %911 = vst [vmem:[#allocation3 + $0x88] sm:$0xf] %v891
      %912 = vst [vmem:[#allocation3 + $0x90] sm:$0xf] %v892
      %913 = vst [vmem:[#allocation3 + $0x98] sm:$0xf] %v893
      %v914 = vld [vmem:[#allocation3] sm:$0xff]
      %v915 = vld [vmem:[#allocation3 + $0x8] sm:$0xff]
      %v916 = vld [vmem:[#allocation3 + $0x10] sm:$0xff]
      %v917 = vld [vmem:[#allocation3 + $0x18] sm:$0xff]
      %v918 = vld [vmem:[#allocation3 + $0x28] sm:$0xff]
      %v919 = vld [vmem:[#allocation3 + $0x30] sm:$0xff]
      %v920 = vld [vmem:[#allocation3 + $0x38] sm:$0xff]
      %v921 = vld [vmem:[#allocation3 + $0x40] sm:$0xff]
      %v922 = vld [vmem:[#allocation3 + $0x50] sm:$0xff]
      %v923 = vld [vmem:[#allocation3 + $0x58] sm:$0xff]
      %v924 = vld [vmem:[#allocation3 + $0x60] sm:$0xff]
      %v925 = vld [vmem:[#allocation3 + $0x68] sm:$0xff]
      %v926 = vld [vmem:[#allocation3 + $0x78] sm:$0xf]
      %v927 = vld [vmem:[#allocation3 + $0x80] sm:$0xf]
      %v928 = vld [vmem:[#allocation3 + $0x88] sm:$0xf]
      %v929 = vld [vmem:[#allocation3 + $0x90] sm:$0xf]
      %v930 = vld [vmem:[#allocation3 + $0x20] sm:$0xff]
      %v931 = vld [vmem:[#allocation3 + $0x48] sm:$0xff]
      %v932 = vld [vmem:[#allocation3 + $0x70] sm:$0xff]
      %v933 = vld [vmem:[#allocation3 + $0x98] sm:$0xf]
      %954 = vrot.lane.b32.xlu0 %v914, 127
      %v955 = vpop.permute.xlu0 %954
      %956 = vrot.lane.b32.xlu0 %v915, 127
      %v957 = vpop.permute.xlu0 %956
      %958 = vrot.lane.b32.xlu0 %v916, 127
      %v959 = vpop.permute.xlu0 %958
      %960 = vrot.lane.b32.xlu0 %v917, 127
      %v961 = vpop.permute.xlu0 %960
      %962 = vrot.lane.b32.xlu0 %v930, 127
      %v963 = vpop.permute.xlu0 %962
      %964 = vrot.lane.b32.xlu0 %v918, 127
      %v965 = vpop.permute.xlu0 %964
      %966 = vrot.lane.b32.xlu0 %v919, 127
      %v967 = vpop.permute.xlu0 %966
      %968 = vrot.lane.b32.xlu0 %v920, 127
      %v969 = vpop.permute.xlu0 %968
      %970 = vrot.lane.b32.xlu0 %v921, 127
      %v971 = vpop.permute.xlu0 %970
      %972 = vrot.lane.b32.xlu0 %v931, 127
      %v973 = vpop.permute.xlu0 %972
      %974 = vrot.lane.b32.xlu0 %v922, 127
      %v975 = vpop.permute.xlu0 %974
      %976 = vrot.lane.b32.xlu0 %v923, 127
      %v977 = vpop.permute.xlu0 %976
      %978 = vrot.lane.b32.xlu0 %v924, 127
      %v979 = vpop.permute.xlu0 %978
      %980 = vrot.lane.b32.xlu0 %v925, 127
      %v981 = vpop.permute.xlu0 %980
      %982 = vrot.lane.b32.xlu0 %v932, 127
      %v983 = vpop.permute.xlu0 %982
      %984 = vrot.lane.b32.xlu0 %v926, 127
      %v985 = vpop.permute.xlu0 %984
      %986 = vrot.lane.b32.xlu0 %v927, 127
      %v987 = vpop.permute.xlu0 %986
      %988 = vrot.lane.b32.xlu0 %v928, 127
      %v989 = vpop.permute.xlu0 %988
      %990 = vrot.lane.b32.xlu0 %v929, 127
      %v991 = vpop.permute.xlu0 %990
      %992 = vrot.lane.b32.xlu0 %v933, 127
      %v993 = vpop.permute.xlu0 %992
      %v994 = vsel %vm298, %v955, %v957
      %v995 = vsel %vm298, %v957, %v959
      %v996 = vsel %vm298, %v959, %v961
      %v997 = vsel %vm298, %v961, %v963
      %v998 = vsel %vm298, %v965, %v967
      %v999 = vsel %vm298, %v967, %v969
      %v1000 = vsel %vm298, %v969, %v971
      %v1001 = vsel %vm298, %v971, %v973
      %v1002 = vsel %vm298, %v975, %v977
      %v1003 = vsel %vm298, %v977, %v979
      %v1004 = vsel %vm298, %v979, %v981
      %v1005 = vsel %vm298, %v981, %v983
      %v1006 = vsel %vm298, %v985, %v987
      %v1007 = vsel %vm298, %v987, %v989
      %v1008 = vsel %vm298, %v989, %v991
      %v1009 = vsel %vm298, %v991, %v993
      %v1026 = vmax.f32 %v914, %v994
      %v1027 = vmax.f32 %v915, %v995
      %v1028 = vmax.f32 %v916, %v996
      %v1029 = vmax.f32 %v917, %v997
      %v1030 = vmax.f32 %v918, %v998
      %v1031 = vmax.f32 %v919, %v999
      %v1032 = vmax.f32 %v920, %v1000
      %v1033 = vmax.f32 %v921, %v1001
      %v1034 = vmax.f32 %v922, %v1002
      %v1035 = vmax.f32 %v923, %v1003
      %v1036 = vmax.f32 %v924, %v1004
      %v1037 = vmax.f32 %v925, %v1005
      %v1038 = vmax.f32 %v926, %v1006
      %v1039 = vmax.f32 %v927, %v1007
      %v1040 = vmax.f32 %v928, %v1008
      %v1041 = vmax.f32 %v929, %v1009
      %1042 = vrot.lane.b32.xlu0 %v914, 126
      %v1043 = vpop.permute.xlu0 %1042
      %1044 = vrot.lane.b32.xlu0 %v915, 126
      %v1045 = vpop.permute.xlu0 %1044
      %1046 = vrot.lane.b32.xlu0 %v916, 126
      %v1047 = vpop.permute.xlu0 %1046
      %1048 = vrot.lane.b32.xlu0 %v917, 126
      %v1049 = vpop.permute.xlu0 %1048
      %1050 = vrot.lane.b32.xlu0 %v930, 126
      %v1051 = vpop.permute.xlu0 %1050
      %1052 = vrot.lane.b32.xlu0 %v918, 126
      %v1053 = vpop.permute.xlu0 %1052
      %1054 = vrot.lane.b32.xlu0 %v919, 126
      %v1055 = vpop.permute.xlu0 %1054
      %1056 = vrot.lane.b32.xlu0 %v920, 126
      %v1057 = vpop.permute.xlu0 %1056
      %1058 = vrot.lane.b32.xlu0 %v921, 126
      %v1059 = vpop.permute.xlu0 %1058
      %1060 = vrot.lane.b32.xlu0 %v931, 126
      %v1061 = vpop.permute.xlu0 %1060
      %1062 = vrot.lane.b32.xlu0 %v922, 126
      %v1063 = vpop.permute.xlu0 %1062
      %1064 = vrot.lane.b32.xlu0 %v923, 126
      %v1065 = vpop.permute.xlu0 %1064
      %1066 = vrot.lane.b32.xlu0 %v924, 126
      %v1067 = vpop.permute.xlu0 %1066
      %1068 = vrot.lane.b32.xlu0 %v925, 126
      %v1069 = vpop.permute.xlu0 %1068
      %1070 = vrot.lane.b32.xlu0 %v932, 126
      %v1071 = vpop.permute.xlu0 %1070
      %1072 = vrot.lane.b32.xlu0 %v926, 126
      %v1073 = vpop.permute.xlu0 %1072
      %1074 = vrot.lane.b32.xlu0 %v927, 126
      %v1075 = vpop.permute.xlu0 %1074
      %1076 = vrot.lane.b32.xlu0 %v928, 126
      %v1077 = vpop.permute.xlu0 %1076
      %1078 = vrot.lane.b32.xlu0 %v929, 126
      %v1079 = vpop.permute.xlu0 %1078
      %1080 = vrot.lane.b32.xlu0 %v933, 126
      %v1081 = vpop.permute.xlu0 %1080
      %v1082 = vsel %vm323, %v1043, %v1045
      %v1083 = vsel %vm323, %v1045, %v1047
      %v1084 = vsel %vm323, %v1047, %v1049
      %v1085 = vsel %vm323, %v1049, %v1051
      %v1086 = vsel %vm323, %v1053, %v1055
      %v1087 = vsel %vm323, %v1055, %v1057
      %v1088 = vsel %vm323, %v1057, %v1059
      %v1089 = vsel %vm323, %v1059, %v1061
      %v1090 = vsel %vm323, %v1063, %v1065
      %v1091 = vsel %vm323, %v1065, %v1067
      %v1092 = vsel %vm323, %v1067, %v1069
      %v1093 = vsel %vm323, %v1069, %v1071
      %v1094 = vsel %vm323, %v1073, %v1075
      %v1095 = vsel %vm323, %v1075, %v1077
      %v1096 = vsel %vm323, %v1077, %v1079
      %v1097 = vsel %vm323, %v1079, %v1081
      %v1114 = vmax.f32 %v1026, %v1082
      %v1115 = vmax.f32 %v1027, %v1083
      %v1116 = vmax.f32 %v1028, %v1084
      %v1117 = vmax.f32 %v1029, %v1085
      %v1118 = vmax.f32 %v1030, %v1086
      %v1119 = vmax.f32 %v1031, %v1087
      %v1120 = vmax.f32 %v1032, %v1088
      %v1121 = vmax.f32 %v1033, %v1089
      %v1122 = vmax.f32 %v1034, %v1090
      %v1123 = vmax.f32 %v1035, %v1091
      %v1124 = vmax.f32 %v1036, %v1092
      %v1125 = vmax.f32 %v1037, %v1093
      %v1126 = vmax.f32 %v1038, %v1094
      %v1127 = vmax.f32 %v1039, %v1095
      %v1128 = vmax.f32 %v1040, %v1096
      %v1129 = vmax.f32 %v1041, %v1097
      %1130 = vrot.lane.b32.xlu0 %v914, 104
      %v1131 = vpop.permute.xlu0 %1130
      %1132 = vrot.lane.b32.xlu0 %v915, 104
      %v1133 = vpop.permute.xlu0 %1132
      %1134 = vrot.lane.b32.xlu0 %v916, 104
      %v1135 = vpop.permute.xlu0 %1134
      %1136 = vrot.lane.b32.xlu0 %v917, 104
      %v1137 = vpop.permute.xlu0 %1136
      %1138 = vrot.lane.b32.xlu0 %v930, 104
      %v1139 = vpop.permute.xlu0 %1138
      %1140 = vrot.lane.b32.xlu0 %v918, 104
      %v1141 = vpop.permute.xlu0 %1140
      %1142 = vrot.lane.b32.xlu0 %v919, 104
      %v1143 = vpop.permute.xlu0 %1142
      %1144 = vrot.lane.b32.xlu0 %v920, 104
      %v1145 = vpop.permute.xlu0 %1144
      %1146 = vrot.lane.b32.xlu0 %v921, 104
      %v1147 = vpop.permute.xlu0 %1146
      %1148 = vrot.lane.b32.xlu0 %v931, 104
      %v1149 = vpop.permute.xlu0 %1148
      %1150 = vrot.lane.b32.xlu0 %v922, 104
      %v1151 = vpop.permute.xlu0 %1150
      %1152 = vrot.lane.b32.xlu0 %v923, 104
      %v1153 = vpop.permute.xlu0 %1152
      %1154 = vrot.lane.b32.xlu0 %v924, 104
      %v1155 = vpop.permute.xlu0 %1154
      %1156 = vrot.lane.b32.xlu0 %v925, 104
      %v1157 = vpop.permute.xlu0 %1156
      %1158 = vrot.lane.b32.xlu0 %v932, 104
      %v1159 = vpop.permute.xlu0 %1158
      %1160 = vrot.lane.b32.xlu0 %v926, 104
      %v1161 = vpop.permute.xlu0 %1160
      %1162 = vrot.lane.b32.xlu0 %v927, 104
      %v1163 = vpop.permute.xlu0 %1162
      %1164 = vrot.lane.b32.xlu0 %v928, 104
      %v1165 = vpop.permute.xlu0 %1164
      %1166 = vrot.lane.b32.xlu0 %v929, 104
      %v1167 = vpop.permute.xlu0 %1166
      %1168 = vrot.lane.b32.xlu0 %v933, 104
      %v1169 = vpop.permute.xlu0 %1168
      %v1170 = vsel %vm348, %v1131, %v1133
      %v1171 = vsel %vm348, %v1133, %v1135
      %v1172 = vsel %vm348, %v1135, %v1137
      %v1173 = vsel %vm348, %v1137, %v1139
      %v1174 = vsel %vm348, %v1141, %v1143
      %v1175 = vsel %vm348, %v1143, %v1145
      %v1176 = vsel %vm348, %v1145, %v1147
      %v1177 = vsel %vm348, %v1147, %v1149
      %v1178 = vsel %vm348, %v1151, %v1153
      %v1179 = vsel %vm348, %v1153, %v1155
      %v1180 = vsel %vm348, %v1155, %v1157
      %v1181 = vsel %vm348, %v1157, %v1159
      %v1182 = vsel %vm348, %v1161, %v1163
      %v1183 = vsel %vm348, %v1163, %v1165
      %v1184 = vsel %vm348, %v1165, %v1167
      %v1185 = vsel %vm348, %v1167, %v1169
      %v1202 = vmax.f32 %v1114, %v1170
      %v1203 = vmax.f32 %v1115, %v1171
      %v1204 = vmax.f32 %v1116, %v1172
      %v1205 = vmax.f32 %v1117, %v1173
      %v1206 = vmax.f32 %v1118, %v1174
      %v1207 = vmax.f32 %v1119, %v1175
      %v1208 = vmax.f32 %v1120, %v1176
      %v1209 = vmax.f32 %v1121, %v1177
      %v1210 = vmax.f32 %v1122, %v1178
      %v1211 = vmax.f32 %v1123, %v1179
      %v1212 = vmax.f32 %v1124, %v1180
      %v1213 = vmax.f32 %v1125, %v1181
      %v1214 = vmax.f32 %v1126, %v1182
      %v1215 = vmax.f32 %v1127, %v1183
      %v1216 = vmax.f32 %v1128, %v1184
      %v1217 = vmax.f32 %v1129, %v1185
      %1218 = vrot.lane.b32.xlu0 %v914, 103
      %v1219 = vpop.permute.xlu0 %1218
      %1220 = vrot.lane.b32.xlu0 %v915, 103
      %v1221 = vpop.permute.xlu0 %1220
      %1222 = vrot.lane.b32.xlu0 %v916, 103
      %v1223 = vpop.permute.xlu0 %1222
      %1224 = vrot.lane.b32.xlu0 %v917, 103
      %v1225 = vpop.permute.xlu0 %1224
      %1226 = vrot.lane.b32.xlu0 %v930, 103
      %v1227 = vpop.permute.xlu0 %1226
      %1228 = vrot.lane.b32.xlu0 %v918, 103
      %v1229 = vpop.permute.xlu0 %1228
      %1230 = vrot.lane.b32.xlu0 %v919, 103
      %v1231 = vpop.permute.xlu0 %1230
      %1232 = vrot.lane.b32.xlu0 %v920, 103
      %v1233 = vpop.permute.xlu0 %1232
      %1234 = vrot.lane.b32.xlu0 %v921, 103
      %v1235 = vpop.permute.xlu0 %1234
      %1236 = vrot.lane.b32.xlu0 %v931, 103
      %v1237 = vpop.permute.xlu0 %1236
      %1238 = vrot.lane.b32.xlu0 %v922, 103
      %v1239 = vpop.permute.xlu0 %1238
      %1240 = vrot.lane.b32.xlu0 %v923, 103
      %v1241 = vpop.permute.xlu0 %1240
      %1242 = vrot.lane.b32.xlu0 %v924, 103
      %v1243 = vpop.permute.xlu0 %1242
      %1244 = vrot.lane.b32.xlu0 %v925, 103
      %v1245 = vpop.permute.xlu0 %1244
      %1246 = vrot.lane.b32.xlu0 %v932, 103
      %v1247 = vpop.permute.xlu0 %1246
      %1248 = vrot.lane.b32.xlu0 %v926, 103
      %v1249 = vpop.permute.xlu0 %1248
      %1250 = vrot.lane.b32.xlu0 %v927, 103
      %v1251 = vpop.permute.xlu0 %1250
      %1252 = vrot.lane.b32.xlu0 %v928, 103
      %v1253 = vpop.permute.xlu0 %1252
      %1254 = vrot.lane.b32.xlu0 %v929, 103
      %v1255 = vpop.permute.xlu0 %1254
      %1256 = vrot.lane.b32.xlu0 %v933, 103
      %v1257 = vpop.permute.xlu0 %1256
      %v1258 = vsel %vm373, %v1219, %v1221
      %v1259 = vsel %vm373, %v1221, %v1223
      %v1260 = vsel %vm373, %v1223, %v1225
      %v1261 = vsel %vm373, %v1225, %v1227
      %v1262 = vsel %vm373, %v1229, %v1231
      %v1263 = vsel %vm373, %v1231, %v1233
      %v1264 = vsel %vm373, %v1233, %v1235
      %v1265 = vsel %vm373, %v1235, %v1237
      %v1266 = vsel %vm373, %v1239, %v1241
      %v1267 = vsel %vm373, %v1241, %v1243
      %v1268 = vsel %vm373, %v1243, %v1245
      %v1269 = vsel %vm373, %v1245, %v1247
      %v1270 = vsel %vm373, %v1249, %v1251
      %v1271 = vsel %vm373, %v1251, %v1253
      %v1272 = vsel %vm373, %v1253, %v1255
      %v1273 = vsel %vm373, %v1255, %v1257
      %v1290 = vmax.f32 %v1202, %v1258
      %v1291 = vmax.f32 %v1203, %v1259
      %v1292 = vmax.f32 %v1204, %v1260
      %v1293 = vmax.f32 %v1205, %v1261
      %v1294 = vmax.f32 %v1206, %v1262
      %v1295 = vmax.f32 %v1207, %v1263
      %v1296 = vmax.f32 %v1208, %v1264
      %v1297 = vmax.f32 %v1209, %v1265
      %v1298 = vmax.f32 %v1210, %v1266
      %v1299 = vmax.f32 %v1211, %v1267
      %v1300 = vmax.f32 %v1212, %v1268
      %v1301 = vmax.f32 %v1213, %v1269
      %v1302 = vmax.f32 %v1214, %v1270
      %v1303 = vmax.f32 %v1215, %v1271
      %v1304 = vmax.f32 %v1216, %v1272
      %v1305 = vmax.f32 %v1217, %v1273
      %1306 = vrot.lane.b32.xlu0 %v914, 102
      %v1307 = vpop.permute.xlu0 %1306
      %1308 = vrot.lane.b32.xlu0 %v915, 102
      %v1309 = vpop.permute.xlu0 %1308
      %1310 = vrot.lane.b32.xlu0 %v916, 102
      %v1311 = vpop.permute.xlu0 %1310
      %1312 = vrot.lane.b32.xlu0 %v917, 102
      %v1313 = vpop.permute.xlu0 %1312
      %1314 = vrot.lane.b32.xlu0 %v930, 102
      %v1315 = vpop.permute.xlu0 %1314
      %1316 = vrot.lane.b32.xlu0 %v918, 102
      %v1317 = vpop.permute.xlu0 %1316
      %1318 = vrot.lane.b32.xlu0 %v919, 102
      %v1319 = vpop.permute.xlu0 %1318
      %1320 = vrot.lane.b32.xlu0 %v920, 102
      %v1321 = vpop.permute.xlu0 %1320
      %1322 = vrot.lane.b32.xlu0 %v921, 102
      %v1323 = vpop.permute.xlu0 %1322
      %1324 = vrot.lane.b32.xlu0 %v931, 102
      %v1325 = vpop.permute.xlu0 %1324
      %1326 = vrot.lane.b32.xlu0 %v922, 102
      %v1327 = vpop.permute.xlu0 %1326
      %1328 = vrot.lane.b32.xlu0 %v923, 102
      %v1329 = vpop.permute.xlu0 %1328
      %1330 = vrot.lane.b32.xlu0 %v924, 102
      %v1331 = vpop.permute.xlu0 %1330
      %1332 = vrot.lane.b32.xlu0 %v925, 102
      %v1333 = vpop.permute.xlu0 %1332
      %1334 = vrot.lane.b32.xlu0 %v932, 102
      %v1335 = vpop.permute.xlu0 %1334
      %1336 = vrot.lane.b32.xlu0 %v926, 102
      %v1337 = vpop.permute.xlu0 %1336
      %1338 = vrot.lane.b32.xlu0 %v927, 102
      %v1339 = vpop.permute.xlu0 %1338
      %1340 = vrot.lane.b32.xlu0 %v928, 102
      %v1341 = vpop.permute.xlu0 %1340
      %1342 = vrot.lane.b32.xlu0 %v929, 102
      %v1343 = vpop.permute.xlu0 %1342
      %1344 = vrot.lane.b32.xlu0 %v933, 102
      %v1345 = vpop.permute.xlu0 %1344
      %v1346 = vsel %vm398, %v1307, %v1309
      %v1347 = vsel %vm398, %v1309, %v1311
      %v1348 = vsel %vm398, %v1311, %v1313
      %v1349 = vsel %vm398, %v1313, %v1315
      %v1350 = vsel %vm398, %v1317, %v1319
      %v1351 = vsel %vm398, %v1319, %v1321
      %v1352 = vsel %vm398, %v1321, %v1323
      %v1353 = vsel %vm398, %v1323, %v1325
      %v1354 = vsel %vm398, %v1327, %v1329
      %v1355 = vsel %vm398, %v1329, %v1331
      %v1356 = vsel %vm398, %v1331, %v1333
      %v1357 = vsel %vm398, %v1333, %v1335
      %v1358 = vsel %vm398, %v1337, %v1339
      %v1359 = vsel %vm398, %v1339, %v1341
      %v1360 = vsel %vm398, %v1341, %v1343
      %v1361 = vsel %vm398, %v1343, %v1345
      %v1378 = vmax.f32 %v1290, %v1346
      %v1379 = vmax.f32 %v1291, %v1347
      %v1380 = vmax.f32 %v1292, %v1348
      %v1381 = vmax.f32 %v1293, %v1349
      %v1382 = vmax.f32 %v1294, %v1350
      %v1383 = vmax.f32 %v1295, %v1351
      %v1384 = vmax.f32 %v1296, %v1352
      %v1385 = vmax.f32 %v1297, %v1353
      %v1386 = vmax.f32 %v1298, %v1354
      %v1387 = vmax.f32 %v1299, %v1355
      %v1388 = vmax.f32 %v1300, %v1356
      %v1389 = vmax.f32 %v1301, %v1357
      %v1390 = vmax.f32 %v1302, %v1358
      %v1391 = vmax.f32 %v1303, %v1359
      %v1392 = vmax.f32 %v1304, %v1360
      %v1393 = vmax.f32 %v1305, %v1361
      %1394 = vrot.lane.b32.xlu0 %v914, 80
      %v1395 = vpop.permute.xlu0 %1394
      %1396 = vrot.lane.b32.xlu0 %v915, 80
      %v1397 = vpop.permute.xlu0 %1396
      %1398 = vrot.lane.b32.xlu0 %v916, 80
      %v1399 = vpop.permute.xlu0 %1398
      %1400 = vrot.lane.b32.xlu0 %v917, 80
      %v1401 = vpop.permute.xlu0 %1400
      %1402 = vrot.lane.b32.xlu0 %v930, 80
      %v1403 = vpop.permute.xlu0 %1402
      %1404 = vrot.lane.b32.xlu0 %v918, 80
      %v1405 = vpop.permute.xlu0 %1404
      %1406 = vrot.lane.b32.xlu0 %v919, 80
      %v1407 = vpop.permute.xlu0 %1406
      %1408 = vrot.lane.b32.xlu0 %v920, 80
      %v1409 = vpop.permute.xlu0 %1408
      %1410 = vrot.lane.b32.xlu0 %v921, 80
      %v1411 = vpop.permute.xlu0 %1410
      %1412 = vrot.lane.b32.xlu0 %v931, 80
      %v1413 = vpop.permute.xlu0 %1412
      %1414 = vrot.lane.b32.xlu0 %v922, 80
      %v1415 = vpop.permute.xlu0 %1414
      %1416 = vrot.lane.b32.xlu0 %v923, 80
      %v1417 = vpop.permute.xlu0 %1416
      %1418 = vrot.lane.b32.xlu0 %v924, 80
      %v1419 = vpop.permute.xlu0 %1418
      %1420 = vrot.lane.b32.xlu0 %v925, 80
      %v1421 = vpop.permute.xlu0 %1420
      %1422 = vrot.lane.b32.xlu0 %v932, 80
      %v1423 = vpop.permute.xlu0 %1422
      %1424 = vrot.lane.b32.xlu0 %v926, 80
      %v1425 = vpop.permute.xlu0 %1424
      %1426 = vrot.lane.b32.xlu0 %v927, 80
      %v1427 = vpop.permute.xlu0 %1426
      %1428 = vrot.lane.b32.xlu0 %v928, 80
      %v1429 = vpop.permute.xlu0 %1428
      %1430 = vrot.lane.b32.xlu0 %v929, 80
      %v1431 = vpop.permute.xlu0 %1430
      %1432 = vrot.lane.b32.xlu0 %v933, 80
      %v1433 = vpop.permute.xlu0 %1432
      %v1434 = vsel %vm423, %v1395, %v1397
      %v1435 = vsel %vm423, %v1397, %v1399
      %v1436 = vsel %vm423, %v1399, %v1401
      %v1437 = vsel %vm423, %v1401, %v1403
      %v1438 = vsel %vm423, %v1405, %v1407
      %v1439 = vsel %vm423, %v1407, %v1409
      %v1440 = vsel %vm423, %v1409, %v1411
      %v1441 = vsel %vm423, %v1411, %v1413
      %v1442 = vsel %vm423, %v1415, %v1417
      %v1443 = vsel %vm423, %v1417, %v1419
      %v1444 = vsel %vm423, %v1419, %v1421
      %v1445 = vsel %vm423, %v1421, %v1423
      %v1446 = vsel %vm423, %v1425, %v1427
      %v1447 = vsel %vm423, %v1427, %v1429
      %v1448 = vsel %vm423, %v1429, %v1431
      %v1449 = vsel %vm423, %v1431, %v1433
      %v1466 = vmax.f32 %v1378, %v1434
      %v1467 = vmax.f32 %v1379, %v1435
      %v1468 = vmax.f32 %v1380, %v1436
      %v1469 = vmax.f32 %v1381, %v1437
      %v1470 = vmax.f32 %v1382, %v1438
      %v1471 = vmax.f32 %v1383, %v1439
      %v1472 = vmax.f32 %v1384, %v1440
      %v1473 = vmax.f32 %v1385, %v1441
      %v1474 = vmax.f32 %v1386, %v1442
      %v1475 = vmax.f32 %v1387, %v1443
      %v1476 = vmax.f32 %v1388, %v1444
      %v1477 = vmax.f32 %v1389, %v1445
      %v1478 = vmax.f32 %v1390, %v1446
      %v1479 = vmax.f32 %v1391, %v1447
      %v1480 = vmax.f32 %v1392, %v1448
      %v1481 = vmax.f32 %v1393, %v1449
      %1482 = vrot.lane.b32.xlu0 %v914, 79
      %v1483 = vpop.permute.xlu0 %1482
      %1484 = vrot.lane.b32.xlu0 %v915, 79
      %v1485 = vpop.permute.xlu0 %1484
      %1486 = vrot.lane.b32.xlu0 %v916, 79
      %v1487 = vpop.permute.xlu0 %1486
      %1488 = vrot.lane.b32.xlu0 %v917, 79
      %v1489 = vpop.permute.xlu0 %1488
      %1490 = vrot.lane.b32.xlu0 %v930, 79
      %v1491 = vpop.permute.xlu0 %1490
      %1492 = vrot.lane.b32.xlu0 %v918, 79
      %v1493 = vpop.permute.xlu0 %1492
      %1494 = vrot.lane.b32.xlu0 %v919, 79
      %v1495 = vpop.permute.xlu0 %1494
      %1496 = vrot.lane.b32.xlu0 %v920, 79
      %v1497 = vpop.permute.xlu0 %1496
      %1498 = vrot.lane.b32.xlu0 %v921, 79
      %v1499 = vpop.permute.xlu0 %1498
      %1500 = vrot.lane.b32.xlu0 %v931, 79
      %v1501 = vpop.permute.xlu0 %1500
      %1502 = vrot.lane.b32.xlu0 %v922, 79
      %v1503 = vpop.permute.xlu0 %1502
      %1504 = vrot.lane.b32.xlu0 %v923, 79
      %v1505 = vpop.permute.xlu0 %1504
      %1506 = vrot.lane.b32.xlu0 %v924, 79
      %v1507 = vpop.permute.xlu0 %1506
      %1508 = vrot.lane.b32.xlu0 %v925, 79
      %v1509 = vpop.permute.xlu0 %1508
      %1510 = vrot.lane.b32.xlu0 %v932, 79
      %v1511 = vpop.permute.xlu0 %1510
      %1512 = vrot.lane.b32.xlu0 %v926, 79
      %v1513 = vpop.permute.xlu0 %1512
      %1514 = vrot.lane.b32.xlu0 %v927, 79
      %v1515 = vpop.permute.xlu0 %1514
      %1516 = vrot.lane.b32.xlu0 %v928, 79
      %v1517 = vpop.permute.xlu0 %1516
      %1518 = vrot.lane.b32.xlu0 %v929, 79
      %v1519 = vpop.permute.xlu0 %1518
      %1520 = vrot.lane.b32.xlu0 %v933, 79
      %v1521 = vpop.permute.xlu0 %1520
      %v1522 = vsel %vm448, %v1483, %v1485
      %v1523 = vsel %vm448, %v1485, %v1487
      %v1524 = vsel %vm448, %v1487, %v1489
      %v1525 = vsel %vm448, %v1489, %v1491
      %v1526 = vsel %vm448, %v1493, %v1495
      %v1527 = vsel %vm448, %v1495, %v1497
      %v1528 = vsel %vm448, %v1497, %v1499
      %v1529 = vsel %vm448, %v1499, %v1501
      %v1530 = vsel %vm448, %v1503, %v1505
      %v1531 = vsel %vm448, %v1505, %v1507
      %v1532 = vsel %vm448, %v1507, %v1509
      %v1533 = vsel %vm448, %v1509, %v1511
      %v1534 = vsel %vm448, %v1513, %v1515
      %v1535 = vsel %vm448, %v1515, %v1517
      %v1536 = vsel %vm448, %v1517, %v1519
      %v1537 = vsel %vm448, %v1519, %v1521
      %v1554 = vmax.f32 %v1466, %v1522
      %v1555 = vmax.f32 %v1467, %v1523
      %v1556 = vmax.f32 %v1468, %v1524
      %v1557 = vmax.f32 %v1469, %v1525
      %v1558 = vmax.f32 %v1470, %v1526
      %v1559 = vmax.f32 %v1471, %v1527
      %v1560 = vmax.f32 %v1472, %v1528
      %v1561 = vmax.f32 %v1473, %v1529
      %v1562 = vmax.f32 %v1474, %v1530
      %v1563 = vmax.f32 %v1475, %v1531
      %v1564 = vmax.f32 %v1476, %v1532
      %v1565 = vmax.f32 %v1477, %v1533
      %v1566 = vmax.f32 %v1478, %v1534
      %v1567 = vmax.f32 %v1479, %v1535
      %v1568 = vmax.f32 %v1480, %v1536
      %v1569 = vmax.f32 %v1481, %v1537
      %1570 = vrot.lane.b32.xlu0 %v914, 78
      %v1571 = vpop.permute.xlu0 %1570
      %1572 = vrot.lane.b32.xlu0 %v915, 78
      %v1573 = vpop.permute.xlu0 %1572
      %1574 = vrot.lane.b32.xlu0 %v916, 78
      %v1575 = vpop.permute.xlu0 %1574
      %1576 = vrot.lane.b32.xlu0 %v917, 78
      %v1577 = vpop.permute.xlu0 %1576
      %1578 = vrot.lane.b32.xlu0 %v930, 78
      %v1579 = vpop.permute.xlu0 %1578
      %1580 = vrot.lane.b32.xlu0 %v918, 78
      %v1581 = vpop.permute.xlu0 %1580
      %1582 = vrot.lane.b32.xlu0 %v919, 78
      %v1583 = vpop.permute.xlu0 %1582
      %1584 = vrot.lane.b32.xlu0 %v920, 78
      %v1585 = vpop.permute.xlu0 %1584
      %1586 = vrot.lane.b32.xlu0 %v921, 78
      %v1587 = vpop.permute.xlu0 %1586
      %1588 = vrot.lane.b32.xlu0 %v931, 78
      %v1589 = vpop.permute.xlu0 %1588
      %1590 = vrot.lane.b32.xlu0 %v922, 78
      %v1591 = vpop.permute.xlu0 %1590
      %1592 = vrot.lane.b32.xlu0 %v923, 78
      %v1593 = vpop.permute.xlu0 %1592
      %1594 = vrot.lane.b32.xlu0 %v924, 78
      %v1595 = vpop.permute.xlu0 %1594
      %1596 = vrot.lane.b32.xlu0 %v925, 78
      %v1597 = vpop.permute.xlu0 %1596
      %1598 = vrot.lane.b32.xlu0 %v932, 78
      %v1599 = vpop.permute.xlu0 %1598
      %1600 = vrot.lane.b32.xlu0 %v926, 78
      %v1601 = vpop.permute.xlu0 %1600
      %1602 = vrot.lane.b32.xlu0 %v927, 78
      %v1603 = vpop.permute.xlu0 %1602
      %1604 = vrot.lane.b32.xlu0 %v928, 78
      %v1605 = vpop.permute.xlu0 %1604
      %1606 = vrot.lane.b32.xlu0 %v929, 78
      %v1607 = vpop.permute.xlu0 %1606
      %1608 = vrot.lane.b32.xlu0 %v933, 78
      %v1609 = vpop.permute.xlu0 %1608
      %v1610 = vsel %vm473, %v1571, %v1573
      %v1611 = vsel %vm473, %v1573, %v1575
      %v1612 = vsel %vm473, %v1575, %v1577
      %v1613 = vsel %vm473, %v1577, %v1579
      %v1614 = vsel %vm473, %v1581, %v1583
      %v1615 = vsel %vm473, %v1583, %v1585
      %v1616 = vsel %vm473, %v1585, %v1587
      %v1617 = vsel %vm473, %v1587, %v1589
      %v1618 = vsel %vm473, %v1591, %v1593
      %v1619 = vsel %vm473, %v1593, %v1595
      %v1620 = vsel %vm473, %v1595, %v1597
      %v1621 = vsel %vm473, %v1597, %v1599
      %v1622 = vsel %vm473, %v1601, %v1603
      %v1623 = vsel %vm473, %v1603, %v1605
      %v1624 = vsel %vm473, %v1605, %v1607
      %v1625 = vsel %vm473, %v1607, %v1609
      %v1642 = vmax.f32 %v1554, %v1610
      %v1643 = vmax.f32 %v1555, %v1611
      %v1644 = vmax.f32 %v1556, %v1612
      %v1645 = vmax.f32 %v1557, %v1613
      %v1646 = vmax.f32 %v1558, %v1614
      %v1647 = vmax.f32 %v1559, %v1615
      %v1648 = vmax.f32 %v1560, %v1616
      %v1649 = vmax.f32 %v1561, %v1617
      %v1650 = vmax.f32 %v1562, %v1618
      %v1651 = vmax.f32 %v1563, %v1619
      %v1652 = vmax.f32 %v1564, %v1620
      %v1653 = vmax.f32 %v1565, %v1621
      %v1654 = vmax.f32 %v1566, %v1622
      %v1655 = vmax.f32 %v1567, %v1623
      %v1656 = vmax.f32 %v1568, %v1624
      %v1657 = vmax.f32 %v1569, %v1625
      %1658 = vst [vmem:[#allocation4] sm:$0xff] %v1642
      %1659 = vst [vmem:[#allocation4 + $0x8] sm:$0xff] %v1643
      %1660 = vst [vmem:[#allocation4 + $0x10] sm:$0xff] %v1644
      %1661 = vst [vmem:[#allocation4 + $0x18] sm:$0xff] %v1645
      %1662 = vst [vmem:[#allocation4 + $0x20] sm:$0xff] %v1646
      %1663 = vst [vmem:[#allocation4 + $0x28] sm:$0xff] %v1647
      %1664 = vst [vmem:[#allocation4 + $0x30] sm:$0xff] %v1648
      %1665 = vst [vmem:[#allocation4 + $0x38] sm:$0xff] %v1649
      %1666 = vst [vmem:[#allocation4 + $0x40] sm:$0xff] %v1650
      %1667 = vst [vmem:[#allocation4 + $0x48] sm:$0xff] %v1651
      %1668 = vst [vmem:[#allocation4 + $0x50] sm:$0xff] %v1652
      %1669 = vst [vmem:[#allocation4 + $0x58] sm:$0xff] %v1653
      %1670 = vst [vmem:[#allocation4 + $0x60] sm:$0xf] %v1654
      %1671 = vst [vmem:[#allocation4 + $0x68] sm:$0xf] %v1655
      %1672 = vst [vmem:[#allocation4 + $0x70] sm:$0xf] %v1656
      %1673 = vst [vmem:[#allocation4 + $0x78] sm:$0xf] %v1657
      %v1674 = vld [vmem:[#allocation4] sm:$0xff]
      %v1675 = vld [vmem:[#allocation4 + $0x8] sm:$0xff]
      %v1676 = vld [vmem:[#allocation4 + $0x10] sm:$0xff]
      %v1677 = vld [vmem:[#allocation4 + $0x20] sm:$0xff]
      %v1678 = vld [vmem:[#allocation4 + $0x28] sm:$0xff]
      %v1679 = vld [vmem:[#allocation4 + $0x30] sm:$0xff]
      %v1680 = vld [vmem:[#allocation4 + $0x40] sm:$0xff]
      %v1681 = vld [vmem:[#allocation4 + $0x48] sm:$0xff]
      %v1682 = vld [vmem:[#allocation4 + $0x50] sm:$0xff]
      %v1683 = vld [vmem:[#allocation4 + $0x60] sm:$0xf]
      %v1684 = vld [vmem:[#allocation4 + $0x68] sm:$0xf]
      %v1685 = vld [vmem:[#allocation4 + $0x70] sm:$0xf]
      %1686 = vst [vmem:[#allocation5] sm:$0xff] %v1674
      %1687 = vst [vmem:[#allocation5 + $0x8] sm:$0xff] %v1675
      %1688 = vst [vmem:[#allocation5 + $0x10] sm:$0xff] %v1676
      %1689 = vst [vmem:[#allocation5 + $0x18] sm:$0xff] %v1677
      %1690 = vst [vmem:[#allocation5 + $0x20] sm:$0xff] %v1678
      %1691 = vst [vmem:[#allocation5 + $0x28] sm:$0xff] %v1679
      %1692 = vst [vmem:[#allocation5 + $0x30] sm:$0xff] %v1680
      %1693 = vst [vmem:[#allocation5 + $0x38] sm:$0xff] %v1681
      %1694 = vst [vmem:[#allocation5 + $0x40] sm:$0xff] %v1682
      %1695 = vst [vmem:[#allocation5 + $0x48] sm:$0xf] %v1683
      %1696 = vst [vmem:[#allocation5 + $0x50] sm:$0xf] %v1684
      %1697 = vst [vmem:[#allocation5 + $0x58] sm:$0xf] %v1685
      %v1698 = vld [vmem:[#allocation4] sm:$0xff]
      %v1699 = vld [vmem:[#allocation4 + $0x8] sm:$0xff]
      %v1700 = vld [vmem:[#allocation4 + $0x10] sm:$0xff]
      %v1701 = vld [vmem:[#allocation4 + $0x18] sm:$0xff]
      %v1702 = vld [vmem:[#allocation4 + $0x20] sm:$0xff]
      %v1703 = vld [vmem:[#allocation4 + $0x28] sm:$0xff]
      %v1704 = vld [vmem:[#allocation4 + $0x30] sm:$0xff]
      %v1705 = vld [vmem:[#allocation4 + $0x38] sm:$0xff]
      %v1706 = vld [vmem:[#allocation4 + $0x40] sm:$0xff]
      %v1707 = vld [vmem:[#allocation4 + $0x48] sm:$0xff]
      %v1708 = vld [vmem:[#allocation4 + $0x50] sm:$0xff]
      %v1709 = vld [vmem:[#allocation4 + $0x58] sm:$0xff]
      %v1710 = vld [vmem:[#allocation4 + $0x60] sm:$0xf]
      %v1711 = vld [vmem:[#allocation4 + $0x68] sm:$0xf]
      %v1712 = vld [vmem:[#allocation4 + $0x70] sm:$0xf]
      %v1713 = vld [vmem:[#allocation4 + $0x78] sm:$0xf]
      %1730 = vrot.lane.b32.xlu0 %v1698, 126
      %v1731 = vpop.permute.xlu0 %1730
      %1732 = vrot.lane.b32.xlu0 %v1699, 126
      %v1733 = vpop.permute.xlu0 %1732
      %1734 = vrot.lane.b32.xlu0 %v1700, 126
      %v1735 = vpop.permute.xlu0 %1734
      %1736 = vrot.lane.b32.xlu0 %v1701, 126
      %v1737 = vpop.permute.xlu0 %1736
      %1738 = vrot.lane.b32.xlu0 %v1702, 126
      %v1739 = vpop.permute.xlu0 %1738
      %1740 = vrot.lane.b32.xlu0 %v1703, 126
      %v1741 = vpop.permute.xlu0 %1740
      %1742 = vrot.lane.b32.xlu0 %v1704, 126
      %v1743 = vpop.permute.xlu0 %1742
      %1744 = vrot.lane.b32.xlu0 %v1705, 126
      %v1745 = vpop.permute.xlu0 %1744
      %1746 = vrot.lane.b32.xlu0 %v1706, 126
      %v1747 = vpop.permute.xlu0 %1746
      %1748 = vrot.lane.b32.xlu0 %v1707, 126
      %v1749 = vpop.permute.xlu0 %1748
      %1750 = vrot.lane.b32.xlu0 %v1708, 126
      %v1751 = vpop.permute.xlu0 %1750
      %1752 = vrot.lane.b32.xlu0 %v1709, 126
      %v1753 = vpop.permute.xlu0 %1752
      %1754 = vrot.lane.b32.xlu0 %v1710, 126
      %v1755 = vpop.permute.xlu0 %1754
      %1756 = vrot.lane.b32.xlu0 %v1711, 126
      %v1757 = vpop.permute.xlu0 %1756
      %1758 = vrot.lane.b32.xlu0 %v1712, 126
      %v1759 = vpop.permute.xlu0 %1758
      %1760 = vrot.lane.b32.xlu0 %v1713, 126
      %v1761 = vpop.permute.xlu0 %1760
      %v1762 = vsel %vm323, %v1731, %v1733
      %v1763 = vsel %vm323, %v1733, %v1735
      %v1764 = vsel %vm323, %v1735, %v1737
      %v1765 = vsel %vm323, %v1739, %v1741
      %v1766 = vsel %vm323, %v1741, %v1743
      %v1767 = vsel %vm323, %v1743, %v1745
      %v1768 = vsel %vm323, %v1747, %v1749
      %v1769 = vsel %vm323, %v1749, %v1751
      %v1770 = vsel %vm323, %v1751, %v1753
      %v1771 = vsel %vm323, %v1755, %v1757
      %v1772 = vsel %vm323, %v1757, %v1759
      %v1773 = vsel %vm323, %v1759, %v1761
      %1786 = vst [vmem:[#allocation5 + $0x60] sm:$0xff] %v1762
      %1787 = vst [vmem:[#allocation5 + $0x68] sm:$0xff] %v1763
      %1788 = vst [vmem:[#allocation5 + $0x70] sm:$0xff] %v1764
      %1789 = vst [vmem:[#allocation5 + $0x78] sm:$0xff] %v1765
      %1790 = vst [vmem:[#allocation5 + $0x80] sm:$0xff] %v1766
      %1791 = vst [vmem:[#allocation5 + $0x88] sm:$0xff] %v1767
      %1792 = vst [vmem:[#allocation5 + $0x90] sm:$0xff] %v1768
      %1793 = vst [vmem:[#allocation5 + $0x98] sm:$0xff] %v1769
      %1794 = vst [vmem:[#allocation5 + $0xa0] sm:$0xff] %v1770
      %1795 = vst [vmem:[#allocation5 + $0xa8] sm:$0xf] %v1771
      %1796 = vst [vmem:[#allocation5 + $0xb0] sm:$0xf] %v1772
      %1797 = vst [vmem:[#allocation5 + $0xb8] sm:$0xf] %v1773
      %v1798 = vld [vmem:[#allocation4] sm:$0xff]
      %v1799 = vld [vmem:[#allocation4 + $0x8] sm:$0xff]
      %v1800 = vld [vmem:[#allocation4 + $0x10] sm:$0xff]
      %v1801 = vld [vmem:[#allocation4 + $0x18] sm:$0xff]
      %v1802 = vld [vmem:[#allocation4 + $0x20] sm:$0xff]
      %v1803 = vld [vmem:[#allocation4 + $0x28] sm:$0xff]
      %v1804 = vld [vmem:[#allocation4 + $0x30] sm:$0xff]
      %v1805 = vld [vmem:[#allocation4 + $0x38] sm:$0xff]
      %v1806 = vld [vmem:[#allocation4 + $0x40] sm:$0xff]
      %v1807 = vld [vmem:[#allocation4 + $0x48] sm:$0xff]
      %v1808 = vld [vmem:[#allocation4 + $0x50] sm:$0xff]
      %v1809 = vld [vmem:[#allocation4 + $0x58] sm:$0xff]
      %v1810 = vld [vmem:[#allocation4 + $0x60] sm:$0xf]
      %v1811 = vld [vmem:[#allocation4 + $0x68] sm:$0xf]
      %v1812 = vld [vmem:[#allocation4 + $0x70] sm:$0xf]
      %v1813 = vld [vmem:[#allocation4 + $0x78] sm:$0xf]
      %1830 = vrot.lane.b32.xlu0 %v1798, 124
      %v1831 = vpop.permute.xlu0 %1830
      %1832 = vrot.lane.b32.xlu0 %v1799, 124
      %v1833 = vpop.permute.xlu0 %1832
      %1834 = vrot.lane.b32.xlu0 %v1800, 124
      %v1835 = vpop.permute.xlu0 %1834
      %1836 = vrot.lane.b32.xlu0 %v1801, 124
      %v1837 = vpop.permute.xlu0 %1836
      %1838 = vrot.lane.b32.xlu0 %v1802, 124
      %v1839 = vpop.permute.xlu0 %1838
      %1840 = vrot.lane.b32.xlu0 %v1803, 124
      %v1841 = vpop.permute.xlu0 %1840
      %1842 = vrot.lane.b32.xlu0 %v1804, 124
      %v1843 = vpop.permute.xlu0 %1842
      %1844 = vrot.lane.b32.xlu0 %v1805, 124
      %v1845 = vpop.permute.xlu0 %1844
      %1846 = vrot.lane.b32.xlu0 %v1806, 124
      %v1847 = vpop.permute.xlu0 %1846
      %1848 = vrot.lane.b32.xlu0 %v1807, 124
      %v1849 = vpop.permute.xlu0 %1848
      %1850 = vrot.lane.b32.xlu0 %v1808, 124
      %v1851 = vpop.permute.xlu0 %1850
      %1852 = vrot.lane.b32.xlu0 %v1809, 124
      %v1853 = vpop.permute.xlu0 %1852
      %1854 = vrot.lane.b32.xlu0 %v1810, 124
      %v1855 = vpop.permute.xlu0 %1854
      %1856 = vrot.lane.b32.xlu0 %v1811, 124
      %v1857 = vpop.permute.xlu0 %1856
      %1858 = vrot.lane.b32.xlu0 %v1812, 124
      %v1859 = vpop.permute.xlu0 %1858
      %1860 = vrot.lane.b32.xlu0 %v1813, 124
      %v1861 = vpop.permute.xlu0 %1860
      %vm1862 = vcmask 1014784
      %v1863 = vsel %vm1862, %v1831, %v1833
      %v1864 = vsel %vm1862, %v1833, %v1835
      %v1865 = vsel %vm1862, %v1835, %v1837
      %v1866 = vsel %vm1862, %v1839, %v1841
      %v1867 = vsel %vm1862, %v1841, %v1843
      %v1868 = vsel %vm1862, %v1843, %v1845
      %v1869 = vsel %vm1862, %v1847, %v1849
      %v1870 = vsel %vm1862, %v1849, %v1851
      %v1871 = vsel %vm1862, %v1851, %v1853
      %v1872 = vsel %vm1862, %v1855, %v1857
      %v1873 = vsel %vm1862, %v1857, %v1859
      %v1874 = vsel %vm1862, %v1859, %v1861
      %1887 = vst [vmem:[#allocation5 + $0xc0] sm:$0xff] %v1863
      %1888 = vst [vmem:[#allocation5 + $0xc8] sm:$0xff] %v1864
      %1889 = vst [vmem:[#allocation5 + $0xd0] sm:$0xff] %v1865
      %1890 = vst [vmem:[#allocation5 + $0xd8] sm:$0xff] %v1866
      %1891 = vst [vmem:[#allocation5 + $0xe0] sm:$0xff] %v1867
      %1892 = vst [vmem:[#allocation5 + $0xe8] sm:$0xff] %v1868
      %1893 = vst [vmem:[#allocation5 + $0xf0] sm:$0xff] %v1869
      %1894 = vst [vmem:[#allocation5 + $0xf8] sm:$0xff] %v1870
      %1895 = vst [vmem:[#allocation5 + $0x100] sm:$0xff] %v1871
      %1896 = vst [vmem:[#allocation5 + $0x108] sm:$0xf] %v1872
      %1897 = vst [vmem:[#allocation5 + $0x110] sm:$0xf] %v1873
      %1898 = vst [vmem:[#allocation5 + $0x118] sm:$0xf] %v1874
      %v1899 = vld [vmem:[#allocation4] sm:$0xff]
      %v1900 = vld [vmem:[#allocation4 + $0x8] sm:$0xff]
      %v1901 = vld [vmem:[#allocation4 + $0x10] sm:$0xff]
      %v1902 = vld [vmem:[#allocation4 + $0x18] sm:$0xff]
      %v1903 = vld [vmem:[#allocation4 + $0x20] sm:$0xff]
      %v1904 = vld [vmem:[#allocation4 + $0x28] sm:$0xff]
      %v1905 = vld [vmem:[#allocation4 + $0x30] sm:$0xff]
      %v1906 = vld [vmem:[#allocation4 + $0x38] sm:$0xff]
      %v1907 = vld [vmem:[#allocation4 + $0x40] sm:$0xff]
      %v1908 = vld [vmem:[#allocation4 + $0x48] sm:$0xff]
      %v1909 = vld [vmem:[#allocation4 + $0x50] sm:$0xff]
      %v1910 = vld [vmem:[#allocation4 + $0x58] sm:$0xff]
      %v1911 = vld [vmem:[#allocation4 + $0x60] sm:$0xf]
      %v1912 = vld [vmem:[#allocation4 + $0x68] sm:$0xf]
      %v1913 = vld [vmem:[#allocation4 + $0x70] sm:$0xf]
      %v1914 = vld [vmem:[#allocation4 + $0x78] sm:$0xf]
      %1931 = vrot.lane.b32.xlu0 %v1899, 80
      %v1932 = vpop.permute.xlu0 %1931
      %1933 = vrot.lane.b32.xlu0 %v1900, 80
      %v1934 = vpop.permute.xlu0 %1933
      %1935 = vrot.lane.b32.xlu0 %v1901, 80
      %v1936 = vpop.permute.xlu0 %1935
      %1937 = vrot.lane.b32.xlu0 %v1902, 80
      %v1938 = vpop.permute.xlu0 %1937
      %1939 = vrot.lane.b32.xlu0 %v1903, 80
      %v1940 = vpop.permute.xlu0 %1939
      %1941 = vrot.lane.b32.xlu0 %v1904, 80
      %v1942 = vpop.permute.xlu0 %1941
      %1943 = vrot.lane.b32.xlu0 %v1905, 80
      %v1944 = vpop.permute.xlu0 %1943
      %1945 = vrot.lane.b32.xlu0 %v1906, 80
      %v1946 = vpop.permute.xlu0 %1945
      %1947 = vrot.lane.b32.xlu0 %v1907, 80
      %v1948 = vpop.permute.xlu0 %1947
      %1949 = vrot.lane.b32.xlu0 %v1908, 80
      %v1950 = vpop.permute.xlu0 %1949
      %1951 = vrot.lane.b32.xlu0 %v1909, 80
      %v1952 = vpop.permute.xlu0 %1951
      %1953 = vrot.lane.b32.xlu0 %v1910, 80
      %v1954 = vpop.permute.xlu0 %1953
      %1955 = vrot.lane.b32.xlu0 %v1911, 80
      %v1956 = vpop.permute.xlu0 %1955
      %1957 = vrot.lane.b32.xlu0 %v1912, 80
      %v1958 = vpop.permute.xlu0 %1957
      %1959 = vrot.lane.b32.xlu0 %v1913, 80
      %v1960 = vpop.permute.xlu0 %1959
      %1961 = vrot.lane.b32.xlu0 %v1914, 80
      %v1962 = vpop.permute.xlu0 %1961
      %v1963 = vsel %vm423, %v1932, %v1934
      %v1964 = vsel %vm423, %v1934, %v1936
      %v1965 = vsel %vm423, %v1936, %v1938
      %v1966 = vsel %vm423, %v1940, %v1942
      %v1967 = vsel %vm423, %v1942, %v1944
      %v1968 = vsel %vm423, %v1944, %v1946
      %v1969 = vsel %vm423, %v1948, %v1950
      %v1970 = vsel %vm423, %v1950, %v1952
      %v1971 = vsel %vm423, %v1952, %v1954
      %v1972 = vsel %vm423, %v1956, %v1958
      %v1973 = vsel %vm423, %v1958, %v1960
      %v1974 = vsel %vm423, %v1960, %v1962
      %1987 = vst [vmem:[#allocation5 + $0x120] sm:$0xff] %v1963
      %1988 = vst [vmem:[#allocation5 + $0x128] sm:$0xff] %v1964
      %1989 = vst [vmem:[#allocation5 + $0x130] sm:$0xff] %v1965
      %1990 = vst [vmem:[#allocation5 + $0x138] sm:$0xff] %v1966
      %1991 = vst [vmem:[#allocation5 + $0x140] sm:$0xff] %v1967
      %1992 = vst [vmem:[#allocation5 + $0x148] sm:$0xff] %v1968
      %1993 = vst [vmem:[#allocation5 + $0x150] sm:$0xff] %v1969
      %1994 = vst [vmem:[#allocation5 + $0x158] sm:$0xff] %v1970
      %1995 = vst [vmem:[#allocation5 + $0x160] sm:$0xff] %v1971
      %1996 = vst [vmem:[#allocation5 + $0x168] sm:$0xf] %v1972
      %1997 = vst [vmem:[#allocation5 + $0x170] sm:$0xf] %v1973
      %1998 = vst [vmem:[#allocation5 + $0x178] sm:$0xf] %v1974
      %v1999 = vld [vmem:[#allocation4] sm:$0xff]
      %v2000 = vld [vmem:[#allocation4 + $0x8] sm:$0xff]
      %v2001 = vld [vmem:[#allocation4 + $0x10] sm:$0xff]
      %v2002 = vld [vmem:[#allocation4 + $0x18] sm:$0xff]
      %v2003 = vld [vmem:[#allocation4 + $0x20] sm:$0xff]
      %v2004 = vld [vmem:[#allocation4 + $0x28] sm:$0xff]
      %v2005 = vld [vmem:[#allocation4 + $0x30] sm:$0xff]
      %v2006 = vld [vmem:[#allocation4 + $0x38] sm:$0xff]
      %v2007 = vld [vmem:[#allocation4 + $0x40] sm:$0xff]
      %v2008 = vld [vmem:[#allocation4 + $0x48] sm:$0xff]
      %v2009 = vld [vmem:[#allocation4 + $0x50] sm:$0xff]
      %v2010 = vld [vmem:[#allocation4 + $0x58] sm:$0xff]
      %v2011 = vld [vmem:[#allocation4 + $0x60] sm:$0xf]
      %v2012 = vld [vmem:[#allocation4 + $0x68] sm:$0xf]
      %v2013 = vld [vmem:[#allocation4 + $0x70] sm:$0xf]
      %v2014 = vld [vmem:[#allocation4 + $0x78] sm:$0xf]
      %2031 = vrot.lane.b32.xlu0 %v1999, 78
      %v2032 = vpop.permute.xlu0 %2031
      %2033 = vrot.lane.b32.xlu0 %v2000, 78
      %v2034 = vpop.permute.xlu0 %2033
      %2035 = vrot.lane.b32.xlu0 %v2001, 78
      %v2036 = vpop.permute.xlu0 %2035
      %2037 = vrot.lane.b32.xlu0 %v2002, 78
      %v2038 = vpop.permute.xlu0 %2037
      %2039 = vrot.lane.b32.xlu0 %v2003, 78
      %v2040 = vpop.permute.xlu0 %2039
      %2041 = vrot.lane.b32.xlu0 %v2004, 78
      %v2042 = vpop.permute.xlu0 %2041
      %2043 = vrot.lane.b32.xlu0 %v2005, 78
      %v2044 = vpop.permute.xlu0 %2043
      %2045 = vrot.lane.b32.xlu0 %v2006, 78
      %v2046 = vpop.permute.xlu0 %2045
      %2047 = vrot.lane.b32.xlu0 %v2007, 78
      %v2048 = vpop.permute.xlu0 %2047
      %2049 = vrot.lane.b32.xlu0 %v2008, 78
      %v2050 = vpop.permute.xlu0 %2049
      %2051 = vrot.lane.b32.xlu0 %v2009, 78
      %v2052 = vpop.permute.xlu0 %2051
      %2053 = vrot.lane.b32.xlu0 %v2010, 78
      %v2054 = vpop.permute.xlu0 %2053
      %2055 = vrot.lane.b32.xlu0 %v2011, 78
      %v2056 = vpop.permute.xlu0 %2055
      %2057 = vrot.lane.b32.xlu0 %v2012, 78
      %v2058 = vpop.permute.xlu0 %2057
      %2059 = vrot.lane.b32.xlu0 %v2013, 78
      %v2060 = vpop.permute.xlu0 %2059
      %2061 = vrot.lane.b32.xlu0 %v2014, 78
      %v2062 = vpop.permute.xlu0 %2061
      %v2063 = vsel %vm473, %v2032, %v2034
      %v2064 = vsel %vm473, %v2034, %v2036
      %v2065 = vsel %vm473, %v2036, %v2038
      %v2066 = vsel %vm473, %v2040, %v2042
      %v2067 = vsel %vm473, %v2042, %v2044
      %v2068 = vsel %vm473, %v2044, %v2046
      %v2069 = vsel %vm473, %v2048, %v2050
      %v2070 = vsel %vm473, %v2050, %v2052
      %v2071 = vsel %vm473, %v2052, %v2054
      %v2072 = vsel %vm473, %v2056, %v2058
      %v2073 = vsel %vm473, %v2058, %v2060
      %v2074 = vsel %vm473, %v2060, %v2062
      %2087 = vst [vmem:[#allocation5 + $0x180] sm:$0xff] %v2063
      %2088 = vst [vmem:[#allocation5 + $0x188] sm:$0xff] %v2064
      %2089 = vst [vmem:[#allocation5 + $0x190] sm:$0xff] %v2065
      %2090 = vst [vmem:[#allocation5 + $0x198] sm:$0xff] %v2066
      %2091 = vst [vmem:[#allocation5 + $0x1a0] sm:$0xff] %v2067
      %2092 = vst [vmem:[#allocation5 + $0x1a8] sm:$0xff] %v2068
      %2093 = vst [vmem:[#allocation5 + $0x1b0] sm:$0xff] %v2069
      %2094 = vst [vmem:[#allocation5 + $0x1b8] sm:$0xff] %v2070
      %2095 = vst [vmem:[#allocation5 + $0x1c0] sm:$0xff] %v2071
      %2096 = vst [vmem:[#allocation5 + $0x1c8] sm:$0xf] %v2072
      %2097 = vst [vmem:[#allocation5 + $0x1d0] sm:$0xf] %v2073
      %2098 = vst [vmem:[#allocation5 + $0x1d8] sm:$0xf] %v2074
      %v2099 = vld [vmem:[#allocation4] sm:$0xff]
      %v2100 = vld [vmem:[#allocation4 + $0x8] sm:$0xff]
      %v2101 = vld [vmem:[#allocation4 + $0x10] sm:$0xff]
      %v2102 = vld [vmem:[#allocation4 + $0x18] sm:$0xff]
      %v2103 = vld [vmem:[#allocation4 + $0x20] sm:$0xff]
      %v2104 = vld [vmem:[#allocation4 + $0x28] sm:$0xff]
      %v2105 = vld [vmem:[#allocation4 + $0x30] sm:$0xff]
      %v2106 = vld [vmem:[#allocation4 + $0x38] sm:$0xff]
      %v2107 = vld [vmem:[#allocation4 + $0x40] sm:$0xff]
      %v2108 = vld [vmem:[#allocation4 + $0x48] sm:$0xff]
      %v2109 = vld [vmem:[#allocation4 + $0x50] sm:$0xff]
      %v2110 = vld [vmem:[#allocation4 + $0x58] sm:$0xff]
      %v2111 = vld [vmem:[#allocation4 + $0x60] sm:$0xf]
      %v2112 = vld [vmem:[#allocation4 + $0x68] sm:$0xf]
      %v2113 = vld [vmem:[#allocation4 + $0x70] sm:$0xf]
      %v2114 = vld [vmem:[#allocation4 + $0x78] sm:$0xf]
      %2131 = vrot.lane.b32.xlu0 %v2099, 76
      %v2132 = vpop.permute.xlu0 %2131
      %2133 = vrot.lane.b32.xlu0 %v2100, 76
      %v2134 = vpop.permute.xlu0 %2133
      %2135 = vrot.lane.b32.xlu0 %v2101, 76
      %v2136 = vpop.permute.xlu0 %2135
      %2137 = vrot.lane.b32.xlu0 %v2102, 76
      %v2138 = vpop.permute.xlu0 %2137
      %2139 = vrot.lane.b32.xlu0 %v2103, 76
      %v2140 = vpop.permute.xlu0 %2139
      %2141 = vrot.lane.b32.xlu0 %v2104, 76
      %v2142 = vpop.permute.xlu0 %2141
      %2143 = vrot.lane.b32.xlu0 %v2105, 76
      %v2144 = vpop.permute.xlu0 %2143
      %2145 = vrot.lane.b32.xlu0 %v2106, 76
      %v2146 = vpop.permute.xlu0 %2145
      %2147 = vrot.lane.b32.xlu0 %v2107, 76
      %v2148 = vpop.permute.xlu0 %2147
      %2149 = vrot.lane.b32.xlu0 %v2108, 76
      %v2150 = vpop.permute.xlu0 %2149
      %2151 = vrot.lane.b32.xlu0 %v2109, 76
      %v2152 = vpop.permute.xlu0 %2151
      %2153 = vrot.lane.b32.xlu0 %v2110, 76
      %v2154 = vpop.permute.xlu0 %2153
      %2155 = vrot.lane.b32.xlu0 %v2111, 76
      %v2156 = vpop.permute.xlu0 %2155
      %2157 = vrot.lane.b32.xlu0 %v2112, 76
      %v2158 = vpop.permute.xlu0 %2157
      %2159 = vrot.lane.b32.xlu0 %v2113, 76
      %v2160 = vpop.permute.xlu0 %2159
      %2161 = vrot.lane.b32.xlu0 %v2114, 76
      %v2162 = vpop.permute.xlu0 %2161
      %vm2163 = vcmask 621568
      %v2164 = vsel %vm2163, %v2132, %v2134
      %v2165 = vsel %vm2163, %v2134, %v2136
      %v2166 = vsel %vm2163, %v2136, %v2138
      %v2167 = vsel %vm2163, %v2140, %v2142
      %v2168 = vsel %vm2163, %v2142, %v2144
      %v2169 = vsel %vm2163, %v2144, %v2146
      %v2170 = vsel %vm2163, %v2148, %v2150
      %v2171 = vsel %vm2163, %v2150, %v2152
      %v2172 = vsel %vm2163, %v2152, %v2154
      %v2173 = vsel %vm2163, %v2156, %v2158
      %v2174 = vsel %vm2163, %v2158, %v2160
      %v2175 = vsel %vm2163, %v2160, %v2162
      %2188 = vst [vmem:[#allocation5 + $0x1e0] sm:$0xff] %v2164
      %2189 = vst [vmem:[#allocation5 + $0x1e8] sm:$0xff] %v2165
      %2190 = vst [vmem:[#allocation5 + $0x1f0] sm:$0xff] %v2166
      %2191 = vst [vmem:[#allocation5 + $0x1f8] sm:$0xff] %v2167
      %2192 = vst [vmem:[#allocation5 + $0x200] sm:$0xff] %v2168
      %2193 = vst [vmem:[#allocation5 + $0x208] sm:$0xff] %v2169
      %2194 = vst [vmem:[#allocation5 + $0x210] sm:$0xff] %v2170
      %2195 = vst [vmem:[#allocation5 + $0x218] sm:$0xff] %v2171
      %2196 = vst [vmem:[#allocation5 + $0x220] sm:$0xff] %v2172
      %2197 = vst [vmem:[#allocation5 + $0x228] sm:$0xf] %v2173
      %2198 = vst [vmem:[#allocation5 + $0x230] sm:$0xf] %v2174
      %2199 = vst [vmem:[#allocation5 + $0x238] sm:$0xf] %v2175
      %v2200 = vld [vmem:[#allocation4] sm:$0xff]
      %v2201 = vld [vmem:[#allocation4 + $0x8] sm:$0xff]
      %v2202 = vld [vmem:[#allocation4 + $0x10] sm:$0xff]
      %v2203 = vld [vmem:[#allocation4 + $0x18] sm:$0xff]
      %v2204 = vld [vmem:[#allocation4 + $0x20] sm:$0xff]
      %v2205 = vld [vmem:[#allocation4 + $0x28] sm:$0xff]
      %v2206 = vld [vmem:[#allocation4 + $0x30] sm:$0xff]
      %v2207 = vld [vmem:[#allocation4 + $0x38] sm:$0xff]
      %v2208 = vld [vmem:[#allocation4 + $0x40] sm:$0xff]
      %v2209 = vld [vmem:[#allocation4 + $0x48] sm:$0xff]
      %v2210 = vld [vmem:[#allocation4 + $0x50] sm:$0xff]
      %v2211 = vld [vmem:[#allocation4 + $0x58] sm:$0xff]
      %v2212 = vld [vmem:[#allocation4 + $0x60] sm:$0xf]
      %v2213 = vld [vmem:[#allocation4 + $0x68] sm:$0xf]
      %v2214 = vld [vmem:[#allocation4 + $0x70] sm:$0xf]
      %v2215 = vld [vmem:[#allocation4 + $0x78] sm:$0xf]
      %2232 = vrot.lane.b32.xlu0 %v2200, 32
      %v2233 = vpop.permute.xlu0 %2232
      %2234 = vrot.lane.b32.xlu0 %v2201, 32
      %v2235 = vpop.permute.xlu0 %2234
      %2236 = vrot.lane.b32.xlu0 %v2202, 32
      %v2237 = vpop.permute.xlu0 %2236
      %2238 = vrot.lane.b32.xlu0 %v2203, 32
      %v2239 = vpop.permute.xlu0 %2238
      %2240 = vrot.lane.b32.xlu0 %v2204, 32
      %v2241 = vpop.permute.xlu0 %2240
      %2242 = vrot.lane.b32.xlu0 %v2205, 32
      %v2243 = vpop.permute.xlu0 %2242
      %2244 = vrot.lane.b32.xlu0 %v2206, 32
      %v2245 = vpop.permute.xlu0 %2244
      %2246 = vrot.lane.b32.xlu0 %v2207, 32
      %v2247 = vpop.permute.xlu0 %2246
      %2248 = vrot.lane.b32.xlu0 %v2208, 32
      %v2249 = vpop.permute.xlu0 %2248
      %2250 = vrot.lane.b32.xlu0 %v2209, 32
      %v2251 = vpop.permute.xlu0 %2250
      %2252 = vrot.lane.b32.xlu0 %v2210, 32
      %v2253 = vpop.permute.xlu0 %2252
      %2254 = vrot.lane.b32.xlu0 %v2211, 32
      %v2255 = vpop.permute.xlu0 %2254
      %2256 = vrot.lane.b32.xlu0 %v2212, 32
      %v2257 = vpop.permute.xlu0 %2256
      %2258 = vrot.lane.b32.xlu0 %v2213, 32
      %v2259 = vpop.permute.xlu0 %2258
      %2260 = vrot.lane.b32.xlu0 %v2214, 32
      %v2261 = vpop.permute.xlu0 %2260
      %2262 = vrot.lane.b32.xlu0 %v2215, 32
      %v2263 = vpop.permute.xlu0 %2262
      %vm2264 = vcmask 261120
      %v2265 = vsel %vm2264, %v2233, %v2235
      %v2266 = vsel %vm2264, %v2235, %v2237
      %v2267 = vsel %vm2264, %v2237, %v2239
      %v2268 = vsel %vm2264, %v2241, %v2243
      %v2269 = vsel %vm2264, %v2243, %v2245
      %v2270 = vsel %vm2264, %v2245, %v2247
      %v2271 = vsel %vm2264, %v2249, %v2251
      %v2272 = vsel %vm2264, %v2251, %v2253
      %v2273 = vsel %vm2264, %v2253, %v2255
      %v2274 = vsel %vm2264, %v2257, %v2259
      %v2275 = vsel %vm2264, %v2259, %v2261
      %v2276 = vsel %vm2264, %v2261, %v2263
      %2289 = vst [vmem:[#allocation5 + $0x240] sm:$0xff] %v2265
      %2290 = vst [vmem:[#allocation5 + $0x248] sm:$0xff] %v2266
      %2291 = vst [vmem:[#allocation5 + $0x250] sm:$0xff] %v2267
      %2292 = vst [vmem:[#allocation5 + $0x258] sm:$0xff] %v2268
      %2293 = vst [vmem:[#allocation5 + $0x260] sm:$0xff] %v2269
      %2294 = vst [vmem:[#allocation5 + $0x268] sm:$0xff] %v2270
      %2295 = vst [vmem:[#allocation5 + $0x270] sm:$0xff] %v2271
      %2296 = vst [vmem:[#allocation5 + $0x278] sm:$0xff] %v2272
      %2297 = vst [vmem:[#allocation5 + $0x280] sm:$0xff] %v2273
      %2298 = vst [vmem:[#allocation5 + $0x288] sm:$0xf] %v2274
      %2299 = vst [vmem:[#allocation5 + $0x290] sm:$0xf] %v2275
      %2300 = vst [vmem:[#allocation5 + $0x298] sm:$0xf] %v2276
      %v2301 = vld [vmem:[#allocation4] sm:$0xff]
      %v2302 = vld [vmem:[#allocation4 + $0x8] sm:$0xff]
      %v2303 = vld [vmem:[#allocation4 + $0x10] sm:$0xff]
      %v2304 = vld [vmem:[#allocation4 + $0x18] sm:$0xff]
      %v2305 = vld [vmem:[#allocation4 + $0x20] sm:$0xff]
      %v2306 = vld [vmem:[#allocation4 + $0x28] sm:$0xff]
      %v2307 = vld [vmem:[#allocation4 + $0x30] sm:$0xff]
      %v2308 = vld [vmem:[#allocation4 + $0x38] sm:$0xff]
      %v2309 = vld [vmem:[#allocation4 + $0x40] sm:$0xff]
      %v2310 = vld [vmem:[#allocation4 + $0x48] sm:$0xff]
      %v2311 = vld [vmem:[#allocation4 + $0x50] sm:$0xff]
      %v2312 = vld [vmem:[#allocation4 + $0x58] sm:$0xff]
      %v2313 = vld [vmem:[#allocation4 + $0x60] sm:$0xf]
      %v2314 = vld [vmem:[#allocation4 + $0x68] sm:$0xf]
      %v2315 = vld [vmem:[#allocation4 + $0x70] sm:$0xf]
      %v2316 = vld [vmem:[#allocation4 + $0x78] sm:$0xf]
      %2333 = vrot.lane.b32.xlu0 %v2301, 30
      %v2334 = vpop.permute.xlu0 %2333
      %2335 = vrot.lane.b32.xlu0 %v2302, 30
      %v2336 = vpop.permute.xlu0 %2335
      %2337 = vrot.lane.b32.xlu0 %v2303, 30
      %v2338 = vpop.permute.xlu0 %2337
      %2339 = vrot.lane.b32.xlu0 %v2304, 30
      %v2340 = vpop.permute.xlu0 %2339
      %2341 = vrot.lane.b32.xlu0 %v2305, 30
      %v2342 = vpop.permute.xlu0 %2341
      %2343 = vrot.lane.b32.xlu0 %v2306, 30
      %v2344 = vpop.permute.xlu0 %2343
      %2345 = vrot.lane.b32.xlu0 %v2307, 30
      %v2346 = vpop.permute.xlu0 %2345
      %2347 = vrot.lane.b32.xlu0 %v2308, 30
      %v2348 = vpop.permute.xlu0 %2347
      %2349 = vrot.lane.b32.xlu0 %v2309, 30
      %v2350 = vpop.permute.xlu0 %2349
      %2351 = vrot.lane.b32.xlu0 %v2310, 30
      %v2352 = vpop.permute.xlu0 %2351
      %2353 = vrot.lane.b32.xlu0 %v2311, 30
      %v2354 = vpop.permute.xlu0 %2353
      %2355 = vrot.lane.b32.xlu0 %v2312, 30
      %v2356 = vpop.permute.xlu0 %2355
      %2357 = vrot.lane.b32.xlu0 %v2313, 30
      %v2358 = vpop.permute.xlu0 %2357
      %2359 = vrot.lane.b32.xlu0 %v2314, 30
      %v2360 = vpop.permute.xlu0 %2359
      %2361 = vrot.lane.b32.xlu0 %v2315, 30
      %v2362 = vpop.permute.xlu0 %2361
      %2363 = vrot.lane.b32.xlu0 %v2316, 30
      %v2364 = vpop.permute.xlu0 %2363
      %vm2365 = vcmask 244736
      %v2366 = vsel %vm2365, %v2334, %v2336
      %v2367 = vsel %vm2365, %v2336, %v2338
      %v2368 = vsel %vm2365, %v2338, %v2340
      %v2369 = vsel %vm2365, %v2342, %v2344
      %v2370 = vsel %vm2365, %v2344, %v2346
      %v2371 = vsel %vm2365, %v2346, %v2348
      %v2372 = vsel %vm2365, %v2350, %v2352
      %v2373 = vsel %vm2365, %v2352, %v2354
      %v2374 = vsel %vm2365, %v2354, %v2356
      %v2375 = vsel %vm2365, %v2358, %v2360
      %v2376 = vsel %vm2365, %v2360, %v2362
      %v2377 = vsel %vm2365, %v2362, %v2364
      %2390 = vst [vmem:[#allocation5 + $0x2a0] sm:$0xff] %v2366
      %2391 = vst [vmem:[#allocation5 + $0x2a8] sm:$0xff] %v2367
      %2392 = vst [vmem:[#allocation5 + $0x2b0] sm:$0xff] %v2368
      %2393 = vst [vmem:[#allocation5 + $0x2b8] sm:$0xff] %v2369
      %2394 = vst [vmem:[#allocation5 + $0x2c0] sm:$0xff] %v2370
      %2395 = vst [vmem:[#allocation5 + $0x2c8] sm:$0xff] %v2371
      %2396 = vst [vmem:[#allocation5 + $0x2d0] sm:$0xff] %v2372
      %2397 = vst [vmem:[#allocation5 + $0x2d8] sm:$0xff] %v2373
      %2398 = vst [vmem:[#allocation5 + $0x2e0] sm:$0xff] %v2374
      %2399 = vst [vmem:[#allocation5 + $0x2e8] sm:$0xf] %v2375
      %2400 = vst [vmem:[#allocation5 + $0x2f0] sm:$0xf] %v2376
      %2401 = vst [vmem:[#allocation5 + $0x2f8] sm:$0xf] %v2377
      %v2402 = vld [vmem:[#allocation4] sm:$0xff]
      %v2403 = vld [vmem:[#allocation4 + $0x8] sm:$0xff]
      %v2404 = vld [vmem:[#allocation4 + $0x10] sm:$0xff]
      %v2405 = vld [vmem:[#allocation4 + $0x18] sm:$0xff]
      %v2406 = vld [vmem:[#allocation4 + $0x20] sm:$0xff]
      %v2407 = vld [vmem:[#allocation4 + $0x28] sm:$0xff]
      %v2408 = vld [vmem:[#allocation4 + $0x30] sm:$0xff]
      %v2409 = vld [vmem:[#allocation4 + $0x38] sm:$0xff]
      %v2410 = vld [vmem:[#allocation4 + $0x40] sm:$0xff]
      %v2411 = vld [vmem:[#allocation4 + $0x48] sm:$0xff]
      %v2412 = vld [vmem:[#allocation4 + $0x50] sm:$0xff]
      %v2413 = vld [vmem:[#allocation4 + $0x58] sm:$0xff]
      %v2414 = vld [vmem:[#allocation4 + $0x60] sm:$0xf]
      %v2415 = vld [vmem:[#allocation4 + $0x68] sm:$0xf]
      %v2416 = vld [vmem:[#allocation4 + $0x70] sm:$0xf]
      %v2417 = vld [vmem:[#allocation4 + $0x78] sm:$0xf]
      %2434 = vrot.lane.b32.xlu0 %v2402, 28
      %v2435 = vpop.permute.xlu0 %2434
      %2436 = vrot.lane.b32.xlu0 %v2403, 28
      %v2437 = vpop.permute.xlu0 %2436
      %2438 = vrot.lane.b32.xlu0 %v2404, 28
      %v2439 = vpop.permute.xlu0 %2438
      %2440 = vrot.lane.b32.xlu0 %v2405, 28
      %v2441 = vpop.permute.xlu0 %2440
      %2442 = vrot.lane.b32.xlu0 %v2406, 28
      %v2443 = vpop.permute.xlu0 %2442
      %2444 = vrot.lane.b32.xlu0 %v2407, 28
      %v2445 = vpop.permute.xlu0 %2444
      %2446 = vrot.lane.b32.xlu0 %v2408, 28
      %v2447 = vpop.permute.xlu0 %2446
      %2448 = vrot.lane.b32.xlu0 %v2409, 28
      %v2449 = vpop.permute.xlu0 %2448
      %2450 = vrot.lane.b32.xlu0 %v2410, 28
      %v2451 = vpop.permute.xlu0 %2450
      %2452 = vrot.lane.b32.xlu0 %v2411, 28
      %v2453 = vpop.permute.xlu0 %2452
      %2454 = vrot.lane.b32.xlu0 %v2412, 28
      %v2455 = vpop.permute.xlu0 %2454
      %2456 = vrot.lane.b32.xlu0 %v2413, 28
      %v2457 = vpop.permute.xlu0 %2456
      %2458 = vrot.lane.b32.xlu0 %v2414, 28
      %v2459 = vpop.permute.xlu0 %2458
      %2460 = vrot.lane.b32.xlu0 %v2415, 28
      %v2461 = vpop.permute.xlu0 %2460
      %2462 = vrot.lane.b32.xlu0 %v2416, 28
      %v2463 = vpop.permute.xlu0 %2462
      %2464 = vrot.lane.b32.xlu0 %v2417, 28
      %v2465 = vpop.permute.xlu0 %2464
      %vm2466 = vcmask 228352
      %v2467 = vsel %vm2466, %v2435, %v2437
      %v2468 = vsel %vm2466, %v2437, %v2439
      %v2469 = vsel %vm2466, %v2439, %v2441
      %v2470 = vsel %vm2466, %v2443, %v2445
      %v2471 = vsel %vm2466, %v2445, %v2447
      %v2472 = vsel %vm2466, %v2447, %v2449
      %v2473 = vsel %vm2466, %v2451, %v2453
      %v2474 = vsel %vm2466, %v2453, %v2455
      %v2475 = vsel %vm2466, %v2455, %v2457
      %v2476 = vsel %vm2466, %v2459, %v2461
      %v2477 = vsel %vm2466, %v2461, %v2463
      %v2478 = vsel %vm2466, %v2463, %v2465
      %2491 = vst [vmem:[#allocation5 + $0x300] sm:$0xff] %v2467
      %2492 = vst [vmem:[#allocation5 + $0x308] sm:$0xff] %v2468
      %2493 = vst [vmem:[#allocation5 + $0x310] sm:$0xff] %v2469
      %2494 = vst [vmem:[#allocation5 + $0x318] sm:$0xff] %v2470
      %2495 = vst [vmem:[#allocation5 + $0x320] sm:$0xff] %v2471
      %2496 = vst [vmem:[#allocation5 + $0x328] sm:$0xff] %v2472
      %2497 = vst [vmem:[#allocation5 + $0x330] sm:$0xff] %v2473
      %2498 = vst [vmem:[#allocation5 + $0x338] sm:$0xff] %v2474
      %2499 = vst [vmem:[#allocation5 + $0x340] sm:$0xff] %v2475
      %2500 = vst [vmem:[#allocation5 + $0x348] sm:$0xf] %v2476
      %2501 = vst [vmem:[#allocation5 + $0x350] sm:$0xf] %v2477
      %2502 = vst [vmem:[#allocation5 + $0x358] sm:$0xf] %v2478
      %v2503 = vld [vmem:[%s4] sm:$0xff]
      %v2504 = vld [vmem:[%s4 + $0x8] sm:$0xff]
      %v2505 = vld [vmem:[%s4 + $0x10] sm:$0xff]
      %v2506 = vld [vmem:[%s4 + $0x18] sm:$0xff]
      %v2507 = vld [vmem:[%s4 + $0x20] sm:$0xff]
      %v2508 = vld [vmem:[%s4 + $0x28] sm:$0xff]
      %v2509 = vld [vmem:[%s4 + $0x30] sm:$0xff]
      %v2510 = vld [vmem:[%s4 + $0x38] sm:$0xff]
      %v2511 = vld [vmem:[%s4 + $0x40] sm:$0xff]
      %v2512 = vld [vmem:[%s4 + $0x48] sm:$0xff]
      %v2513 = vld [vmem:[%s4 + $0x50] sm:$0xff]
      %v2514 = vld [vmem:[%s4 + $0x58] sm:$0xff]
      %v2515 = vld [vmem:[%s4 + $0x60] sm:$0xff]
      %v2516 = vld [vmem:[%s4 + $0x68] sm:$0xff]
      %v2517 = vld [vmem:[%s4 + $0x70] sm:$0xff]
      %v2518 = vld [vmem:[%s4 + $0x78] sm:$0xff]
      %v2519 = vld [vmem:[%s4 + $0x80] sm:$0xff]
      %v2520 = vld [vmem:[%s4 + $0x88] sm:$0xff]
      %v2521 = vld [vmem:[#allocation5] sm:$0xff]
      %v2522 = vld [vmem:[#allocation5 + $0x8] sm:$0xff]
      %v2523 = vld [vmem:[#allocation5 + $0x10] sm:$0xff]
      %v2524 = vld [vmem:[#allocation5 + $0x18] sm:$0xff]
      %v2525 = vld [vmem:[#allocation5 + $0x20] sm:$0xff]
      %v2526 = vld [vmem:[#allocation5 + $0x28] sm:$0xff]
      %v2527 = vld [vmem:[#allocation5 + $0x30] sm:$0xff]
      %v2528 = vld [vmem:[#allocation5 + $0x38] sm:$0xff]
      %v2529 = vld [vmem:[#allocation5 + $0x40] sm:$0xff]
      %v2530 = vld [vmem:[#allocation5 + $0x48] sm:$0xff]
      %v2531 = vld [vmem:[#allocation5 + $0x50] sm:$0xff]
      %v2532 = vld [vmem:[#allocation5 + $0x58] sm:$0xff]
      %v2533 = vld [vmem:[#allocation5 + $0x60] sm:$0xff]
      %v2534 = vld [vmem:[#allocation5 + $0x68] sm:$0xff]
      %v2535 = vld [vmem:[#allocation5 + $0x70] sm:$0xff]
      %v2536 = vld [vmem:[#allocation5 + $0x78] sm:$0xff]
      %v2537 = vld [vmem:[#allocation5 + $0x80] sm:$0xff]
      %v2538 = vld [vmem:[#allocation5 + $0x88] sm:$0xff]
      %v2539 = vld [vmem:[#allocation5 + $0x90] sm:$0xff]
      %v2540 = vld [vmem:[#allocation5 + $0x98] sm:$0xff]
      %v2541 = vld [vmem:[#allocation5 + $0xa0] sm:$0xff]
      %v2542 = vld [vmem:[#allocation5 + $0xa8] sm:$0xff]
      %v2543 = vld [vmem:[#allocation5 + $0xb0] sm:$0xff]
      %v2544 = vld [vmem:[#allocation5 + $0xb8] sm:$0xff]
      %v2545 = vld [vmem:[#allocation5 + $0xc0] sm:$0xff]
      %v2546 = vld [vmem:[#allocation5 + $0xc8] sm:$0xff]
      %v2547 = vld [vmem:[#allocation5 + $0xd0] sm:$0xff]
      %v2548 = vld [vmem:[#allocation5 + $0xd8] sm:$0xff]
      %v2549 = vld [vmem:[#allocation5 + $0xe0] sm:$0xff]
      %v2550 = vld [vmem:[#allocation5 + $0xe8] sm:$0xff]
      %v2551 = vld [vmem:[#allocation5 + $0xf0] sm:$0xff]
      %v2552 = vld [vmem:[#allocation5 + $0xf8] sm:$0xff]
      %v2553 = vld [vmem:[#allocation5 + $0x100] sm:$0xff]
      %v2554 = vld [vmem:[#allocation5 + $0x108] sm:$0xff]
      %v2555 = vld [vmem:[#allocation5 + $0x110] sm:$0xff]
      %v2556 = vld [vmem:[#allocation5 + $0x118] sm:$0xff]
      %v2557 = vld [vmem:[#allocation5 + $0x120] sm:$0xff]
      %v2558 = vld [vmem:[#allocation5 + $0x128] sm:$0xff]
      %v2559 = vld [vmem:[#allocation5 + $0x130] sm:$0xff]
      %v2560 = vld [vmem:[#allocation5 + $0x138] sm:$0xff]
      %v2561 = vld [vmem:[#allocation5 + $0x140] sm:$0xff]
      %v2562 = vld [vmem:[#allocation5 + $0x148] sm:$0xff]
      %v2563 = vld [vmem:[#allocation5 + $0x150] sm:$0xff]
      %v2564 = vld [vmem:[#allocation5 + $0x158] sm:$0xff]
      %v2565 = vld [vmem:[#allocation5 + $0x160] sm:$0xff]
      %v2566 = vld [vmem:[#allocation5 + $0x168] sm:$0xff]
      %v2567 = vld [vmem:[#allocation5 + $0x170] sm:$0xff]
      %v2568 = vld [vmem:[#allocation5 + $0x178] sm:$0xff]
      %v2569 = vld [vmem:[#allocation5 + $0x180] sm:$0xff]
      %v2570 = vld [vmem:[#allocation5 + $0x188] sm:$0xff]
      %v2571 = vld [vmem:[#allocation5 + $0x190] sm:$0xff]
      %v2572 = vld [vmem:[#allocation5 + $0x198] sm:$0xff]
      %v2573 = vld [vmem:[#allocation5 + $0x1a0] sm:$0xff]
      %v2574 = vld [vmem:[#allocation5 + $0x1a8] sm:$0xff]
      %v2575 = vld [vmem:[#allocation5 + $0x1b0] sm:$0xff]
      %v2576 = vld [vmem:[#allocation5 + $0x1b8] sm:$0xff]
      %v2577 = vld [vmem:[#allocation5 + $0x1c0] sm:$0xff]
      %v2578 = vld [vmem:[#allocation5 + $0x1c8] sm:$0xff]
      %v2579 = vld [vmem:[#allocation5 + $0x1d0] sm:$0xff]
      %v2580 = vld [vmem:[#allocation5 + $0x1d8] sm:$0xff]
      %v2581 = vld [vmem:[#allocation5 + $0x1e0] sm:$0xff]
      %v2582 = vld [vmem:[#allocation5 + $0x1e8] sm:$0xff]
      %v2583 = vld [vmem:[#allocation5 + $0x1f0] sm:$0xff]
      %v2584 = vld [vmem:[#allocation5 + $0x1f8] sm:$0xff]
      %v2585 = vld [vmem:[#allocation5 + $0x200] sm:$0xff]
      %v2586 = vld [vmem:[#allocation5 + $0x208] sm:$0xff]
      %v2587 = vld [vmem:[#allocation5 + $0x210] sm:$0xff]
      %v2588 = vld [vmem:[#allocation5 + $0x218] sm:$0xff]
      %v2589 = vld [vmem:[#allocation5 + $0x220] sm:$0xff]
      %v2590 = vld [vmem:[#allocation5 + $0x228] sm:$0xff]
      %v2591 = vld [vmem:[#allocation5 + $0x230] sm:$0xff]
      %v2592 = vld [vmem:[#allocation5 + $0x238] sm:$0xff]
      %v2593 = vld [vmem:[#allocation5 + $0x240] sm:$0xff]
      %v2594 = vld [vmem:[#allocation5 + $0x248] sm:$0xff]
      %v2595 = vld [vmem:[#allocation5 + $0x250] sm:$0xff]
      %v2596 = vld [vmem:[#allocation5 + $0x258] sm:$0xff]
      %v2597 = vld [vmem:[#allocation5 + $0x260] sm:$0xff]
      %v2598 = vld [vmem:[#allocation5 + $0x268] sm:$0xff]
      %v2599 = vld [vmem:[#allocation5 + $0x270] sm:$0xff]
      %v2600 = vld [vmem:[#allocation5 + $0x278] sm:$0xff]
      %v2601 = vld [vmem:[#allocation5 + $0x280] sm:$0xff]
      %v2602 = vld [vmem:[#allocation5 + $0x288] sm:$0xff]
      %v2603 = vld [vmem:[#allocation5 + $0x290] sm:$0xff]
      %v2604 = vld [vmem:[#allocation5 + $0x298] sm:$0xff]
      %v2605 = vld [vmem:[#allocation5 + $0x2a0] sm:$0xff]
      %v2606 = vld [vmem:[#allocation5 + $0x2a8] sm:$0xff]
      %v2607 = vld [vmem:[#allocation5 + $0x2b0] sm:$0xff]
      %v2608 = vld [vmem:[#allocation5 + $0x2b8] sm:$0xff]
      %v2609 = vld [vmem:[#allocation5 + $0x2c0] sm:$0xff]
      %v2610 = vld [vmem:[#allocation5 + $0x2c8] sm:$0xff]
      %v2611 = vld [vmem:[#allocation5 + $0x2d0] sm:$0xff]
      %v2612 = vld [vmem:[#allocation5 + $0x2d8] sm:$0xff]
      %v2613 = vld [vmem:[#allocation5 + $0x2e0] sm:$0xff]
      %v2614 = vld [vmem:[#allocation5 + $0x2e8] sm:$0xff]
      %v2615 = vld [vmem:[#allocation5 + $0x2f0] sm:$0xff]
      %v2616 = vld [vmem:[#allocation5 + $0x2f8] sm:$0xff]
      %v2617 = vld [vmem:[#allocation5 + $0x300] sm:$0xff]
      %v2618 = vld [vmem:[#allocation5 + $0x308] sm:$0xff]
      %v2619 = vld [vmem:[#allocation5 + $0x310] sm:$0xff]
      %v2620 = vld [vmem:[#allocation5 + $0x318] sm:$0xff]
      %v2621 = vld [vmem:[#allocation5 + $0x320] sm:$0xff]
      %v2622 = vld [vmem:[#allocation5 + $0x328] sm:$0xff]
      %v2623 = vld [vmem:[#allocation5 + $0x330] sm:$0xff]
      %v2624 = vld [vmem:[#allocation5 + $0x338] sm:$0xff]
      %v2625 = vld [vmem:[#allocation5 + $0x340] sm:$0xff]
      %v2626 = vld [vmem:[#allocation5 + $0x348] sm:$0xff]
      %v2627 = vld [vmem:[#allocation5 + $0x350] sm:$0xff]
      %v2628 = vld [vmem:[#allocation5 + $0x358] sm:$0xff]
      %2630 = vset.pattern.permute.xlu0 0
      %2631 = vperm.xlu0 %2630, %v222
      %v2632 = vpop.permute.xlu0 %2631
      %2635 = vset.pattern.permute.xlu0 0
      %2636 = vperm.xlu0 %2635, %v223
      %v2637 = vpop.permute.xlu0 %2636
      %2640 = vset.pattern.permute.xlu0 0
      %2641 = vperm.xlu0 %2640, %v224
      %v2642 = vpop.permute.xlu0 %2641
      %2645 = vset.pattern.permute.xlu0 0
      %2646 = vperm.xlu0 %2645, %v225
      %v2647 = vpop.permute.xlu0 %2646
      %2650 = vset.pattern.permute.xlu0 0
      %2651 = vperm.xlu0 %2650, %v226
      %v2652 = vpop.permute.xlu0 %2651
      %2655 = vset.pattern.permute.xlu0 0
      %2656 = vperm.xlu0 %2655, %v227
      %v2657 = vpop.permute.xlu0 %2656
      %v2660 = vsel %vm2264, %v2505, 0
      %v2663 = vsel %vm2264, %v2508, 0
      %v2666 = vsel %vm2264, %v2511, 0
      %v2669 = vsel %vm2264, %v2514, 0
      %v2672 = vsel %vm2264, %v2517, 0
      %v2675 = vsel %vm2264, %v2520, 0
      %2677 = vmatprep.subr.mxu0 %v2522
      %2678 = vmatpush1.msra.mxu0 %v2521
      %2679 = vmatprep.subr.mxu0 %v2525
      %2680 = vmatpush1.msra.mxu0 %v2524
      %2681 = vmatprep.subr.mxu0 %v2528
      %2682 = vmatpush1.msra.mxu0 %v2527
      %2683 = vmatprep.subr.mxu0 %v2531
      %2684 = vmatpush1.msra.mxu0 %v2530
      %2685 = vmatprep.subr.mxu0 %v2534
      %2686 = vmatpush1.msra.mxu0 %v2533
      %2687 = vmatprep.subr.mxu0 %v2537
      %2688 = vmatpush1.msra.mxu0 %v2536
      %2689 = vmatprep.subr.mxu0 %v2540
      %2690 = vmatpush1.msra.mxu0 %v2539
      %2691 = vmatprep.subr.mxu0 %v2543
      %2692 = vmatpush1.msra.mxu0 %v2542
      %2693 = vmatprep.subr.mxu0 %v2546
      %2694 = vmatpush1.msra.mxu0 %v2545
      %2695 = vmatprep.subr.mxu0 %v2549
      %2696 = vmatpush1.msra.mxu0 %v2548
      %2697 = vmatprep.subr.mxu0 %v2552
      %2698 = vmatpush1.msra.mxu0 %v2551
      %2699 = vmatprep.subr.mxu0 %v2555
      %2700 = vmatpush1.msra.mxu0 %v2554
      %2701 = vmatprep.subr.mxu0 %v2558
      %2702 = vmatpush1.msra.mxu0 %v2557
      %2703 = vmatprep.subr.mxu0 %v2561
      %2704 = vmatpush1.msra.mxu0 %v2560
      %2705 = vmatprep.subr.mxu0 %v2564
      %2706 = vmatpush1.msra.mxu0 %v2563
      %2707 = vmatprep.subr.mxu0 %v2567
      %2708 = vmatpush1.msra.mxu0 %v2566
      %2709 = vmatprep.subr.mxu0 %v2570
      %2710 = vmatpush1.msra.mxu0 %v2569
      %2711 = vmatprep.subr.mxu0 %v2573
      %2712 = vmatpush1.msra.mxu0 %v2572
      %2713 = vmatprep.subr.mxu0 %v2576
      %2714 = vmatpush1.msra.mxu0 %v2575
      %2715 = vmatprep.subr.mxu0 %v2579
      %2716 = vmatpush1.msra.mxu0 %v2578
      %2717 = vmatprep.subr.mxu0 %v2582
      %2718 = vmatpush1.msra.mxu0 %v2581
      %2719 = vmatprep.subr.mxu0 %v2585
      %2720 = vmatpush1.msra.mxu0 %v2584
      %2721 = vmatprep.subr.mxu0 %v2588
      %2722 = vmatpush1.msra.mxu0 %v2587
      %2723 = vmatprep.subr.mxu0 %v2591
      %2724 = vmatpush1.msra.mxu0 %v2590
      %2725 = vmatprep.subr.mxu0 %v2594
      %2726 = vmatpush1.msra.mxu0 %v2593
      %2727 = vmatprep.subr.mxu0 %v2597
      %2728 = vmatpush1.msra.mxu0 %v2596
      %2729 = vmatprep.subr.mxu0 %v2600
      %2730 = vmatpush1.msra.mxu0 %v2599
      %2731 = vmatprep.subr.mxu0 %v2603
      %2732 = vmatpush1.msra.mxu0 %v2602
      %2733 = vmatprep.subr.mxu0 %v2606
      %2734 = vmatpush1.msra.mxu0 %v2605
      %2735 = vmatprep.subr.mxu0 %v2609
      %2736 = vmatpush1.msra.mxu0 %v2608
      %2737 = vmatprep.subr.mxu0 %v2612
      %2738 = vmatpush1.msra.mxu0 %v2611
      %2739 = vmatprep.subr.mxu0 %v2615
      %2740 = vmatpush1.msra.mxu0 %v2614
      %2741 = vmatprep.mubr.f32.mxu0 %v2504
      %2742 = vmatmul.mubr.f32.gmra.mrb[0].mxu0 %v2503
      %v2743 = vpop.f32.mrb[0].mxu0
      %v2744 = vadd.f32 %v2632, %v2743
      %v2745 = vpop.f32.mrb[0].mxu0
      %v2746 = vadd.f32 %v2632, %v2745
      %2747 = vmatprep.mubr.f32.mxu0 %v2507
      %2748 = vmatmul.mubr.f32.gmra.mrb[0].mxu0 %v2506
      %v2749 = vpop.f32.mrb[0].mxu0
      %v2750 = vadd.f32 %v2637, %v2749
      %v2751 = vpop.f32.mrb[0].mxu0
      %v2752 = vadd.f32 %v2637, %v2751
      %2753 = vmatprep.mubr.f32.mxu0 %v2510
      %2754 = vmatmul.mubr.f32.gmra.mrb[0].mxu0 %v2509
      %v2755 = vpop.f32.mrb[0].mxu0
      %v2756 = vadd.f32 %v2642, %v2755
      %v2757 = vpop.f32.mrb[0].mxu0
      %v2758 = vadd.f32 %v2642, %v2757
      %2759 = vmatprep.mubr.f32.mxu0 %v2513
      %2760 = vmatmul.mubr.f32.gmra.mrb[0].mxu0 %v2512
      %v2761 = vpop.f32.mrb[0].mxu0
      %v2762 = vadd.f32 %v2647, %v2761
      %v2763 = vpop.f32.mrb[0].mxu0
      %v2764 = vadd.f32 %v2647, %v2763
      %2765 = vmatprep.mubr.f32.mxu0 %v2516
      %2766 = vmatmul.mubr.f32.gmra.mrb[0].mxu0 %v2515
      %v2767 = vpop.f32.mrb[0].mxu0
      %v2768 = vadd.f32 %v2652, %v2767
      %v2769 = vpop.f32.mrb[0].mxu0
      %v2770 = vadd.f32 %v2652, %v2769
      %2771 = vmatprep.mubr.f32.mxu0 %v2519
      %2772 = vmatmul.mubr.f32.gmra.mrb[0].mxu0 %v2518
      %v2773 = vpop.f32.mrb[0].mxu0
      %v2774 = vadd.f32 %v2657, %v2773
      %v2775 = vpop.f32.mrb[0].mxu0
      %v2776 = vadd.f32 %v2657, %v2775
      %2777 = vdwg.mxu0
      %2778 = vmatprep.subr.mxu0 %v2618
      %2779 = vmatpush1.msra.mxu0 %v2617
      %2780 = vmatprep.subr.mxu0 %v2621
      %2781 = vmatpush1.msra.mxu0 %v2620
      %2782 = vmatprep.subr.mxu0 %v2624
      %2783 = vmatpush1.msra.mxu0 %v2623
      %2784 = vmatprep.subr.mxu0 %v2627
      %2785 = vmatpush1.msra.mxu0 %v2626
      %2786 = vmatprep.subr.mxu0 0.0
      %2787 = vmatpush1.msra.mxu0 0.0
      %2788 = vmatprep.subr.mxu0 0.0
      %2789 = vmatpush1.msra.mxu0 0.0
      %2790 = vmatprep.subr.mxu0 0.0
      %2791 = vmatpush1.msra.mxu0 0.0
      %2792 = vmatprep.subr.mxu0 0.0
      %2793 = vmatpush1.msra.mxu0 0.0
      %2794 = vmatprep.subr.mxu0 0.0
      %2795 = vmatpush1.msra.mxu0 0.0
      %2796 = vmatprep.subr.mxu0 0.0
      %2797 = vmatpush1.msra.mxu0 0.0
      %2798 = vmatprep.subr.mxu0 0.0
      %2799 = vmatpush1.msra.mxu0 0.0
      %2800 = vmatprep.subr.mxu0 0.0
      %2801 = vmatpush1.msra.mxu0 0.0
      %2802 = vmatprep.subr.mxu0 0.0
      %2803 = vmatpush1.msra.mxu0 0.0
      %2804 = vmatprep.subr.mxu0 0.0
      %2805 = vmatpush1.msra.mxu0 0.0
      %2806 = vmatprep.subr.mxu0 0.0
      %2807 = vmatpush1.msra.mxu0 0.0
      %2808 = vmatprep.subr.mxu0 0.0
      %2809 = vmatpush1.msra.mxu0 0.0
      %2810 = vmatprep.subr.mxu0 0.0
      %2811 = vmatpush1.msra.mxu0 0.0
      %2812 = vmatprep.subr.mxu0 0.0
      %2813 = vmatpush1.msra.mxu0 0.0
      %2814 = vmatprep.subr.mxu0 0.0
      %2815 = vmatpush1.msra.mxu0 0.0
      %2816 = vmatprep.subr.mxu0 0.0
      %2817 = vmatpush1.msra.mxu0 0.0
      %2818 = vmatprep.subr.mxu0 0.0
      %2819 = vmatpush1.msra.mxu0 0.0
      %2820 = vmatprep.subr.mxu0 0.0
      %2821 = vmatpush1.msra.mxu0 0.0
      %2822 = vmatprep.subr.mxu0 0.0
      %2823 = vmatpush1.msra.mxu0 0.0
      %2824 = vmatprep.subr.mxu0 0.0
      %2825 = vmatpush1.msra.mxu0 0.0
      %2826 = vmatprep.subr.mxu0 0.0
      %2827 = vmatpush1.msra.mxu0 0.0
      %2828 = vmatprep.subr.mxu0 0.0
      %2829 = vmatpush1.msra.mxu0 0.0
      %2830 = vmatprep.subr.mxu0 0.0
      %2831 = vmatpush1.msra.mxu0 0.0
      %2832 = vmatprep.subr.mxu0 0.0
      %2833 = vmatpush1.msra.mxu0 0.0
      %2834 = vmatprep.subr.mxu0 0.0
      %2835 = vmatpush1.msra.mxu0 0.0
      %2836 = vmatprep.subr.mxu0 0.0
      %2837 = vmatpush1.msra.mxu0 0.0
      %2838 = vmatprep.subr.mxu0 0.0
      %2839 = vmatpush1.msra.mxu0 0.0
      %2840 = vmatprep.subr.mxu0 0.0
      %2841 = vmatpush1.msra.mxu0 0.0
      %2842 = vmatprep.mubr.f32.mxu0 0.0
      %2843 = vmatmul.mubr.f32.gmra.mrb[0].mxu0 %v2660
      %v2844 = vpop.f32.mrb[0].mxu0
      %v2845 = vadd.f32 %v2744, %v2844
      %v2846 = vpop.f32.mrb[0].mxu0
      %v2847 = vadd.f32 %v2746, %v2846
      %2848 = vmatprep.mubr.f32.mxu0 0.0
      %2849 = vmatmul.mubr.f32.gmra.mrb[0].mxu0 %v2663
      %v2850 = vpop.f32.mrb[0].mxu0
      %v2851 = vadd.f32 %v2750, %v2850
      %v2852 = vpop.f32.mrb[0].mxu0
      %v2853 = vadd.f32 %v2752, %v2852
      %2854 = vmatprep.mubr.f32.mxu0 0.0
      %2855 = vmatmul.mubr.f32.gmra.mrb[0].mxu0 %v2666
      %v2856 = vpop.f32.mrb[0].mxu0
      %v2857 = vadd.f32 %v2756, %v2856
      %v2858 = vpop.f32.mrb[0].mxu0
      %v2859 = vadd.f32 %v2758, %v2858
      %2860 = vmatprep.mubr.f32.mxu0 0.0
      %2861 = vmatmul.mubr.f32.gmra.mrb[0].mxu0 %v2669
      %v2862 = vpop.f32.mrb[0].mxu0
      %v2863 = vadd.f32 %v2762, %v2862
      %v2864 = vpop.f32.mrb[0].mxu0
      %v2865 = vadd.f32 %v2764, %v2864
      %2866 = vmatprep.mubr.f32.mxu0 0.0
      %2867 = vmatmul.mubr.f32.gmra.mrb[0].mxu0 %v2672
      %v2868 = vpop.f32.mrb[0].mxu0
      %v2869 = vadd.f32 %v2768, %v2868
      %v2870 = vpop.f32.mrb[0].mxu0
      %v2871 = vadd.f32 %v2770, %v2870
      %2872 = vmatprep.mubr.f32.mxu0 0.0
      %2873 = vmatmul.mubr.f32.gmra.mrb[0].mxu0 %v2675
      %v2874 = vpop.f32.mrb[0].mxu0
      %v2875 = vadd.f32 %v2774, %v2874
      %v2876 = vpop.f32.mrb[0].mxu0
      %v2877 = vadd.f32 %v2776, %v2876
      %2878 = vdwg.mxu0
      %2879 = vmatprep.subr.mxu0 0.0
      %2880 = vmatpush1.msra.mxu0 %v2523
      %2881 = vmatprep.subr.mxu0 0.0
      %2882 = vmatpush1.msra.mxu0 %v2526
      %2883 = vmatprep.subr.mxu0 0.0
      %2884 = vmatpush1.msra.mxu0 %v2529
      %2885 = vmatprep.subr.mxu0 0.0
      %2886 = vmatpush1.msra.mxu0 %v2532
      %2887 = vmatprep.subr.mxu0 0.0
      %2888 = vmatpush1.msra.mxu0 %v2535
      %2889 = vmatprep.subr.mxu0 0.0
      %2890 = vmatpush1.msra.mxu0 %v2538
      %2891 = vmatprep.subr.mxu0 0.0
      %2892 = vmatpush1.msra.mxu0 %v2541
      %2893 = vmatprep.subr.mxu0 0.0
      %2894 = vmatpush1.msra.mxu0 %v2544
      %2895 = vmatprep.subr.mxu0 0.0
      %2896 = vmatpush1.msra.mxu0 %v2547
      %2897 = vmatprep.subr.mxu0 0.0
      %2898 = vmatpush1.msra.mxu0 %v2550
      %2899 = vmatprep.subr.mxu0 0.0
      %2900 = vmatpush1.msra.mxu0 %v2553
      %2901 = vmatprep.subr.mxu0 0.0
      %2902 = vmatpush1.msra.mxu0 %v2556
      %2903 = vmatprep.subr.mxu0 0.0
      %2904 = vmatpush1.msra.mxu0 %v2559
      %2905 = vmatprep.subr.mxu0 0.0
      %2906 = vmatpush1.msra.mxu0 %v2562
      %2907 = vmatprep.subr.mxu0 0.0
      %2908 = vmatpush1.msra.mxu0 %v2565
      %2909 = vmatprep.subr.mxu0 0.0
      %2910 = vmatpush1.msra.mxu0 %v2568
      %2911 = vmatprep.subr.mxu0 0.0
      %2912 = vmatpush1.msra.mxu0 %v2571
      %2913 = vmatprep.subr.mxu0 0.0
      %2914 = vmatpush1.msra.mxu0 %v2574
      %2915 = vmatprep.subr.mxu0 0.0
      %2916 = vmatpush1.msra.mxu0 %v2577
      %2917 = vmatprep.subr.mxu0 0.0
      %2918 = vmatpush1.msra.mxu0 %v2580
      %2919 = vmatprep.subr.mxu0 0.0
      %2920 = vmatpush1.msra.mxu0 %v2583
      %2921 = vmatprep.subr.mxu0 0.0
      %2922 = vmatpush1.msra.mxu0 %v2586
      %2923 = vmatprep.subr.mxu0 0.0
      %2924 = vmatpush1.msra.mxu0 %v2589
      %2925 = vmatprep.subr.mxu0 0.0
      %2926 = vmatpush1.msra.mxu0 %v2592
      %2927 = vmatprep.subr.mxu0 0.0
      %2928 = vmatpush1.msra.mxu0 %v2595
      %2929 = vmatprep.subr.mxu0 0.0
      %2930 = vmatpush1.msra.mxu0 %v2598
      %2931 = vmatprep.subr.mxu0 0.0
      %2932 = vmatpush1.msra.mxu0 %v2601
      %2933 = vmatprep.subr.mxu0 0.0
      %2934 = vmatpush1.msra.mxu0 %v2604
      %2935 = vmatprep.subr.mxu0 0.0
      %2936 = vmatpush1.msra.mxu0 %v2607
      %2937 = vmatprep.subr.mxu0 0.0
      %2938 = vmatpush1.msra.mxu0 %v2610
      %2939 = vmatprep.subr.mxu0 0.0
      %2940 = vmatpush1.msra.mxu0 %v2613
      %2941 = vmatprep.subr.mxu0 0.0
      %2942 = vmatpush1.msra.mxu0 %v2616
      %2943 = vmatprep.mubr.f32.mxu0 %v2504
      %2944 = vmatmul.mubr.f32.gmra.mrb[0].mxu0 %v2503
      %v2945 = vpop.f32.mrb[0].mxu0
      %v2946 = vadd.f32 %v2632, %v2945
      %v2947 = vpop.f32.mrb[0].mxu0
      %2948 = vmatprep.mubr.f32.mxu0 %v2507
      %2949 = vmatmul.mubr.f32.gmra.mrb[0].mxu0 %v2506
      %v2950 = vpop.f32.mrb[0].mxu0
      %v2951 = vadd.f32 %v2637, %v2950
      %v2952 = vpop.f32.mrb[0].mxu0
      %2953 = vmatprep.mubr.f32.mxu0 %v2510
      %2954 = vmatmul.mubr.f32.gmra.mrb[0].mxu0 %v2509
      %v2955 = vpop.f32.mrb[0].mxu0
      %v2956 = vadd.f32 %v2642, %v2955
      %v2957 = vpop.f32.mrb[0].mxu0
      %2958 = vmatprep.mubr.f32.mxu0 %v2513
      %2959 = vmatmul.mubr.f32.gmra.mrb[0].mxu0 %v2512
      %v2960 = vpop.f32.mrb[0].mxu0
      %v2961 = vadd.f32 %v2647, %v2960
      %v2962 = vpop.f32.mrb[0].mxu0
      %2963 = vmatprep.mubr.f32.mxu0 %v2516
      %2964 = vmatmul.mubr.f32.gmra.mrb[0].mxu0 %v2515
      %v2965 = vpop.f32.mrb[0].mxu0
      %v2966 = vadd.f32 %v2652, %v2965
      %v2967 = vpop.f32.mrb[0].mxu0
      %2968 = vmatprep.mubr.f32.mxu0 %v2519
      %2969 = vmatmul.mubr.f32.gmra.mrb[0].mxu0 %v2518
      %v2970 = vpop.f32.mrb[0].mxu0
      %v2971 = vadd.f32 %v2657, %v2970
      %v2972 = vpop.f32.mrb[0].mxu0
      %2973 = vdwg.mxu0
      %2974 = vmatprep.subr.mxu0 0.0
      %2975 = vmatpush1.msra.mxu0 %v2619
      %2976 = vmatprep.subr.mxu0 0.0
      %2977 = vmatpush1.msra.mxu0 %v2622
      %2978 = vmatprep.subr.mxu0 0.0
      %2979 = vmatpush1.msra.mxu0 %v2625
      %2980 = vmatprep.subr.mxu0 0.0
      %2981 = vmatpush1.msra.mxu0 %v2628
      %2982 = vmatprep.subr.mxu0 0.0
      %2983 = vmatpush1.msra.mxu0 0.0
      %2984 = vmatprep.subr.mxu0 0.0
      %2985 = vmatpush1.msra.mxu0 0.0
      %2986 = vmatprep.subr.mxu0 0.0
      %2987 = vmatpush1.msra.mxu0 0.0
      %2988 = vmatprep.subr.mxu0 0.0
      %2989 = vmatpush1.msra.mxu0 0.0
      %2990 = vmatprep.subr.mxu0 0.0
      %2991 = vmatpush1.msra.mxu0 0.0
      %2992 = vmatprep.subr.mxu0 0.0
      %2993 = vmatpush1.msra.mxu0 0.0
      %2994 = vmatprep.subr.mxu0 0.0
      %2995 = vmatpush1.msra.mxu0 0.0
      %2996 = vmatprep.subr.mxu0 0.0
      %2997 = vmatpush1.msra.mxu0 0.0
      %2998 = vmatprep.subr.mxu0 0.0
      %2999 = vmatpush1.msra.mxu0 0.0
      %3000 = vmatprep.subr.mxu0 0.0
      %3001 = vmatpush1.msra.mxu0 0.0
      %3002 = vmatprep.subr.mxu0 0.0
      %3003 = vmatpush1.msra.mxu0 0.0
      %3004 = vmatprep.subr.mxu0 0.0
      %3005 = vmatpush1.msra.mxu0 0.0
      %3006 = vmatprep.subr.mxu0 0.0
      %3007 = vmatpush1.msra.mxu0 0.0
      %3008 = vmatprep.subr.mxu0 0.0
      %3009 = vmatpush1.msra.mxu0 0.0
      %3010 = vmatprep.subr.mxu0 0.0
      %3011 = vmatpush1.msra.mxu0 0.0
      %3012 = vmatprep.subr.mxu0 0.0
      %3013 = vmatpush1.msra.mxu0 0.0
      %3014 = vmatprep.subr.mxu0 0.0
      %3015 = vmatpush1.msra.mxu0 0.0
      %3016 = vmatprep.subr.mxu0 0.0
      %3017 = vmatpush1.msra.mxu0 0.0
      %3018 = vmatprep.subr.mxu0 0.0
      %3019 = vmatpush1.msra.mxu0 0.0
      %3020 = vmatprep.subr.mxu0 0.0
      %3021 = vmatpush1.msra.mxu0 0.0
      %3022 = vmatprep.subr.mxu0 0.0
      %3023 = vmatpush1.msra.mxu0 0.0
      %3024 = vmatprep.subr.mxu0 0.0
      %3025 = vmatpush1.msra.mxu0 0.0
      %3026 = vmatprep.subr.mxu0 0.0
      %3027 = vmatpush1.msra.mxu0 0.0
      %3028 = vmatprep.subr.mxu0 0.0
      %3029 = vmatpush1.msra.mxu0 0.0
      %3030 = vmatprep.subr.mxu0 0.0
      %3031 = vmatpush1.msra.mxu0 0.0
      %3032 = vmatprep.subr.mxu0 0.0
      %3033 = vmatpush1.msra.mxu0 0.0
      %3034 = vmatprep.subr.mxu0 0.0
      %3035 = vmatpush1.msra.mxu0 0.0
      %3036 = vmatprep.subr.mxu0 0.0
      %3037 = vmatpush1.msra.mxu0 0.0
      %3038 = vmatprep.mubr.f32.mxu0 0.0
      %3039 = vmatmul.mubr.f32.gmra.mrb[0].mxu0 %v2660
      %v3040 = vpop.f32.mrb[0].mxu0
      %v3041 = vadd.f32 %v2946, %v3040
      %v3042 = vpop.f32.mrb[0].mxu0
      %3043 = vmatprep.mubr.f32.mxu0 0.0
      %3044 = vmatmul.mubr.f32.gmra.mrb[0].mxu0 %v2663
      %v3045 = vpop.f32.mrb[0].mxu0
      %v3046 = vadd.f32 %v2951, %v3045
      %v3047 = vpop.f32.mrb[0].mxu0
      %3048 = vmatprep.mubr.f32.mxu0 0.0
      %3049 = vmatmul.mubr.f32.gmra.mrb[0].mxu0 %v2666
      %v3050 = vpop.f32.mrb[0].mxu0
      %v3051 = vadd.f32 %v2956, %v3050
      %v3052 = vpop.f32.mrb[0].mxu0
      %3053 = vmatprep.mubr.f32.mxu0 0.0
      %3054 = vmatmul.mubr.f32.gmra.mrb[0].mxu0 %v2669
      %v3055 = vpop.f32.mrb[0].mxu0
      %v3056 = vadd.f32 %v2961, %v3055
      %v3057 = vpop.f32.mrb[0].mxu0
      %3058 = vmatprep.mubr.f32.mxu0 0.0
      %3059 = vmatmul.mubr.f32.gmra.mrb[0].mxu0 %v2672
      %v3060 = vpop.f32.mrb[0].mxu0
      %v3061 = vadd.f32 %v2966, %v3060
      %v3062 = vpop.f32.mrb[0].mxu0
      %3063 = vmatprep.mubr.f32.mxu0 0.0
      %3064 = vmatmul.mubr.f32.gmra.mrb[0].mxu0 %v2675
      %v3065 = vpop.f32.mrb[0].mxu0
      %v3066 = vadd.f32 %v2971, %v3065
      %v3067 = vpop.f32.mrb[0].mxu0
      %3068 = vdwg.mxu0
      %vm3069 = vcmp.ge.f32.partialorder %v2845, 0.0
      %vm3070 = vcmp.ge.f32.partialorder %v2847, 0.0
      %vm3071 = vcmp.ge.f32.partialorder %v3041, 0.0
      %vm3072 = vcmp.ge.f32.partialorder %v2851, 0.0
      %vm3073 = vcmp.ge.f32.partialorder %v2853, 0.0
      %vm3074 = vcmp.ge.f32.partialorder %v3046, 0.0
      %vm3075 = vcmp.ge.f32.partialorder %v2857, 0.0
      %vm3076 = vcmp.ge.f32.partialorder %v2859, 0.0
      %vm3077 = vcmp.ge.f32.partialorder %v3051, 0.0
      %vm3078 = vcmp.ge.f32.partialorder %v2863, 0.0
      %vm3079 = vcmp.ge.f32.partialorder %v2865, 0.0
      %vm3080 = vcmp.ge.f32.partialorder %v3056, 0.0
      %vm3081 = vcmp.ge.f32.partialorder %v2869, 0.0
      %vm3082 = vcmp.ge.f32.partialorder %v2871, 0.0
      %vm3083 = vcmp.ge.f32.partialorder %v3061, 0.0
      %vm3084 = vcmp.ge.f32.partialorder %v2875, 0.0
      %vm3085 = vcmp.ge.f32.partialorder %v2877, 0.0
      %vm3086 = vcmp.ge.f32.partialorder %v3066, 0.0
      %v3087 = vstv %s214
      %v3088 = vmul.f32 %v3087, %v2845
      %v3089 = vmul.f32 %v3087, %v2847
      %v3090 = vmul.f32 %v3087, %v3041
      %v3091 = vmul.f32 %v3087, %v2851
      %v3092 = vmul.f32 %v3087, %v2853
      %v3093 = vmul.f32 %v3087, %v3046
      %v3094 = vmul.f32 %v3087, %v2857
      %v3095 = vmul.f32 %v3087, %v2859
      %v3096 = vmul.f32 %v3087, %v3051
      %v3097 = vmul.f32 %v3087, %v2863
      %v3098 = vmul.f32 %v3087, %v2865
      %v3099 = vmul.f32 %v3087, %v3056
      %v3100 = vmul.f32 %v3087, %v2869
      %v3101 = vmul.f32 %v3087, %v2871
      %v3102 = vmul.f32 %v3087, %v3061
      %v3103 = vmul.f32 %v3087, %v2875
      %v3104 = vmul.f32 %v3087, %v2877
      %v3105 = vmul.f32 %v3087, %v3066
      %v3106 = vsel %vm3069, %v2845, %v3088
      %v3107 = vsel %vm3070, %v2847, %v3089
      %v3108 = vsel %vm3071, %v3041, %v3090
      %v3109 = vsel %vm3072, %v2851, %v3091
      %v3110 = vsel %vm3073, %v2853, %v3092
      %v3111 = vsel %vm3074, %v3046, %v3093
      %v3112 = vsel %vm3075, %v2857, %v3094
      %v3113 = vsel %vm3076, %v2859, %v3095
      %v3114 = vsel %vm3077, %v3051, %v3096
      %v3115 = vsel %vm3078, %v2863, %v3097
      %v3116 = vsel %vm3079, %v2865, %v3098
      %v3117 = vsel %vm3080, %v3056, %v3099
      %v3118 = vsel %vm3081, %v2869, %v3100
      %v3119 = vsel %vm3082, %v2871, %v3101
      %v3120 = vsel %vm3083, %v3061, %v3102
      %v3121 = vsel %vm3084, %v2875, %v3103
      %v3122 = vsel %vm3085, %v2877, %v3104
      %v3123 = vsel %vm3086, %v3066, %v3105
      %3124 = vst [vmem:[#allocation6] sm:$0xff] %v3106
      %3125 = vst [vmem:[#allocation6 + $0x8] sm:$0xff] %v3107
      %3126 = vst [vmem:[#allocation6 + $0x10] sm:$0xff] %v3108
      %3127 = vst [vmem:[#allocation6 + $0x18] sm:$0xff] %v3109
      %3128 = vst [vmem:[#allocation6 + $0x20] sm:$0xff] %v3110
      %3129 = vst [vmem:[#allocation6 + $0x28] sm:$0xff] %v3111
      %3130 = vst [vmem:[#allocation6 + $0x30] sm:$0xff] %v3112
      %3131 = vst [vmem:[#allocation6 + $0x38] sm:$0xff] %v3113
      %3132 = vst [vmem:[#allocation6 + $0x40] sm:$0xff] %v3114
      %3133 = vst [vmem:[#allocation6 + $0x48] sm:$0xff] %v3115
      %3134 = vst [vmem:[#allocation6 + $0x50] sm:$0xff] %v3116
      %3135 = vst [vmem:[#allocation6 + $0x58] sm:$0xff] %v3117
      %3136 = vst [vmem:[#allocation6 + $0x60] sm:$0xff] %v3118
      %3137 = vst [vmem:[#allocation6 + $0x68] sm:$0xff] %v3119
      %3138 = vst [vmem:[#allocation6 + $0x70] sm:$0xff] %v3120
      %3139 = vst [vmem:[#allocation6 + $0x78] sm:$0xff] %v3121
      %3140 = vst [vmem:[#allocation6 + $0x80] sm:$0xff] %v3122
      %3141 = vst [vmem:[#allocation6 + $0x88] sm:$0xff] %v3123
      %v3142 = vld [vmem:[#allocation6] sm:$0xff]
      %v3143 = vld [vmem:[#allocation6 + $0x8] sm:$0xff]
      %v3144 = vld [vmem:[#allocation6 + $0x18] sm:$0xff]
      %v3145 = vld [vmem:[#allocation6 + $0x20] sm:$0xff]
      %v3146 = vld [vmem:[#allocation6 + $0x30] sm:$0xff]
      %v3147 = vld [vmem:[#allocation6 + $0x38] sm:$0xff]
      %v3148 = vld [vmem:[#allocation6 + $0x48] sm:$0xff]
      %v3149 = vld [vmem:[#allocation6 + $0x50] sm:$0xff]
      %v3150 = vld [vmem:[#allocation6 + $0x60] sm:$0xff]
      %v3151 = vld [vmem:[#allocation6 + $0x68] sm:$0xff]
      %v3152 = vld [vmem:[#allocation6 + $0x78] sm:$0xff]
      %v3153 = vld [vmem:[#allocation6 + $0x80] sm:$0xff]
      %v3154 = vld [vmem:[#allocation6] sm:$0xff]
      %v3155 = vld [vmem:[#allocation6 + $0x8] sm:$0xff]
      %v3156 = vld [vmem:[#allocation6 + $0x10] sm:$0xff]
      %v3157 = vld [vmem:[#allocation6 + $0x18] sm:$0xff]
      %v3158 = vld [vmem:[#allocation6 + $0x20] sm:$0xff]
      %v3159 = vld [vmem:[#allocation6 + $0x28] sm:$0xff]
      %v3160 = vld [vmem:[#allocation6 + $0x30] sm:$0xff]
      %v3161 = vld [vmem:[#allocation6 + $0x38] sm:$0xff]
      %v3162 = vld [vmem:[#allocation6 + $0x40] sm:$0xff]
      %v3163 = vld [vmem:[#allocation6 + $0x48] sm:$0xff]
      %v3164 = vld [vmem:[#allocation6 + $0x50] sm:$0xff]
      %v3165 = vld [vmem:[#allocation6 + $0x58] sm:$0xff]
      %v3166 = vld [vmem:[#allocation6 + $0x60] sm:$0xff]
      %v3167 = vld [vmem:[#allocation6 + $0x68] sm:$0xff]
      %v3168 = vld [vmem:[#allocation6 + $0x70] sm:$0xff]
      %v3169 = vld [vmem:[#allocation6 + $0x78] sm:$0xff]
      %v3170 = vld [vmem:[#allocation6 + $0x80] sm:$0xff]
      %v3171 = vld [vmem:[#allocation6 + $0x88] sm:$0xff]
      %3190 = vrot.lane.b32.xlu0 %v3154, 126
      %v3191 = vpop.permute.xlu0 %3190
      %3192 = vrot.lane.b32.xlu0 %v3155, 126
      %v3193 = vpop.permute.xlu0 %3192
      %3194 = vrot.lane.b32.xlu0 %v3156, 126
      %v3195 = vpop.permute.xlu0 %3194
      %3196 = vrot.lane.b32.xlu0 %v3157, 126
      %v3197 = vpop.permute.xlu0 %3196
      %3198 = vrot.lane.b32.xlu0 %v3158, 126
      %v3199 = vpop.permute.xlu0 %3198
      %3200 = vrot.lane.b32.xlu0 %v3159, 126
      %v3201 = vpop.permute.xlu0 %3200
      %3202 = vrot.lane.b32.xlu0 %v3160, 126
      %v3203 = vpop.permute.xlu0 %3202
      %3204 = vrot.lane.b32.xlu0 %v3161, 126
      %v3205 = vpop.permute.xlu0 %3204
      %3206 = vrot.lane.b32.xlu0 %v3162, 126
      %v3207 = vpop.permute.xlu0 %3206
      %3208 = vrot.lane.b32.xlu0 %v3163, 126
      %v3209 = vpop.permute.xlu0 %3208
      %3210 = vrot.lane.b32.xlu0 %v3164, 126
      %v3211 = vpop.permute.xlu0 %3210
      %3212 = vrot.lane.b32.xlu0 %v3165, 126
      %v3213 = vpop.permute.xlu0 %3212
      %3214 = vrot.lane.b32.xlu0 %v3166, 126
      %v3215 = vpop.permute.xlu0 %3214
      %3216 = vrot.lane.b32.xlu0 %v3167, 126
      %v3217 = vpop.permute.xlu0 %3216
      %3218 = vrot.lane.b32.xlu0 %v3168, 126
      %v3219 = vpop.permute.xlu0 %3218
      %3220 = vrot.lane.b32.xlu0 %v3169, 126
      %v3221 = vpop.permute.xlu0 %3220
      %3222 = vrot.lane.b32.xlu0 %v3170, 126
      %v3223 = vpop.permute.xlu0 %3222
      %3224 = vrot.lane.b32.xlu0 %v3171, 126
      %v3225 = vpop.permute.xlu0 %3224
      %v3226 = vsel %vm323, %v3191, %v3193
      %v3227 = vsel %vm323, %v3193, %v3195
      %v3228 = vsel %vm323, %v3197, %v3199
      %v3229 = vsel %vm323, %v3199, %v3201
      %v3230 = vsel %vm323, %v3203, %v3205
      %v3231 = vsel %vm323, %v3205, %v3207
      %v3232 = vsel %vm323, %v3209, %v3211
      %v3233 = vsel %vm323, %v3211, %v3213
      %v3234 = vsel %vm323, %v3215, %v3217
      %v3235 = vsel %vm323, %v3217, %v3219
      %v3236 = vsel %vm323, %v3221, %v3223
      %v3237 = vsel %vm323, %v3223, %v3225
      %v3250 = vmax.f32 %v3142, %v3226
      %v3251 = vmax.f32 %v3143, %v3227
      %v3252 = vmax.f32 %v3144, %v3228
      %v3253 = vmax.f32 %v3145, %v3229
      %v3254 = vmax.f32 %v3146, %v3230
      %v3255 = vmax.f32 %v3147, %v3231
      %v3256 = vmax.f32 %v3148, %v3232
      %v3257 = vmax.f32 %v3149, %v3233
      %v3258 = vmax.f32 %v3150, %v3234
      %v3259 = vmax.f32 %v3151, %v3235
      %v3260 = vmax.f32 %v3152, %v3236
      %v3261 = vmax.f32 %v3153, %v3237
      %3262 = vrot.lane.b32.xlu0 %v3154, 124
      %v3263 = vpop.permute.xlu0 %3262
      %3264 = vrot.lane.b32.xlu0 %v3155, 124
      %v3265 = vpop.permute.xlu0 %3264
      %3266 = vrot.lane.b32.xlu0 %v3156, 124
      %v3267 = vpop.permute.xlu0 %3266
      %3268 = vrot.lane.b32.xlu0 %v3157, 124
      %v3269 = vpop.permute.xlu0 %3268
      %3270 = vrot.lane.b32.xlu0 %v3158, 124
      %v3271 = vpop.permute.xlu0 %3270
      %3272 = vrot.lane.b32.xlu0 %v3159, 124
      %v3273 = vpop.permute.xlu0 %3272
      %3274 = vrot.lane.b32.xlu0 %v3160, 124
      %v3275 = vpop.permute.xlu0 %3274
      %3276 = vrot.lane.b32.xlu0 %v3161, 124
      %v3277 = vpop.permute.xlu0 %3276
      %3278 = vrot.lane.b32.xlu0 %v3162, 124
      %v3279 = vpop.permute.xlu0 %3278
      %3280 = vrot.lane.b32.xlu0 %v3163, 124
      %v3281 = vpop.permute.xlu0 %3280
      %3282 = vrot.lane.b32.xlu0 %v3164, 124
      %v3283 = vpop.permute.xlu0 %3282
      %3284 = vrot.lane.b32.xlu0 %v3165, 124
      %v3285 = vpop.permute.xlu0 %3284
      %3286 = vrot.lane.b32.xlu0 %v3166, 124
      %v3287 = vpop.permute.xlu0 %3286
      %3288 = vrot.lane.b32.xlu0 %v3167, 124
      %v3289 = vpop.permute.xlu0 %3288
      %3290 = vrot.lane.b32.xlu0 %v3168, 124
      %v3291 = vpop.permute.xlu0 %3290
      %3292 = vrot.lane.b32.xlu0 %v3169, 124
      %v3293 = vpop.permute.xlu0 %3292
      %3294 = vrot.lane.b32.xlu0 %v3170, 124
      %v3295 = vpop.permute.xlu0 %3294
      %3296 = vrot.lane.b32.xlu0 %v3171, 124
      %v3297 = vpop.permute.xlu0 %3296
      %v3298 = vsel %vm1862, %v3263, %v3265
      %v3299 = vsel %vm1862, %v3265, %v3267
      %v3300 = vsel %vm1862, %v3269, %v3271
      %v3301 = vsel %vm1862, %v3271, %v3273
      %v3302 = vsel %vm1862, %v3275, %v3277
      %v3303 = vsel %vm1862, %v3277, %v3279
      %v3304 = vsel %vm1862, %v3281, %v3283
      %v3305 = vsel %vm1862, %v3283, %v3285
      %v3306 = vsel %vm1862, %v3287, %v3289
      %v3307 = vsel %vm1862, %v3289, %v3291
      %v3308 = vsel %vm1862, %v3293, %v3295
      %v3309 = vsel %vm1862, %v3295, %v3297
      %v3322 = vmax.f32 %v3250, %v3298
      %v3323 = vmax.f32 %v3251, %v3299
      %v3324 = vmax.f32 %v3252, %v3300
      %v3325 = vmax.f32 %v3253, %v3301
      %v3326 = vmax.f32 %v3254, %v3302
      %v3327 = vmax.f32 %v3255, %v3303
      %v3328 = vmax.f32 %v3256, %v3304
      %v3329 = vmax.f32 %v3257, %v3305
      %v3330 = vmax.f32 %v3258, %v3306
      %v3331 = vmax.f32 %v3259, %v3307
      %v3332 = vmax.f32 %v3260, %v3308
      %v3333 = vmax.f32 %v3261, %v3309
      %3334 = vrot.lane.b32.xlu0 %v3154, 80
      %v3335 = vpop.permute.xlu0 %3334
      %3336 = vrot.lane.b32.xlu0 %v3155, 80
      %v3337 = vpop.permute.xlu0 %3336
      %3338 = vrot.lane.b32.xlu0 %v3156, 80
      %v3339 = vpop.permute.xlu0 %3338
      %3340 = vrot.lane.b32.xlu0 %v3157, 80
      %v3341 = vpop.permute.xlu0 %3340
      %3342 = vrot.lane.b32.xlu0 %v3158, 80
      %v3343 = vpop.permute.xlu0 %3342
      %3344 = vrot.lane.b32.xlu0 %v3159, 80
      %v3345 = vpop.permute.xlu0 %3344
      %3346 = vrot.lane.b32.xlu0 %v3160, 80
      %v3347 = vpop.permute.xlu0 %3346
      %3348 = vrot.lane.b32.xlu0 %v3161, 80
      %v3349 = vpop.permute.xlu0 %3348
      %3350 = vrot.lane.b32.xlu0 %v3162, 80
      %v3351 = vpop.permute.xlu0 %3350
      %3352 = vrot.lane.b32.xlu0 %v3163, 80
      %v3353 = vpop.permute.xlu0 %3352
      %3354 = vrot.lane.b32.xlu0 %v3164, 80
      %v3355 = vpop.permute.xlu0 %3354
      %3356 = vrot.lane.b32.xlu0 %v3165, 80
      %v3357 = vpop.permute.xlu0 %3356
      %3358 = vrot.lane.b32.xlu0 %v3166, 80
      %v3359 = vpop.permute.xlu0 %3358
      %3360 = vrot.lane.b32.xlu0 %v3167, 80
      %v3361 = vpop.permute.xlu0 %3360
      %3362 = vrot.lane.b32.xlu0 %v3168, 80
      %v3363 = vpop.permute.xlu0 %3362
      %3364 = vrot.lane.b32.xlu0 %v3169, 80
      %v3365 = vpop.permute.xlu0 %3364
      %3366 = vrot.lane.b32.xlu0 %v3170, 80
      %v3367 = vpop.permute.xlu0 %3366
      %3368 = vrot.lane.b32.xlu0 %v3171, 80
      %v3369 = vpop.permute.xlu0 %3368
      %v3370 = vsel %vm423, %v3335, %v3337
      %v3371 = vsel %vm423, %v3337, %v3339
      %v3372 = vsel %vm423, %v3341, %v3343
      %v3373 = vsel %vm423, %v3343, %v3345
      %v3374 = vsel %vm423, %v3347, %v3349
      %v3375 = vsel %vm423, %v3349, %v3351
      %v3376 = vsel %vm423, %v3353, %v3355
      %v3377 = vsel %vm423, %v3355, %v3357
      %v3378 = vsel %vm423, %v3359, %v3361
      %v3379 = vsel %vm423, %v3361, %v3363
      %v3380 = vsel %vm423, %v3365, %v3367
      %v3381 = vsel %vm423, %v3367, %v3369
      %v3394 = vmax.f32 %v3322, %v3370
      %v3395 = vmax.f32 %v3323, %v3371
      %v3396 = vmax.f32 %v3324, %v3372
      %v3397 = vmax.f32 %v3325, %v3373
      %v3398 = vmax.f32 %v3326, %v3374
      %v3399 = vmax.f32 %v3327, %v3375
      %v3400 = vmax.f32 %v3328, %v3376
      %v3401 = vmax.f32 %v3329, %v3377
      %v3402 = vmax.f32 %v3330, %v3378
      %v3403 = vmax.f32 %v3331, %v3379
      %v3404 = vmax.f32 %v3332, %v3380
      %v3405 = vmax.f32 %v3333, %v3381
      %3406 = vrot.lane.b32.xlu0 %v3154, 78
      %v3407 = vpop.permute.xlu0 %3406
      %3408 = vrot.lane.b32.xlu0 %v3155, 78
      %v3409 = vpop.permute.xlu0 %3408
      %3410 = vrot.lane.b32.xlu0 %v3156, 78
      %v3411 = vpop.permute.xlu0 %3410
      %3412 = vrot.lane.b32.xlu0 %v3157, 78
      %v3413 = vpop.permute.xlu0 %3412
      %3414 = vrot.lane.b32.xlu0 %v3158, 78
      %v3415 = vpop.permute.xlu0 %3414
      %3416 = vrot.lane.b32.xlu0 %v3159, 78
      %v3417 = vpop.permute.xlu0 %3416
      %3418 = vrot.lane.b32.xlu0 %v3160, 78
      %v3419 = vpop.permute.xlu0 %3418
      %3420 = vrot.lane.b32.xlu0 %v3161, 78
      %v3421 = vpop.permute.xlu0 %3420
      %3422 = vrot.lane.b32.xlu0 %v3162, 78
      %v3423 = vpop.permute.xlu0 %3422
      %3424 = vrot.lane.b32.xlu0 %v3163, 78
      %v3425 = vpop.permute.xlu0 %3424
      %3426 = vrot.lane.b32.xlu0 %v3164, 78
      %v3427 = vpop.permute.xlu0 %3426
      %3428 = vrot.lane.b32.xlu0 %v3165, 78
      %v3429 = vpop.permute.xlu0 %3428
      %3430 = vrot.lane.b32.xlu0 %v3166, 78
      %v3431 = vpop.permute.xlu0 %3430
      %3432 = vrot.lane.b32.xlu0 %v3167, 78
      %v3433 = vpop.permute.xlu0 %3432
      %3434 = vrot.lane.b32.xlu0 %v3168, 78
      %v3435 = vpop.permute.xlu0 %3434
      %3436 = vrot.lane.b32.xlu0 %v3169, 78
      %v3437 = vpop.permute.xlu0 %3436
      %3438 = vrot.lane.b32.xlu0 %v3170, 78
      %v3439 = vpop.permute.xlu0 %3438
      %3440 = vrot.lane.b32.xlu0 %v3171, 78
      %v3441 = vpop.permute.xlu0 %3440
      %v3442 = vsel %vm473, %v3407, %v3409
      %v3443 = vsel %vm473, %v3409, %v3411
      %v3444 = vsel %vm473, %v3413, %v3415
      %v3445 = vsel %vm473, %v3415, %v3417
      %v3446 = vsel %vm473, %v3419, %v3421
      %v3447 = vsel %vm473, %v3421, %v3423
      %v3448 = vsel %vm473, %v3425, %v3427
      %v3449 = vsel %vm473, %v3427, %v3429
      %v3450 = vsel %vm473, %v3431, %v3433
      %v3451 = vsel %vm473, %v3433, %v3435
      %v3452 = vsel %vm473, %v3437, %v3439
      %v3453 = vsel %vm473, %v3439, %v3441
      %v3466 = vmax.f32 %v3394, %v3442
      %v3467 = vmax.f32 %v3395, %v3443
      %v3468 = vmax.f32 %v3396, %v3444
      %v3469 = vmax.f32 %v3397, %v3445
      %v3470 = vmax.f32 %v3398, %v3446
      %v3471 = vmax.f32 %v3399, %v3447
      %v3472 = vmax.f32 %v3400, %v3448
      %v3473 = vmax.f32 %v3401, %v3449
      %v3474 = vmax.f32 %v3402, %v3450
      %v3475 = vmax.f32 %v3403, %v3451
      %v3476 = vmax.f32 %v3404, %v3452
      %v3477 = vmax.f32 %v3405, %v3453
      %3478 = vrot.lane.b32.xlu0 %v3154, 76
      %v3479 = vpop.permute.xlu0 %3478
      %3480 = vrot.lane.b32.xlu0 %v3155, 76
      %v3481 = vpop.permute.xlu0 %3480
      %3482 = vrot.lane.b32.xlu0 %v3156, 76
      %v3483 = vpop.permute.xlu0 %3482
      %3484 = vrot.lane.b32.xlu0 %v3157, 76
      %v3485 = vpop.permute.xlu0 %3484
      %3486 = vrot.lane.b32.xlu0 %v3158, 76
      %v3487 = vpop.permute.xlu0 %3486
      %3488 = vrot.lane.b32.xlu0 %v3159, 76
      %v3489 = vpop.permute.xlu0 %3488
      %3490 = vrot.lane.b32.xlu0 %v3160, 76
      %v3491 = vpop.permute.xlu0 %3490
      %3492 = vrot.lane.b32.xlu0 %v3161, 76
      %v3493 = vpop.permute.xlu0 %3492
      %3494 = vrot.lane.b32.xlu0 %v3162, 76
      %v3495 = vpop.permute.xlu0 %3494
      %3496 = vrot.lane.b32.xlu0 %v3163, 76
      %v3497 = vpop.permute.xlu0 %3496
      %3498 = vrot.lane.b32.xlu0 %v3164, 76
      %v3499 = vpop.permute.xlu0 %3498
      %3500 = vrot.lane.b32.xlu0 %v3165, 76
      %v3501 = vpop.permute.xlu0 %3500
      %3502 = vrot.lane.b32.xlu0 %v3166, 76
      %v3503 = vpop.permute.xlu0 %3502
      %3504 = vrot.lane.b32.xlu0 %v3167, 76
      %v3505 = vpop.permute.xlu0 %3504
      %3506 = vrot.lane.b32.xlu0 %v3168, 76
      %v3507 = vpop.permute.xlu0 %3506
      %3508 = vrot.lane.b32.xlu0 %v3169, 76
      %v3509 = vpop.permute.xlu0 %3508
      %3510 = vrot.lane.b32.xlu0 %v3170, 76
      %v3511 = vpop.permute.xlu0 %3510
      %3512 = vrot.lane.b32.xlu0 %v3171, 76
      %v3513 = vpop.permute.xlu0 %3512
      %v3514 = vsel %vm2163, %v3479, %v3481
      %v3515 = vsel %vm2163, %v3481, %v3483
      %v3516 = vsel %vm2163, %v3485, %v3487
      %v3517 = vsel %vm2163, %v3487, %v3489
      %v3518 = vsel %vm2163, %v3491, %v3493
      %v3519 = vsel %vm2163, %v3493, %v3495
      %v3520 = vsel %vm2163, %v3497, %v3499
      %v3521 = vsel %vm2163, %v3499, %v3501
      %v3522 = vsel %vm2163, %v3503, %v3505
      %v3523 = vsel %vm2163, %v3505, %v3507
      %v3524 = vsel %vm2163, %v3509, %v3511
      %v3525 = vsel %vm2163, %v3511, %v3513
      %v3538 = vmax.f32 %v3466, %v3514
      %v3539 = vmax.f32 %v3467, %v3515
      %v3540 = vmax.f32 %v3468, %v3516
      %v3541 = vmax.f32 %v3469, %v3517
      %v3542 = vmax.f32 %v3470, %v3518
      %v3543 = vmax.f32 %v3471, %v3519
      %v3544 = vmax.f32 %v3472, %v3520
      %v3545 = vmax.f32 %v3473, %v3521
      %v3546 = vmax.f32 %v3474, %v3522
      %v3547 = vmax.f32 %v3475, %v3523
      %v3548 = vmax.f32 %v3476, %v3524
      %v3549 = vmax.f32 %v3477, %v3525
      %3550 = vrot.lane.b32.xlu0 %v3154, 32
      %v3551 = vpop.permute.xlu0 %3550
      %3552 = vrot.lane.b32.xlu0 %v3155, 32
      %v3553 = vpop.permute.xlu0 %3552
      %3554 = vrot.lane.b32.xlu0 %v3156, 32
      %v3555 = vpop.permute.xlu0 %3554
      %3556 = vrot.lane.b32.xlu0 %v3157, 32
      %v3557 = vpop.permute.xlu0 %3556
      %3558 = vrot.lane.b32.xlu0 %v3158, 32
      %v3559 = vpop.permute.xlu0 %3558
      %3560 = vrot.lane.b32.xlu0 %v3159, 32
      %v3561 = vpop.permute.xlu0 %3560
      %3562 = vrot.lane.b32.xlu0 %v3160, 32
      %v3563 = vpop.permute.xlu0 %3562
      %3564 = vrot.lane.b32.xlu0 %v3161, 32
      %v3565 = vpop.permute.xlu0 %3564
      %3566 = vrot.lane.b32.xlu0 %v3162, 32
      %v3567 = vpop.permute.xlu0 %3566
      %3568 = vrot.lane.b32.xlu0 %v3163, 32
      %v3569 = vpop.permute.xlu0 %3568
      %3570 = vrot.lane.b32.xlu0 %v3164, 32
      %v3571 = vpop.permute.xlu0 %3570
      %3572 = vrot.lane.b32.xlu0 %v3165, 32
      %v3573 = vpop.permute.xlu0 %3572
      %3574 = vrot.lane.b32.xlu0 %v3166, 32
      %v3575 = vpop.permute.xlu0 %3574
      %3576 = vrot.lane.b32.xlu0 %v3167, 32
      %v3577 = vpop.permute.xlu0 %3576
      %3578 = vrot.lane.b32.xlu0 %v3168, 32
      %v3579 = vpop.permute.xlu0 %3578
      %3580 = vrot.lane.b32.xlu0 %v3169, 32
      %v3581 = vpop.permute.xlu0 %3580
      %3582 = vrot.lane.b32.xlu0 %v3170, 32
      %v3583 = vpop.permute.xlu0 %3582
      %3584 = vrot.lane.b32.xlu0 %v3171, 32
      %v3585 = vpop.permute.xlu0 %3584
      %v3586 = vsel %vm2264, %v3551, %v3553
      %v3587 = vsel %vm2264, %v3553, %v3555
      %v3588 = vsel %vm2264, %v3557, %v3559
      %v3589 = vsel %vm2264, %v3559, %v3561
      %v3590 = vsel %vm2264, %v3563, %v3565
      %v3591 = vsel %vm2264, %v3565, %v3567
      %v3592 = vsel %vm2264, %v3569, %v3571
      %v3593 = vsel %vm2264, %v3571, %v3573
      %v3594 = vsel %vm2264, %v3575, %v3577
      %v3595 = vsel %vm2264, %v3577, %v3579
      %v3596 = vsel %vm2264, %v3581, %v3583
      %v3597 = vsel %vm2264, %v3583, %v3585
      %v3610 = vmax.f32 %v3538, %v3586
      %v3611 = vmax.f32 %v3539, %v3587
      %v3612 = vmax.f32 %v3540, %v3588
      %v3613 = vmax.f32 %v3541, %v3589
      %v3614 = vmax.f32 %v3542, %v3590
      %v3615 = vmax.f32 %v3543, %v3591
      %v3616 = vmax.f32 %v3544, %v3592
      %v3617 = vmax.f32 %v3545, %v3593
      %v3618 = vmax.f32 %v3546, %v3594
      %v3619 = vmax.f32 %v3547, %v3595
      %v3620 = vmax.f32 %v3548, %v3596
      %v3621 = vmax.f32 %v3549, %v3597
      %3622 = vrot.lane.b32.xlu0 %v3154, 30
      %v3623 = vpop.permute.xlu0 %3622
      %3624 = vrot.lane.b32.xlu0 %v3155, 30
      %v3625 = vpop.permute.xlu0 %3624
      %3626 = vrot.lane.b32.xlu0 %v3156, 30
      %v3627 = vpop.permute.xlu0 %3626
      %3628 = vrot.lane.b32.xlu0 %v3157, 30
      %v3629 = vpop.permute.xlu0 %3628
      %3630 = vrot.lane.b32.xlu0 %v3158, 30
      %v3631 = vpop.permute.xlu0 %3630
      %3632 = vrot.lane.b32.xlu0 %v3159, 30
      %v3633 = vpop.permute.xlu0 %3632
      %3634 = vrot.lane.b32.xlu0 %v3160, 30
      %v3635 = vpop.permute.xlu0 %3634
      %3636 = vrot.lane.b32.xlu0 %v3161, 30
      %v3637 = vpop.permute.xlu0 %3636
      %3638 = vrot.lane.b32.xlu0 %v3162, 30
      %v3639 = vpop.permute.xlu0 %3638
      %3640 = vrot.lane.b32.xlu0 %v3163, 30
      %v3641 = vpop.permute.xlu0 %3640
      %3642 = vrot.lane.b32.xlu0 %v3164, 30
      %v3643 = vpop.permute.xlu0 %3642
      %3644 = vrot.lane.b32.xlu0 %v3165, 30
      %v3645 = vpop.permute.xlu0 %3644
      %3646 = vrot.lane.b32.xlu0 %v3166, 30
      %v3647 = vpop.permute.xlu0 %3646
      %3648 = vrot.lane.b32.xlu0 %v3167, 30
      %v3649 = vpop.permute.xlu0 %3648
      %3650 = vrot.lane.b32.xlu0 %v3168, 30
      %v3651 = vpop.permute.xlu0 %3650
      %3652 = vrot.lane.b32.xlu0 %v3169, 30
      %v3653 = vpop.permute.xlu0 %3652
      %3654 = vrot.lane.b32.xlu0 %v3170, 30
      %v3655 = vpop.permute.xlu0 %3654
      %3656 = vrot.lane.b32.xlu0 %v3171, 30
      %v3657 = vpop.permute.xlu0 %3656
      %v3658 = vsel %vm2365, %v3623, %v3625
      %v3659 = vsel %vm2365, %v3625, %v3627
      %v3660 = vsel %vm2365, %v3629, %v3631
      %v3661 = vsel %vm2365, %v3631, %v3633
      %v3662 = vsel %vm2365, %v3635, %v3637
      %v3663 = vsel %vm2365, %v3637, %v3639
      %v3664 = vsel %vm2365, %v3641, %v3643
      %v3665 = vsel %vm2365, %v3643, %v3645
      %v3666 = vsel %vm2365, %v3647, %v3649
      %v3667 = vsel %vm2365, %v3649, %v3651
      %v3668 = vsel %vm2365, %v3653, %v3655
      %v3669 = vsel %vm2365, %v3655, %v3657
      %v3682 = vmax.f32 %v3610, %v3658
      %v3683 = vmax.f32 %v3611, %v3659
      %v3684 = vmax.f32 %v3612, %v3660
      %v3685 = vmax.f32 %v3613, %v3661
      %v3686 = vmax.f32 %v3614, %v3662
      %v3687 = vmax.f32 %v3615, %v3663
      %v3688 = vmax.f32 %v3616, %v3664
      %v3689 = vmax.f32 %v3617, %v3665
      %v3690 = vmax.f32 %v3618, %v3666
      %v3691 = vmax.f32 %v3619, %v3667
      %v3692 = vmax.f32 %v3620, %v3668
      %v3693 = vmax.f32 %v3621, %v3669
      %3694 = vrot.lane.b32.xlu0 %v3154, 28
      %v3695 = vpop.permute.xlu0 %3694
      %3696 = vrot.lane.b32.xlu0 %v3155, 28
      %v3697 = vpop.permute.xlu0 %3696
      %3698 = vrot.lane.b32.xlu0 %v3156, 28
      %v3699 = vpop.permute.xlu0 %3698
      %3700 = vrot.lane.b32.xlu0 %v3157, 28
      %v3701 = vpop.permute.xlu0 %3700
      %3702 = vrot.lane.b32.xlu0 %v3158, 28
      %v3703 = vpop.permute.xlu0 %3702
      %3704 = vrot.lane.b32.xlu0 %v3159, 28
      %v3705 = vpop.permute.xlu0 %3704
      %3706 = vrot.lane.b32.xlu0 %v3160, 28
      %v3707 = vpop.permute.xlu0 %3706
      %3708 = vrot.lane.b32.xlu0 %v3161, 28
      %v3709 = vpop.permute.xlu0 %3708
      %3710 = vrot.lane.b32.xlu0 %v3162, 28
      %v3711 = vpop.permute.xlu0 %3710
      %3712 = vrot.lane.b32.xlu0 %v3163, 28
      %v3713 = vpop.permute.xlu0 %3712
      %3714 = vrot.lane.b32.xlu0 %v3164, 28
      %v3715 = vpop.permute.xlu0 %3714
      %3716 = vrot.lane.b32.xlu0 %v3165, 28
      %v3717 = vpop.permute.xlu0 %3716
      %3718 = vrot.lane.b32.xlu0 %v3166, 28
      %v3719 = vpop.permute.xlu0 %3718
      %3720 = vrot.lane.b32.xlu0 %v3167, 28
      %v3721 = vpop.permute.xlu0 %3720
      %3722 = vrot.lane.b32.xlu0 %v3168, 28
      %v3723 = vpop.permute.xlu0 %3722
      %3724 = vrot.lane.b32.xlu0 %v3169, 28
      %v3725 = vpop.permute.xlu0 %3724
      %3726 = vrot.lane.b32.xlu0 %v3170, 28
      %v3727 = vpop.permute.xlu0 %3726
      %3728 = vrot.lane.b32.xlu0 %v3171, 28
      %v3729 = vpop.permute.xlu0 %3728
      %v3730 = vsel %vm2466, %v3695, %v3697
      %v3731 = vsel %vm2466, %v3697, %v3699
      %v3732 = vsel %vm2466, %v3701, %v3703
      %v3733 = vsel %vm2466, %v3703, %v3705
      %v3734 = vsel %vm2466, %v3707, %v3709
      %v3735 = vsel %vm2466, %v3709, %v3711
      %v3736 = vsel %vm2466, %v3713, %v3715
      %v3737 = vsel %vm2466, %v3715, %v3717
      %v3738 = vsel %vm2466, %v3719, %v3721
      %v3739 = vsel %vm2466, %v3721, %v3723
      %v3740 = vsel %vm2466, %v3725, %v3727
      %v3741 = vsel %vm2466, %v3727, %v3729
      %v3754 = vmax.f32 %v3682, %v3730
      %v3755 = vmax.f32 %v3683, %v3731
      %v3756 = vmax.f32 %v3684, %v3732
      %v3757 = vmax.f32 %v3685, %v3733
      %v3758 = vmax.f32 %v3686, %v3734
      %v3759 = vmax.f32 %v3687, %v3735
      %v3760 = vmax.f32 %v3688, %v3736
      %v3761 = vmax.f32 %v3689, %v3737
      %v3762 = vmax.f32 %v3690, %v3738
      %v3763 = vmax.f32 %v3691, %v3739
      %v3764 = vmax.f32 %v3692, %v3740
      %v3765 = vmax.f32 %v3693, %v3741
      %3766 = vst [vmem:[#allocation7] sm:$0xff] %v3754
      %3767 = vst [vmem:[#allocation7 + $0x8] sm:$0xff] %v3755
      %3768 = vst [vmem:[#allocation7 + $0x10] sm:$0xff] %v3756
      %3769 = vst [vmem:[#allocation7 + $0x18] sm:$0xff] %v3757
      %3770 = vst [vmem:[#allocation7 + $0x20] sm:$0xff] %v3758
      %3771 = vst [vmem:[#allocation7 + $0x28] sm:$0xff] %v3759
      %3772 = vst [vmem:[#allocation7 + $0x30] sm:$0xff] %v3760
      %3773 = vst [vmem:[#allocation7 + $0x38] sm:$0xff] %v3761
      %3774 = vst [vmem:[#allocation7 + $0x40] sm:$0xff] %v3762
      %3775 = vst [vmem:[#allocation7 + $0x48] sm:$0xff] %v3763
      %3776 = vst [vmem:[#allocation7 + $0x50] sm:$0xff] %v3764
      %3777 = vst [vmem:[#allocation7 + $0x58] sm:$0xff] %v3765
      %v3778 = vld [vmem:[#allocation7] sm:$0xff]
      %v3779 = vld [vmem:[#allocation7 + $0x10] sm:$0xff]
      %v3780 = vld [vmem:[#allocation7 + $0x20] sm:$0xff]
      %v3781 = vld [vmem:[#allocation7 + $0x30] sm:$0xff]
      %v3782 = vld [vmem:[#allocation7 + $0x40] sm:$0xff]
      %v3783 = vld [vmem:[#allocation7 + $0x50] sm:$0xff]
      %3784 = vst [vmem:[#allocation8] sm:$0xff] %v3778
      %3785 = vst [vmem:[#allocation8 + $0x8] sm:$0xff] %v3779
      %3786 = vst [vmem:[#allocation8 + $0x10] sm:$0xff] %v3780
      %3787 = vst [vmem:[#allocation8 + $0x18] sm:$0xff] %v3781
      %3788 = vst [vmem:[#allocation8 + $0x20] sm:$0xff] %v3782
      %3789 = vst [vmem:[#allocation8 + $0x28] sm:$0xff] %v3783
      %v3790 = vld [vmem:[#allocation7] sm:$0xff]
      %v3791 = vld [vmem:[#allocation7 + $0x8] sm:$0xff]
      %v3792 = vld [vmem:[#allocation7 + $0x10] sm:$0xff]
      %v3793 = vld [vmem:[#allocation7 + $0x18] sm:$0xff]
      %v3794 = vld [vmem:[#allocation7 + $0x20] sm:$0xff]
      %v3795 = vld [vmem:[#allocation7 + $0x28] sm:$0xff]
      %v3796 = vld [vmem:[#allocation7 + $0x30] sm:$0xff]
      %v3797 = vld [vmem:[#allocation7 + $0x38] sm:$0xff]
      %v3798 = vld [vmem:[#allocation7 + $0x40] sm:$0xff]
      %v3799 = vld [vmem:[#allocation7 + $0x48] sm:$0xff]
      %v3800 = vld [vmem:[#allocation7 + $0x50] sm:$0xff]
      %v3801 = vld [vmem:[#allocation7 + $0x58] sm:$0xff]
      %3814 = vrot.lane.b32.xlu0 %v3790, 124
      %v3815 = vpop.permute.xlu0 %3814
      %3816 = vrot.lane.b32.xlu0 %v3791, 124
      %v3817 = vpop.permute.xlu0 %3816
      %3818 = vrot.lane.b32.xlu0 %v3792, 124
      %v3819 = vpop.permute.xlu0 %3818
      %3820 = vrot.lane.b32.xlu0 %v3793, 124
      %v3821 = vpop.permute.xlu0 %3820
      %3822 = vrot.lane.b32.xlu0 %v3794, 124
      %v3823 = vpop.permute.xlu0 %3822
      %3824 = vrot.lane.b32.xlu0 %v3795, 124
      %v3825 = vpop.permute.xlu0 %3824
      %3826 = vrot.lane.b32.xlu0 %v3796, 124
      %v3827 = vpop.permute.xlu0 %3826
      %3828 = vrot.lane.b32.xlu0 %v3797, 124
      %v3829 = vpop.permute.xlu0 %3828
      %3830 = vrot.lane.b32.xlu0 %v3798, 124
      %v3831 = vpop.permute.xlu0 %3830
      %3832 = vrot.lane.b32.xlu0 %v3799, 124
      %v3833 = vpop.permute.xlu0 %3832
      %3834 = vrot.lane.b32.xlu0 %v3800, 124
      %v3835 = vpop.permute.xlu0 %3834
      %3836 = vrot.lane.b32.xlu0 %v3801, 124
      %v3837 = vpop.permute.xlu0 %3836
      %v3838 = vsel %vm1862, %v3815, %v3817
      %v3839 = vsel %vm1862, %v3819, %v3821
      %v3840 = vsel %vm1862, %v3823, %v3825
      %v3841 = vsel %vm1862, %v3827, %v3829
      %v3842 = vsel %vm1862, %v3831, %v3833
      %v3843 = vsel %vm1862, %v3835, %v3837
      %3850 = vst [vmem:[#allocation8 + $0x30] sm:$0xff] %v3838
      %3851 = vst [vmem:[#allocation8 + $0x38] sm:$0xff] %v3839
      %3852 = vst [vmem:[#allocation8 + $0x40] sm:$0xff] %v3840
      %3853 = vst [vmem:[#allocation8 + $0x48] sm:$0xff] %v3841
      %3854 = vst [vmem:[#allocation8 + $0x50] sm:$0xff] %v3842
      %3855 = vst [vmem:[#allocation8 + $0x58] sm:$0xff] %v3843
      %v3856 = vld [vmem:[#allocation7] sm:$0xff]
      %v3857 = vld [vmem:[#allocation7 + $0x8] sm:$0xff]
      %v3858 = vld [vmem:[#allocation7 + $0x10] sm:$0xff]
      %v3859 = vld [vmem:[#allocation7 + $0x18] sm:$0xff]
      %v3860 = vld [vmem:[#allocation7 + $0x20] sm:$0xff]
      %v3861 = vld [vmem:[#allocation7 + $0x28] sm:$0xff]
      %v3862 = vld [vmem:[#allocation7 + $0x30] sm:$0xff]
      %v3863 = vld [vmem:[#allocation7 + $0x38] sm:$0xff]
      %v3864 = vld [vmem:[#allocation7 + $0x40] sm:$0xff]
      %v3865 = vld [vmem:[#allocation7 + $0x48] sm:$0xff]
      %v3866 = vld [vmem:[#allocation7 + $0x50] sm:$0xff]
      %v3867 = vld [vmem:[#allocation7 + $0x58] sm:$0xff]
      %3880 = vrot.lane.b32.xlu0 %v3856, 32
      %v3881 = vpop.permute.xlu0 %3880
      %3882 = vrot.lane.b32.xlu0 %v3857, 32
      %v3883 = vpop.permute.xlu0 %3882
      %3884 = vrot.lane.b32.xlu0 %v3858, 32
      %v3885 = vpop.permute.xlu0 %3884
      %3886 = vrot.lane.b32.xlu0 %v3859, 32
      %v3887 = vpop.permute.xlu0 %3886
      %3888 = vrot.lane.b32.xlu0 %v3860, 32
      %v3889 = vpop.permute.xlu0 %3888
      %3890 = vrot.lane.b32.xlu0 %v3861, 32
      %v3891 = vpop.permute.xlu0 %3890
      %3892 = vrot.lane.b32.xlu0 %v3862, 32
      %v3893 = vpop.permute.xlu0 %3892
      %3894 = vrot.lane.b32.xlu0 %v3863, 32
      %v3895 = vpop.permute.xlu0 %3894
      %3896 = vrot.lane.b32.xlu0 %v3864, 32
      %v3897 = vpop.permute.xlu0 %3896
      %3898 = vrot.lane.b32.xlu0 %v3865, 32
      %v3899 = vpop.permute.xlu0 %3898
      %3900 = vrot.lane.b32.xlu0 %v3866, 32
      %v3901 = vpop.permute.xlu0 %3900
      %3902 = vrot.lane.b32.xlu0 %v3867, 32
      %v3903 = vpop.permute.xlu0 %3902
      %v3904 = vsel %vm2264, %v3881, %v3883
      %v3905 = vsel %vm2264, %v3885, %v3887
      %v3906 = vsel %vm2264, %v3889, %v3891
      %v3907 = vsel %vm2264, %v3893, %v3895
      %v3908 = vsel %vm2264, %v3897, %v3899
      %v3909 = vsel %vm2264, %v3901, %v3903
      %3916 = vst [vmem:[#allocation8 + $0x60] sm:$0xff] %v3904
      %3917 = vst [vmem:[#allocation8 + $0x68] sm:$0xff] %v3905
      %3918 = vst [vmem:[#allocation8 + $0x70] sm:$0xff] %v3906
      %3919 = vst [vmem:[#allocation8 + $0x78] sm:$0xff] %v3907
      %3920 = vst [vmem:[#allocation8 + $0x80] sm:$0xff] %v3908
      %3921 = vst [vmem:[#allocation8 + $0x88] sm:$0xff] %v3909
      %v3922 = vld [vmem:[#allocation7] sm:$0xff]
      %v3923 = vld [vmem:[#allocation7 + $0x8] sm:$0xff]
      %v3924 = vld [vmem:[#allocation7 + $0x10] sm:$0xff]
      %v3925 = vld [vmem:[#allocation7 + $0x18] sm:$0xff]
      %v3926 = vld [vmem:[#allocation7 + $0x20] sm:$0xff]
      %v3927 = vld [vmem:[#allocation7 + $0x28] sm:$0xff]
      %v3928 = vld [vmem:[#allocation7 + $0x30] sm:$0xff]
      %v3929 = vld [vmem:[#allocation7 + $0x38] sm:$0xff]
      %v3930 = vld [vmem:[#allocation7 + $0x40] sm:$0xff]
      %v3931 = vld [vmem:[#allocation7 + $0x48] sm:$0xff]
      %v3932 = vld [vmem:[#allocation7 + $0x50] sm:$0xff]
      %v3933 = vld [vmem:[#allocation7 + $0x58] sm:$0xff]
      %3946 = vrot.lane.b32.xlu0 %v3922, 28
      %v3947 = vpop.permute.xlu0 %3946
      %3948 = vrot.lane.b32.xlu0 %v3923, 28
      %v3949 = vpop.permute.xlu0 %3948
      %3950 = vrot.lane.b32.xlu0 %v3924, 28
      %v3951 = vpop.permute.xlu0 %3950
      %3952 = vrot.lane.b32.xlu0 %v3925, 28
      %v3953 = vpop.permute.xlu0 %3952
      %3954 = vrot.lane.b32.xlu0 %v3926, 28
      %v3955 = vpop.permute.xlu0 %3954
      %3956 = vrot.lane.b32.xlu0 %v3927, 28
      %v3957 = vpop.permute.xlu0 %3956
      %3958 = vrot.lane.b32.xlu0 %v3928, 28
      %v3959 = vpop.permute.xlu0 %3958
      %3960 = vrot.lane.b32.xlu0 %v3929, 28
      %v3961 = vpop.permute.xlu0 %3960
      %3962 = vrot.lane.b32.xlu0 %v3930, 28
      %v3963 = vpop.permute.xlu0 %3962
      %3964 = vrot.lane.b32.xlu0 %v3931, 28
      %v3965 = vpop.permute.xlu0 %3964
      %3966 = vrot.lane.b32.xlu0 %v3932, 28
      %v3967 = vpop.permute.xlu0 %3966
      %3968 = vrot.lane.b32.xlu0 %v3933, 28
      %v3969 = vpop.permute.xlu0 %3968
      %v3970 = vsel %vm2466, %v3947, %v3949
      %v3971 = vsel %vm2466, %v3951, %v3953
      %v3972 = vsel %vm2466, %v3955, %v3957
      %v3973 = vsel %vm2466, %v3959, %v3961
      %v3974 = vsel %vm2466, %v3963, %v3965
      %v3975 = vsel %vm2466, %v3967, %v3969
      %3982 = vst [vmem:[#allocation8 + $0x90] sm:$0xff] %v3970
      %3983 = vst [vmem:[#allocation8 + $0x98] sm:$0xff] %v3971
      %3984 = vst [vmem:[#allocation8 + $0xa0] sm:$0xff] %v3972
      %3985 = vst [vmem:[#allocation8 + $0xa8] sm:$0xff] %v3973
      %3986 = vst [vmem:[#allocation8 + $0xb0] sm:$0xff] %v3974
      %3987 = vst [vmem:[#allocation8 + $0xb8] sm:$0xff] %v3975
      %v3988 = vld [vmem:[%s6] sm:$0xff]
      %v3989 = vld [vmem:[%s6 + $0x8] sm:$0xff]
      %v3990 = vld [vmem:[%s6 + $0x10] sm:$0xff]
      %v3991 = vld [vmem:[%s6 + $0x18] sm:$0xff]
      %v3992 = vld [vmem:[%s6 + $0x20] sm:$0xff]
      %v3993 = vld [vmem:[%s6 + $0x28] sm:$0xff]
      %v3994 = vld [vmem:[%s6 + $0x30] sm:$0xff]
      %v3995 = vld [vmem:[%s6 + $0x38] sm:$0xff]
      %v3996 = vld [vmem:[%s6 + $0x40] sm:$0xff]
      %v3997 = vld [vmem:[%s6 + $0x48] sm:$0xff]
      %v3998 = vld [vmem:[%s6 + $0x50] sm:$0xff]
      %v3999 = vld [vmem:[%s6 + $0x58] sm:$0xff]
      %v4000 = vld [vmem:[%s6 + $0x60] sm:$0xff]
      %v4001 = vld [vmem:[%s6 + $0x68] sm:$0xff]
      %v4002 = vld [vmem:[%s6 + $0x70] sm:$0xff]
      %v4003 = vld [vmem:[%s6 + $0x78] sm:$0xff]
      %v4004 = vld [vmem:[#allocation8] sm:$0xff]
      %v4005 = vld [vmem:[#allocation8 + $0x8] sm:$0xff]
      %v4006 = vld [vmem:[#allocation8 + $0x10] sm:$0xff]
      %v4007 = vld [vmem:[#allocation8 + $0x18] sm:$0xff]
      %v4008 = vld [vmem:[#allocation8 + $0x20] sm:$0xff]
      %v4009 = vld [vmem:[#allocation8 + $0x28] sm:$0xff]
      %v4010 = vld [vmem:[#allocation8 + $0x30] sm:$0xff]
      %v4011 = vld [vmem:[#allocation8 + $0x38] sm:$0xff]
      %v4012 = vld [vmem:[#allocation8 + $0x40] sm:$0xff]
      %v4013 = vld [vmem:[#allocation8 + $0x48] sm:$0xff]
      %v4014 = vld [vmem:[#allocation8 + $0x50] sm:$0xff]
      %v4015 = vld [vmem:[#allocation8 + $0x58] sm:$0xff]
      %v4016 = vld [vmem:[#allocation8 + $0x60] sm:$0xff]
      %v4017 = vld [vmem:[#allocation8 + $0x68] sm:$0xff]
      %v4018 = vld [vmem:[#allocation8 + $0x70] sm:$0xff]
      %v4019 = vld [vmem:[#allocation8 + $0x78] sm:$0xff]
      %v4020 = vld [vmem:[#allocation8 + $0x80] sm:$0xff]
      %v4021 = vld [vmem:[#allocation8 + $0x88] sm:$0xff]
      %v4022 = vld [vmem:[#allocation8 + $0x90] sm:$0xff]
      %v4023 = vld [vmem:[#allocation8 + $0x98] sm:$0xff]
      %v4024 = vld [vmem:[#allocation8 + $0xa0] sm:$0xff]
      %v4025 = vld [vmem:[#allocation8 + $0xa8] sm:$0xff]
      %v4026 = vld [vmem:[#allocation8 + $0xb0] sm:$0xff]
      %v4027 = vld [vmem:[#allocation8 + $0xb8] sm:$0xff]
      %4029 = vset.pattern.permute.xlu0 0
      %4030 = vperm.xlu0 %4029, %v228
      %v4031 = vpop.permute.xlu0 %4030
      %4034 = vset.pattern.permute.xlu0 0
      %4035 = vperm.xlu0 %4034, %v229
      %v4036 = vpop.permute.xlu0 %4035
      %4039 = vset.pattern.permute.xlu0 0
      %4040 = vperm.xlu0 %4039, %v230
      %v4041 = vpop.permute.xlu0 %4040
      %4044 = vset.pattern.permute.xlu0 0
      %4045 = vperm.xlu0 %4044, %v231
      %v4046 = vpop.permute.xlu0 %4045
      %4049 = vset.pattern.permute.xlu0 0
      %4050 = vperm.xlu0 %4049, %v232
      %v4051 = vpop.permute.xlu0 %4050
      %4054 = vset.pattern.permute.xlu0 0
      %4055 = vperm.xlu0 %4054, %v233
      %v4056 = vpop.permute.xlu0 %4055
      %4059 = vset.pattern.permute.xlu0 0
      %4060 = vperm.xlu0 %4059, %v234
      %v4061 = vpop.permute.xlu0 %4060
      %4064 = vset.pattern.permute.xlu0 0
      %4065 = vperm.xlu0 %4064, %v235
      %v4066 = vpop.permute.xlu0 %4065
      %vm4068 = vcmask 523264
      %v4070 = vsel %vm4068, %v3989, 0
      %v4073 = vsel %vm4068, %v3991, 0
      %v4076 = vsel %vm4068, %v3993, 0
      %v4079 = vsel %vm4068, %v3995, 0
      %v4082 = vsel %vm4068, %v3997, 0
      %v4085 = vsel %vm4068, %v3999, 0
      %v4088 = vsel %vm4068, %v4001, 0
      %v4091 = vsel %vm4068, %v4003, 0
      %4093 = vmatprep.subr.mxu0 0.0
      %4094 = vmatpush1.msra.mxu0 %v4004
      %4095 = vmatprep.subr.mxu0 0.0
      %4096 = vmatpush1.msra.mxu0 %v4005
      %4097 = vmatprep.subr.mxu0 0.0
      %4098 = vmatpush1.msra.mxu0 %v4006
      %4099 = vmatprep.subr.mxu0 0.0
      %4100 = vmatpush1.msra.mxu0 %v4007
      %4101 = vmatprep.subr.mxu0 0.0
      %4102 = vmatpush1.msra.mxu0 %v4008
      %4103 = vmatprep.subr.mxu0 0.0
      %4104 = vmatpush1.msra.mxu0 %v4009
      %4105 = vmatprep.subr.mxu0 0.0
      %4106 = vmatpush1.msra.mxu0 %v4010
      %4107 = vmatprep.subr.mxu0 0.0
      %4108 = vmatpush1.msra.mxu0 %v4011
      %4109 = vmatprep.subr.mxu0 0.0
      %4110 = vmatpush1.msra.mxu0 %v4012
      %4111 = vmatprep.subr.mxu0 0.0
      %4112 = vmatpush1.msra.mxu0 %v4013
      %4113 = vmatprep.subr.mxu0 0.0
      %4114 = vmatpush1.msra.mxu0 %v4014
      %4115 = vmatprep.subr.mxu0 0.0
      %4116 = vmatpush1.msra.mxu0 %v4015
      %4117 = vmatprep.subr.mxu0 0.0
      %4118 = vmatpush1.msra.mxu0 %v4016
      %4119 = vmatprep.subr.mxu0 0.0
      %4120 = vmatpush1.msra.mxu0 %v4017
      %4121 = vmatprep.subr.mxu0 0.0
      %4122 = vmatpush1.msra.mxu0 %v4018
      %4123 = vmatprep.subr.mxu0 0.0
      %4124 = vmatpush1.msra.mxu0 %v4019
      %4125 = vmatprep.subr.mxu0 0.0
      %4126 = vmatpush1.msra.mxu0 %v4020
      %4127 = vmatprep.subr.mxu0 0.0
      %4128 = vmatpush1.msra.mxu0 %v4021
      %4129 = vmatprep.subr.mxu0 0.0
      %4130 = vmatpush1.msra.mxu0 %v4022
      %4131 = vmatprep.subr.mxu0 0.0
      %4132 = vmatpush1.msra.mxu0 %v4023
      %4133 = vmatprep.subr.mxu0 0.0
      %4134 = vmatpush1.msra.mxu0 %v4024
      %4135 = vmatprep.subr.mxu0 0.0
      %4136 = vmatpush1.msra.mxu0 %v4025
      %4137 = vmatprep.subr.mxu0 0.0
      %4138 = vmatpush1.msra.mxu0 %v4026
      %4139 = vmatprep.subr.mxu0 0.0
      %4140 = vmatpush1.msra.mxu0 %v4027
      %4141 = vmatprep.subr.mxu0 0.0
      %4142 = vmatpush1.msra.mxu0 0.0
      %4143 = vmatprep.subr.mxu0 0.0
      %4144 = vmatpush1.msra.mxu0 0.0
      %4145 = vmatprep.subr.mxu0 0.0
      %4146 = vmatpush1.msra.mxu0 0.0
      %4147 = vmatprep.subr.mxu0 0.0
      %4148 = vmatpush1.msra.mxu0 0.0
      %4149 = vmatprep.subr.mxu0 0.0
      %4150 = vmatpush1.msra.mxu0 0.0
      %4151 = vmatprep.subr.mxu0 0.0
      %4152 = vmatpush1.msra.mxu0 0.0
      %4153 = vmatprep.subr.mxu0 0.0
      %4154 = vmatpush1.msra.mxu0 0.0
      %4155 = vmatprep.subr.mxu0 0.0
      %4156 = vmatpush1.msra.mxu0 0.0
      %4157 = vmatprep.mubr.f32.mxu0 %v4070
      %4158 = vmatmul.mubr.f32.gmra.mrb[0].mxu0 %v3988
      %v4159 = vpop.f32.mrb[0].mxu0
      %v4160 = vadd.f32 %v4031, %v4159
      %v4161 = vpop.f32.mrb[0].mxu0
      %4162 = vmatprep.mubr.f32.mxu0 %v4073
      %4163 = vmatmul.mubr.f32.gmra.mrb[0].mxu0 %v3990
      %v4164 = vpop.f32.mrb[0].mxu0
      %v4165 = vadd.f32 %v4036, %v4164
      %v4166 = vpop.f32.mrb[0].mxu0
      %4167 = vmatprep.mubr.f32.mxu0 %v4076
      %4168 = vmatmul.mubr.f32.gmra.mrb[0].mxu0 %v3992
      %v4169 = vpop.f32.mrb[0].mxu0
      %v4170 = vadd.f32 %v4041, %v4169
      %v4171 = vpop.f32.mrb[0].mxu0
      %4172 = vmatprep.mubr.f32.mxu0 %v4079
      %4173 = vmatmul.mubr.f32.gmra.mrb[0].mxu0 %v3994
      %v4174 = vpop.f32.mrb[0].mxu0
      %v4175 = vadd.f32 %v4046, %v4174
      %v4176 = vpop.f32.mrb[0].mxu0
      %4177 = vmatprep.mubr.f32.mxu0 %v4082
      %4178 = vmatmul.mubr.f32.gmra.mrb[0].mxu0 %v3996
      %v4179 = vpop.f32.mrb[0].mxu0
      %v4180 = vadd.f32 %v4051, %v4179
      %v4181 = vpop.f32.mrb[0].mxu0
      %4182 = vmatprep.mubr.f32.mxu0 %v4085
      %4183 = vmatmul.mubr.f32.gmra.mrb[0].mxu0 %v3998
      %v4184 = vpop.f32.mrb[0].mxu0
      %v4185 = vadd.f32 %v4056, %v4184
      %v4186 = vpop.f32.mrb[0].mxu0
      %4187 = vmatprep.mubr.f32.mxu0 %v4088
      %4188 = vmatmul.mubr.f32.gmra.mrb[0].mxu0 %v4000
      %v4189 = vpop.f32.mrb[0].mxu0
      %v4190 = vadd.f32 %v4061, %v4189
      %v4191 = vpop.f32.mrb[0].mxu0
      %4192 = vmatprep.mubr.f32.mxu0 %v4091
      %4193 = vmatmul.mubr.f32.gmra.mrb[0].mxu0 %v4002
      %v4194 = vpop.f32.mrb[0].mxu0
      %v4195 = vadd.f32 %v4066, %v4194
      %v4196 = vpop.f32.mrb[0].mxu0
      %4197 = vdwg.mxu0
      %vm4198 = vcmp.ge.f32.partialorder %v4160, 0.0
      %vm4199 = vcmp.ge.f32.partialorder %v4165, 0.0
      %vm4200 = vcmp.ge.f32.partialorder %v4170, 0.0
      %vm4201 = vcmp.ge.f32.partialorder %v4175, 0.0
      %vm4202 = vcmp.ge.f32.partialorder %v4180, 0.0
      %vm4203 = vcmp.ge.f32.partialorder %v4185, 0.0
      %vm4204 = vcmp.ge.f32.partialorder %v4190, 0.0
      %vm4205 = vcmp.ge.f32.partialorder %v4195, 0.0
      %v4206 = vstv %s215
      %v4207 = vmul.f32 %v4206, %v4160
      %v4208 = vmul.f32 %v4206, %v4165
      %v4209 = vmul.f32 %v4206, %v4170
      %v4210 = vmul.f32 %v4206, %v4175
      %v4211 = vmul.f32 %v4206, %v4180
      %v4212 = vmul.f32 %v4206, %v4185
      %v4213 = vmul.f32 %v4206, %v4190
      %v4214 = vmul.f32 %v4206, %v4195
      %v4215 = vsel %vm4198, %v4160, %v4207
      %v4216 = vsel %vm4199, %v4165, %v4208
      %v4217 = vsel %vm4200, %v4170, %v4209
      %v4218 = vsel %vm4201, %v4175, %v4210
      %v4219 = vsel %vm4202, %v4180, %v4211
      %v4220 = vsel %vm4203, %v4185, %v4212
      %v4221 = vsel %vm4204, %v4190, %v4213
      %v4222 = vsel %vm4205, %v4195, %v4214
      %4231 = vrot.lane.b32.xlu0 %v4215, 124
      %v4232 = vpop.permute.xlu0 %4231
      %4233 = vrot.lane.b32.xlu0 %v4216, 124
      %v4234 = vpop.permute.xlu0 %4233
      %4235 = vrot.lane.b32.xlu0 %v4217, 124
      %v4236 = vpop.permute.xlu0 %4235
      %4237 = vrot.lane.b32.xlu0 %v4218, 124
      %v4238 = vpop.permute.xlu0 %4237
      %4239 = vrot.lane.b32.xlu0 %v4219, 124
      %v4240 = vpop.permute.xlu0 %4239
      %4241 = vrot.lane.b32.xlu0 %v4220, 124
      %v4242 = vpop.permute.xlu0 %4241
      %4243 = vrot.lane.b32.xlu0 %v4221, 124
      %v4244 = vpop.permute.xlu0 %4243
      %4245 = vrot.lane.b32.xlu0 %v4222, 124
      %v4246 = vpop.permute.xlu0 %4245
      %4255 = vrot.lane.b32.xlu0 %v4215, 32
      %v4256 = vpop.permute.xlu0 %4255
      %4257 = vrot.lane.b32.xlu0 %v4216, 32
      %v4258 = vpop.permute.xlu0 %4257
      %4259 = vrot.lane.b32.xlu0 %v4217, 32
      %v4260 = vpop.permute.xlu0 %4259
      %4261 = vrot.lane.b32.xlu0 %v4218, 32
      %v4262 = vpop.permute.xlu0 %4261
      %4263 = vrot.lane.b32.xlu0 %v4219, 32
      %v4264 = vpop.permute.xlu0 %4263
      %4265 = vrot.lane.b32.xlu0 %v4220, 32
      %v4266 = vpop.permute.xlu0 %4265
      %4267 = vrot.lane.b32.xlu0 %v4221, 32
      %v4268 = vpop.permute.xlu0 %4267
      %4269 = vrot.lane.b32.xlu0 %v4222, 32
      %v4270 = vpop.permute.xlu0 %4269
      %4279 = vrot.lane.b32.xlu0 %v4215, 28
      %v4280 = vpop.permute.xlu0 %4279
      %4281 = vrot.lane.b32.xlu0 %v4216, 28
      %v4282 = vpop.permute.xlu0 %4281
      %4283 = vrot.lane.b32.xlu0 %v4217, 28
      %v4284 = vpop.permute.xlu0 %4283
      %4285 = vrot.lane.b32.xlu0 %v4218, 28
      %v4286 = vpop.permute.xlu0 %4285
      %4287 = vrot.lane.b32.xlu0 %v4219, 28
      %v4288 = vpop.permute.xlu0 %4287
      %4289 = vrot.lane.b32.xlu0 %v4220, 28
      %v4290 = vpop.permute.xlu0 %4289
      %4291 = vrot.lane.b32.xlu0 %v4221, 28
      %v4292 = vpop.permute.xlu0 %4291
      %4293 = vrot.lane.b32.xlu0 %v4222, 28
      %v4294 = vpop.permute.xlu0 %4293
      %v4303 = vld [vmem:[%s8] sm:$0xff]
      %v4304 = vld [vmem:[%s8 + $0x8] sm:$0xff]
      %v4305 = vld [vmem:[%s8 + $0x10] sm:$0xff]
      %v4306 = vld [vmem:[%s8 + $0x18] sm:$0xff]
      %v4307 = vld [vmem:[%s8 + $0x20] sm:$0xff]
      %v4308 = vld [vmem:[%s8 + $0x28] sm:$0xff]
      %v4309 = vld [vmem:[%s8 + $0x30] sm:$0xff]
      %v4310 = vld [vmem:[%s8 + $0x38] sm:$0xff]
      %v4311 = vld [vmem:[%s8 + $0x40] sm:$0xff]
      %v4312 = vld [vmem:[%s8 + $0x48] sm:$0xff]
      %v4313 = vld [vmem:[%s8 + $0x50] sm:$0xff]
      %v4314 = vld [vmem:[%s8 + $0x58] sm:$0xff]
      %v4315 = vld [vmem:[%s8 + $0x60] sm:$0xff]
      %v4316 = vld [vmem:[%s8 + $0x68] sm:$0xff]
      %v4317 = vld [vmem:[%s8 + $0x70] sm:$0xff]
      %v4318 = vld [vmem:[%s8 + $0x78] sm:$0xff]
      %v4319 = vld [vmem:[%s8 + $0x80] sm:$0xff]
      %v4320 = vld [vmem:[%s8 + $0x88] sm:$0xff]
      %v4321 = vld [vmem:[%s8 + $0x90] sm:$0xff]
      %v4322 = vld [vmem:[%s8 + $0x98] sm:$0xff]
      %v4323 = vld [vmem:[%s8 + $0xa0] sm:$0xff]
      %v4324 = vld [vmem:[%s8 + $0xa8] sm:$0xff]
      %v4325 = vld [vmem:[%s8 + $0xb0] sm:$0xff]
      %v4326 = vld [vmem:[%s8 + $0xb8] sm:$0xff]
      %v4327 = vld [vmem:[%s8 + $0xc0] sm:$0xff]
      %v4328 = vld [vmem:[%s8 + $0xc8] sm:$0xff]
      %v4329 = vld [vmem:[%s8 + $0xd0] sm:$0xff]
      %v4330 = vld [vmem:[%s8 + $0xd8] sm:$0xff]
      %v4331 = vld [vmem:[%s8 + $0xe0] sm:$0xff]
      %v4332 = vld [vmem:[%s8 + $0xe8] sm:$0xff]
      %v4333 = vld [vmem:[%s8 + $0xf0] sm:$0xff]
      %v4334 = vld [vmem:[%s8 + $0xf8] sm:$0xff]
      %4335 = vmatprep.subr.mxu0 0.0
      %4336 = vmatpush1.msra.mxu0 %v4215
      %4337 = vmatprep.subr.mxu0 0.0
      %4338 = vmatpush1.msra.mxu0 %v4216
      %4339 = vmatprep.subr.mxu0 0.0
      %4340 = vmatpush1.msra.mxu0 %v4217
      %4341 = vmatprep.subr.mxu0 0.0
      %4342 = vmatpush1.msra.mxu0 %v4218
      %4343 = vmatprep.subr.mxu0 0.0
      %4344 = vmatpush1.msra.mxu0 %v4219
      %4345 = vmatprep.subr.mxu0 0.0
      %4346 = vmatpush1.msra.mxu0 %v4220
      %4347 = vmatprep.subr.mxu0 0.0
      %4348 = vmatpush1.msra.mxu0 %v4221
      %4349 = vmatprep.subr.mxu0 0.0
      %4350 = vmatpush1.msra.mxu0 %v4222
      %4351 = vmatprep.subr.mxu0 0.0
      %4352 = vmatpush1.msra.mxu0 %v4232
      %4353 = vmatprep.subr.mxu0 0.0
      %4354 = vmatpush1.msra.mxu0 %v4234
      %4355 = vmatprep.subr.mxu0 0.0
      %4356 = vmatpush1.msra.mxu0 %v4236
      %4357 = vmatprep.subr.mxu0 0.0
      %4358 = vmatpush1.msra.mxu0 %v4238
      %4359 = vmatprep.subr.mxu0 0.0
      %4360 = vmatpush1.msra.mxu0 %v4240
      %4361 = vmatprep.subr.mxu0 0.0
      %4362 = vmatpush1.msra.mxu0 %v4242
      %4363 = vmatprep.subr.mxu0 0.0
      %4364 = vmatpush1.msra.mxu0 %v4244
      %4365 = vmatprep.subr.mxu0 0.0
      %4366 = vmatpush1.msra.mxu0 %v4246
      %4367 = vmatprep.subr.mxu0 0.0
      %4368 = vmatpush1.msra.mxu0 %v4256
      %4369 = vmatprep.subr.mxu0 0.0
      %4370 = vmatpush1.msra.mxu0 %v4258
      %4371 = vmatprep.subr.mxu0 0.0
      %4372 = vmatpush1.msra.mxu0 %v4260
      %4373 = vmatprep.subr.mxu0 0.0
      %4374 = vmatpush1.msra.mxu0 %v4262
      %4375 = vmatprep.subr.mxu0 0.0
      %4376 = vmatpush1.msra.mxu0 %v4264
      %4377 = vmatprep.subr.mxu0 0.0
      %4378 = vmatpush1.msra.mxu0 %v4266
      %4379 = vmatprep.subr.mxu0 0.0
      %4380 = vmatpush1.msra.mxu0 %v4268
      %4381 = vmatprep.subr.mxu0 0.0
      %4382 = vmatpush1.msra.mxu0 %v4270
      %4383 = vmatprep.subr.mxu0 0.0
      %4384 = vmatpush1.msra.mxu0 %v4280
      %4385 = vmatprep.subr.mxu0 0.0
      %4386 = vmatpush1.msra.mxu0 %v4282
      %4387 = vmatprep.subr.mxu0 0.0
      %4388 = vmatpush1.msra.mxu0 %v4284
      %4389 = vmatprep.subr.mxu0 0.0
      %4390 = vmatpush1.msra.mxu0 %v4286
      %4391 = vmatprep.subr.mxu0 0.0
      %4392 = vmatpush1.msra.mxu0 %v4288
      %4393 = vmatprep.subr.mxu0 0.0
      %4394 = vmatpush1.msra.mxu0 %v4290
      %4395 = vmatprep.subr.mxu0 0.0
      %4396 = vmatpush1.msra.mxu0 %v4292
      %4397 = vmatprep.subr.mxu0 0.0
      %4398 = vmatpush1.msra.mxu0 %v4294
      %4399 = vmatprep.mubr.f32.mxu0 %v4304
      %4400 = vmatmul.mubr.f32.gmra.mrb[0].mxu0 %v4303
      %v4401 = vpop.f32.mrb[0].mxu0
      %v4402 = vadd.f32 %v236, %v4401
      %v4403 = vpop.f32.mrb[0].mxu0
      %4404 = vmatprep.mubr.f32.mxu0 %v4306
      %4405 = vmatmul.mubr.f32.gmra.mrb[0].mxu0 %v4305
      %v4406 = vpop.f32.mrb[0].mxu0
      %v4407 = vadd.f32 %v237, %v4406
      %v4408 = vpop.f32.mrb[0].mxu0
      %4409 = vmatprep.mubr.f32.mxu0 %v4308
      %4410 = vmatmul.mubr.f32.gmra.mrb[0].mxu0 %v4307
      %v4411 = vpop.f32.mrb[0].mxu0
      %v4412 = vadd.f32 %v238, %v4411
      %v4413 = vpop.f32.mrb[0].mxu0
      %4414 = vmatprep.mubr.f32.mxu0 %v4310
      %4415 = vmatmul.mubr.f32.gmra.mrb[0].mxu0 %v4309
      %v4416 = vpop.f32.mrb[0].mxu0
      %v4417 = vadd.f32 %v239, %v4416
      %v4418 = vpop.f32.mrb[0].mxu0
      %4419 = vmatprep.mubr.f32.mxu0 %v4312
      %4420 = vmatmul.mubr.f32.gmra.mrb[0].mxu0 %v4311
      %v4421 = vpop.f32.mrb[0].mxu0
      %v4422 = vadd.f32 %v240, %v4421
      %v4423 = vpop.f32.mrb[0].mxu0
      %4424 = vmatprep.mubr.f32.mxu0 %v4314
      %4425 = vmatmul.mubr.f32.gmra.mrb[0].mxu0 %v4313
      %v4426 = vpop.f32.mrb[0].mxu0
      %v4427 = vadd.f32 %v241, %v4426
      %v4428 = vpop.f32.mrb[0].mxu0
      %4429 = vmatprep.mubr.f32.mxu0 %v4316
      %4430 = vmatmul.mubr.f32.gmra.mrb[0].mxu0 %v4315
      %v4431 = vpop.f32.mrb[0].mxu0
      %v4432 = vadd.f32 %v242, %v4431
      %v4433 = vpop.f32.mrb[0].mxu0
      %4434 = vmatprep.mubr.f32.mxu0 %v4318
      %4435 = vmatmul.mubr.f32.gmra.mrb[0].mxu0 %v4317
      %v4436 = vpop.f32.mrb[0].mxu0
      %v4437 = vadd.f32 %v243, %v4436
      %v4438 = vpop.f32.mrb[0].mxu0
      %4439 = vmatprep.mubr.f32.mxu0 %v4320
      %4440 = vmatmul.mubr.f32.gmra.mrb[0].mxu0 %v4319
      %v4441 = vpop.f32.mrb[0].mxu0
      %v4442 = vadd.f32 %v244, %v4441
      %v4443 = vpop.f32.mrb[0].mxu0
      %4444 = vmatprep.mubr.f32.mxu0 %v4322
      %4445 = vmatmul.mubr.f32.gmra.mrb[0].mxu0 %v4321
      %v4446 = vpop.f32.mrb[0].mxu0
      %v4447 = vadd.f32 %v245, %v4446
      %v4448 = vpop.f32.mrb[0].mxu0
      %4449 = vmatprep.mubr.f32.mxu0 %v4324
      %4450 = vmatmul.mubr.f32.gmra.mrb[0].mxu0 %v4323
      %v4451 = vpop.f32.mrb[0].mxu0
      %v4452 = vadd.f32 %v246, %v4451
      %v4453 = vpop.f32.mrb[0].mxu0
      %4454 = vmatprep.mubr.f32.mxu0 %v4326
      %4455 = vmatmul.mubr.f32.gmra.mrb[0].mxu0 %v4325
      %v4456 = vpop.f32.mrb[0].mxu0
      %v4457 = vadd.f32 %v247, %v4456
      %v4458 = vpop.f32.mrb[0].mxu0
      %4459 = vmatprep.mubr.f32.mxu0 %v4328
      %4460 = vmatmul.mubr.f32.gmra.mrb[0].mxu0 %v4327
      %v4461 = vpop.f32.mrb[0].mxu0
      %v4462 = vadd.f32 %v248, %v4461
      %v4463 = vpop.f32.mrb[0].mxu0
      %4464 = vmatprep.mubr.f32.mxu0 %v4330
      %4465 = vmatmul.mubr.f32.gmra.mrb[0].mxu0 %v4329
      %v4466 = vpop.f32.mrb[0].mxu0
      %v4467 = vadd.f32 %v249, %v4466
      %v4468 = vpop.f32.mrb[0].mxu0
      %4469 = vmatprep.mubr.f32.mxu0 %v4332
      %4470 = vmatmul.mubr.f32.gmra.mrb[0].mxu0 %v4331
      %v4471 = vpop.f32.mrb[0].mxu0
      %v4472 = vadd.f32 %v250, %v4471
      %v4473 = vpop.f32.mrb[0].mxu0
      %4474 = vmatprep.mubr.f32.mxu0 %v4334
      %4475 = vmatmul.mubr.f32.gmra.mrb[0].mxu0 %v4333
      %v4476 = vpop.f32.mrb[0].mxu0
      %v4477 = vadd.f32 %v251, %v4476
      %v4478 = vpop.f32.mrb[0].mxu0
      %4479 = vdwg.mxu0
      %vm4480 = vcmp.ge.f32.partialorder %v4402, 0.0
      %vm4481 = vcmp.ge.f32.partialorder %v4407, 0.0
      %vm4482 = vcmp.ge.f32.partialorder %v4412, 0.0
      %vm4483 = vcmp.ge.f32.partialorder %v4417, 0.0
      %vm4484 = vcmp.ge.f32.partialorder %v4422, 0.0
      %vm4485 = vcmp.ge.f32.partialorder %v4427, 0.0
      %vm4486 = vcmp.ge.f32.partialorder %v4432, 0.0
      %vm4487 = vcmp.ge.f32.partialorder %v4437, 0.0
      %vm4488 = vcmp.ge.f32.partialorder %v4442, 0.0
      %vm4489 = vcmp.ge.f32.partialorder %v4447, 0.0
      %vm4490 = vcmp.ge.f32.partialorder %v4452, 0.0
      %vm4491 = vcmp.ge.f32.partialorder %v4457, 0.0
      %vm4492 = vcmp.ge.f32.partialorder %v4462, 0.0
      %vm4493 = vcmp.ge.f32.partialorder %v4467, 0.0
      %vm4494 = vcmp.ge.f32.partialorder %v4472, 0.0
      %vm4495 = vcmp.ge.f32.partialorder %v4477, 0.0
      %v4496 = vstv %s216
      %v4497 = vmul.f32 %v4496, %v4402
      %v4498 = vmul.f32 %v4496, %v4407
      %v4499 = vmul.f32 %v4496, %v4412
      %v4500 = vmul.f32 %v4496, %v4417
      %v4501 = vmul.f32 %v4496, %v4422
      %v4502 = vmul.f32 %v4496, %v4427
      %v4503 = vmul.f32 %v4496, %v4432
      %v4504 = vmul.f32 %v4496, %v4437
      %v4505 = vmul.f32 %v4496, %v4442
      %v4506 = vmul.f32 %v4496, %v4447
      %v4507 = vmul.f32 %v4496, %v4452
      %v4508 = vmul.f32 %v4496, %v4457
      %v4509 = vmul.f32 %v4496, %v4462
      %v4510 = vmul.f32 %v4496, %v4467
      %v4511 = vmul.f32 %v4496, %v4472
      %v4512 = vmul.f32 %v4496, %v4477
      %v4513 = vsel %vm4480, %v4402, %v4497
      %v4514 = vsel %vm4481, %v4407, %v4498
      %v4515 = vsel %vm4482, %v4412, %v4499
      %v4516 = vsel %vm4483, %v4417, %v4500
      %v4517 = vsel %vm4484, %v4422, %v4501
      %v4518 = vsel %vm4485, %v4427, %v4502
      %v4519 = vsel %vm4486, %v4432, %v4503
      %v4520 = vsel %vm4487, %v4437, %v4504
      %v4521 = vsel %vm4488, %v4442, %v4505
      %v4522 = vsel %vm4489, %v4447, %v4506
      %v4523 = vsel %vm4490, %v4452, %v4507
      %v4524 = vsel %vm4491, %v4457, %v4508
      %v4525 = vsel %vm4492, %v4462, %v4509
      %v4526 = vsel %vm4493, %v4467, %v4510
      %v4527 = vsel %vm4494, %v4472, %v4511
      %v4528 = vsel %vm4495, %v4477, %v4512
      %v4529 = vld [vmem:[%s10] sm:$0xff]
      %v4530 = vld [vmem:[%s10 + $0x8] sm:$0xff]
      %v4531 = vld [vmem:[%s10 + $0x10] sm:$0xff]
      %v4532 = vld [vmem:[%s10 + $0x18] sm:$0xff]
      %v4533 = vld [vmem:[%s10 + $0x20] sm:$0xff]
      %v4534 = vld [vmem:[%s10 + $0x28] sm:$0xff]
      %v4535 = vld [vmem:[%s10 + $0x30] sm:$0xff]
      %v4536 = vld [vmem:[%s10 + $0x38] sm:$0xff]
      %4537 = vmatprep.subr.mxu0 0.0
      %4538 = vmatpush1.msra.mxu0 %v4513
      %4539 = vmatprep.subr.mxu0 0.0
      %4540 = vmatpush1.msra.mxu0 %v4514
      %4541 = vmatprep.subr.mxu0 0.0
      %4542 = vmatpush1.msra.mxu0 %v4515
      %4543 = vmatprep.subr.mxu0 0.0
      %4544 = vmatpush1.msra.mxu0 %v4516
      %4545 = vmatprep.subr.mxu0 0.0
      %4546 = vmatpush1.msra.mxu0 %v4517
      %4547 = vmatprep.subr.mxu0 0.0
      %4548 = vmatpush1.msra.mxu0 %v4518
      %4549 = vmatprep.subr.mxu0 0.0
      %4550 = vmatpush1.msra.mxu0 %v4519
      %4551 = vmatprep.subr.mxu0 0.0
      %4552 = vmatpush1.msra.mxu0 %v4520
      %4553 = vmatprep.subr.mxu0 0.0
      %4554 = vmatpush1.msra.mxu0 %v4521
      %4555 = vmatprep.subr.mxu0 0.0
      %4556 = vmatpush1.msra.mxu0 %v4522
      %4557 = vmatprep.subr.mxu0 0.0
      %4558 = vmatpush1.msra.mxu0 %v4523
      %4559 = vmatprep.subr.mxu0 0.0
      %4560 = vmatpush1.msra.mxu0 %v4524
      %4561 = vmatprep.subr.mxu0 0.0
      %4562 = vmatpush1.msra.mxu0 %v4525
      %4563 = vmatprep.subr.mxu0 0.0
      %4564 = vmatpush1.msra.mxu0 %v4526
      %4565 = vmatprep.subr.mxu0 0.0
      %4566 = vmatpush1.msra.mxu0 %v4527
      %4567 = vmatprep.subr.mxu0 0.0
      %4568 = vmatpush1.msra.mxu0 %v4528
      %4569 = vmatprep.subr.mxu0 0.0
      %4570 = vmatpush1.msra.mxu0 0.0
      %4571 = vmatprep.subr.mxu0 0.0
      %4572 = vmatpush1.msra.mxu0 0.0
      %4573 = vmatprep.subr.mxu0 0.0
      %4574 = vmatpush1.msra.mxu0 0.0
      %4575 = vmatprep.subr.mxu0 0.0
      %4576 = vmatpush1.msra.mxu0 0.0
      %4577 = vmatprep.subr.mxu0 0.0
      %4578 = vmatpush1.msra.mxu0 0.0
      %4579 = vmatprep.subr.mxu0 0.0
      %4580 = vmatpush1.msra.mxu0 0.0
      %4581 = vmatprep.subr.mxu0 0.0
      %4582 = vmatpush1.msra.mxu0 0.0
      %4583 = vmatprep.subr.mxu0 0.0
      %4584 = vmatpush1.msra.mxu0 0.0
      %4585 = vmatprep.subr.mxu0 0.0
      %4586 = vmatpush1.msra.mxu0 0.0
      %4587 = vmatprep.subr.mxu0 0.0
      %4588 = vmatpush1.msra.mxu0 0.0
      %4589 = vmatprep.subr.mxu0 0.0
      %4590 = vmatpush1.msra.mxu0 0.0
      %4591 = vmatprep.subr.mxu0 0.0
      %4592 = vmatpush1.msra.mxu0 0.0
      %4593 = vmatprep.subr.mxu0 0.0
      %4594 = vmatpush1.msra.mxu0 0.0
      %4595 = vmatprep.subr.mxu0 0.0
      %4596 = vmatpush1.msra.mxu0 0.0
      %4597 = vmatprep.subr.mxu0 0.0
      %4598 = vmatpush1.msra.mxu0 0.0
      %4599 = vmatprep.subr.mxu0 0.0
      %4600 = vmatpush1.msra.mxu0 0.0
      %4601 = vmatprep.mubr.f32.mxu0 0.0
      %4602 = vmatmul.mubr.f32.gmra.mrb[0].mxu0 %v4529
      %v4603 = vpop.f32.mrb[0].mxu0
      %v4604 = vadd.f32 %v252, %v4603
      %v4605 = vpop.f32.mrb[0].mxu0
      %4606 = vmatprep.mubr.f32.mxu0 0.0
      %4607 = vmatmul.mubr.f32.gmra.mrb[0].mxu0 %v4530
      %v4608 = vpop.f32.mrb[0].mxu0
      %v4609 = vadd.f32 %v253, %v4608
      %v4610 = vpop.f32.mrb[0].mxu0
      %4611 = vmatprep.mubr.f32.mxu0 0.0
      %4612 = vmatmul.mubr.f32.gmra.mrb[0].mxu0 %v4531
      %v4613 = vpop.f32.mrb[0].mxu0
      %v4614 = vadd.f32 %v254, %v4613
      %v4615 = vpop.f32.mrb[0].mxu0
      %4616 = vmatprep.mubr.f32.mxu0 0.0
      %4617 = vmatmul.mubr.f32.gmra.mrb[0].mxu0 %v4532
      %v4618 = vpop.f32.mrb[0].mxu0
      %v4619 = vadd.f32 %v255, %v4618
      %v4620 = vpop.f32.mrb[0].mxu0
      %4621 = vmatprep.mubr.f32.mxu0 0.0
      %4622 = vmatmul.mubr.f32.gmra.mrb[0].mxu0 %v4533
      %v4623 = vpop.f32.mrb[0].mxu0
      %v4624 = vadd.f32 %v256, %v4623
      %v4625 = vpop.f32.mrb[0].mxu0
      %4626 = vmatprep.mubr.f32.mxu0 0.0
      %4627 = vmatmul.mubr.f32.gmra.mrb[0].mxu0 %v4534
      %v4628 = vpop.f32.mrb[0].mxu0
      %v4629 = vadd.f32 %v257, %v4628
      %v4630 = vpop.f32.mrb[0].mxu0
      %4631 = vmatprep.mubr.f32.mxu0 0.0
      %4632 = vmatmul.mubr.f32.gmra.mrb[0].mxu0 %v4535
      %v4633 = vpop.f32.mrb[0].mxu0
      %v4634 = vadd.f32 %v258, %v4633
      %v4635 = vpop.f32.mrb[0].mxu0
      %4636 = vmatprep.mubr.f32.mxu0 0.0
      %4637 = vmatmul.mubr.f32.gmra.mrb[0].mxu0 %v4536
      %v4638 = vpop.f32.mrb[0].mxu0
      %v4639 = vadd.f32 %v259, %v4638
      %v4640 = vpop.f32.mrb[0].mxu0
      %4641 = vdwg.mxu0
      %vm4642 = vcmp.ge.f32.partialorder %v4604, 0.0
      %vm4643 = vcmp.ge.f32.partialorder %v4609, 0.0
      %vm4644 = vcmp.ge.f32.partialorder %v4614, 0.0
      %vm4645 = vcmp.ge.f32.partialorder %v4619, 0.0
      %vm4646 = vcmp.ge.f32.partialorder %v4624, 0.0
      %vm4647 = vcmp.ge.f32.partialorder %v4629, 0.0
      %vm4648 = vcmp.ge.f32.partialorder %v4634, 0.0
      %vm4649 = vcmp.ge.f32.partialorder %v4639, 0.0
      %v4650 = vstv %s217
      %v4651 = vmul.f32 %v4650, %v4604
      %v4652 = vmul.f32 %v4650, %v4609
      %v4653 = vmul.f32 %v4650, %v4614
      %v4654 = vmul.f32 %v4650, %v4619
      %v4655 = vmul.f32 %v4650, %v4624
      %v4656 = vmul.f32 %v4650, %v4629
      %v4657 = vmul.f32 %v4650, %v4634
      %v4658 = vmul.f32 %v4650, %v4639
      %v4659 = vsel %vm4642, %v4604, %v4651
      %v4660 = vsel %vm4643, %v4609, %v4652
      %v4661 = vsel %vm4644, %v4614, %v4653
      %v4662 = vsel %vm4645, %v4619, %v4654
      %v4663 = vsel %vm4646, %v4624, %v4655
      %v4664 = vsel %vm4647, %v4629, %v4656
      %v4665 = vsel %vm4648, %v4634, %v4657
      %v4666 = vsel %vm4649, %v4639, %v4658
      %v4667 = vld [vmem:[%s12] sm:$0xff]
      %v4669 = vsel %vm4068, %v4667, 0
      %4671 = vmatprep.subr.mxu0 0.0
      %4672 = vmatpush1.msra.mxu0 %v4659
      %4673 = vmatprep.subr.mxu0 0.0
      %4674 = vmatpush1.msra.mxu0 %v4660
      %4675 = vmatprep.subr.mxu0 0.0
      %4676 = vmatpush1.msra.mxu0 %v4661
      %4677 = vmatprep.subr.mxu0 0.0
      %4678 = vmatpush1.msra.mxu0 %v4662
      %4679 = vmatprep.subr.mxu0 0.0
      %4680 = vmatpush1.msra.mxu0 %v4663
      %4681 = vmatprep.subr.mxu0 0.0
      %4682 = vmatpush1.msra.mxu0 %v4664
      %4683 = vmatprep.subr.mxu0 0.0
      %4684 = vmatpush1.msra.mxu0 %v4665
      %4685 = vmatprep.subr.mxu0 0.0
      %4686 = vmatpush1.msra.mxu0 %v4666
      %4687 = vmatprep.subr.mxu0 0.0
      %4688 = vmatpush1.msra.mxu0 0.0
      %4689 = vmatprep.subr.mxu0 0.0
      %4690 = vmatpush1.msra.mxu0 0.0
      %4691 = vmatprep.subr.mxu0 0.0
      %4692 = vmatpush1.msra.mxu0 0.0
      %4693 = vmatprep.subr.mxu0 0.0
      %4694 = vmatpush1.msra.mxu0 0.0
      %4695 = vmatprep.subr.mxu0 0.0
      %4696 = vmatpush1.msra.mxu0 0.0
      %4697 = vmatprep.subr.mxu0 0.0
      %4698 = vmatpush1.msra.mxu0 0.0
      %4699 = vmatprep.subr.mxu0 0.0
      %4700 = vmatpush1.msra.mxu0 0.0
      %4701 = vmatprep.subr.mxu0 0.0
      %4702 = vmatpush1.msra.mxu0 0.0
      %4703 = vmatprep.subr.mxu0 0.0
      %4704 = vmatpush1.msra.mxu0 0.0
      %4705 = vmatprep.subr.mxu0 0.0
      %4706 = vmatpush1.msra.mxu0 0.0
      %4707 = vmatprep.subr.mxu0 0.0
      %4708 = vmatpush1.msra.mxu0 0.0
      %4709 = vmatprep.subr.mxu0 0.0
      %4710 = vmatpush1.msra.mxu0 0.0
      %4711 = vmatprep.subr.mxu0 0.0
      %4712 = vmatpush1.msra.mxu0 0.0
      %4713 = vmatprep.subr.mxu0 0.0
      %4714 = vmatpush1.msra.mxu0 0.0
      %4715 = vmatprep.subr.mxu0 0.0
      %4716 = vmatpush1.msra.mxu0 0.0
      %4717 = vmatprep.subr.mxu0 0.0
      %4718 = vmatpush1.msra.mxu0 0.0
      %4719 = vmatprep.subr.mxu0 0.0
      %4720 = vmatpush1.msra.mxu0 0.0
      %4721 = vmatprep.subr.mxu0 0.0
      %4722 = vmatpush1.msra.mxu0 0.0
      %4723 = vmatprep.subr.mxu0 0.0
      %4724 = vmatpush1.msra.mxu0 0.0
      %4725 = vmatprep.subr.mxu0 0.0
      %4726 = vmatpush1.msra.mxu0 0.0
      %4727 = vmatprep.subr.mxu0 0.0
      %4728 = vmatpush1.msra.mxu0 0.0
      %4729 = vmatprep.subr.mxu0 0.0
      %4730 = vmatpush1.msra.mxu0 0.0
      %4731 = vmatprep.subr.mxu0 0.0
      %4732 = vmatpush1.msra.mxu0 0.0
      %4733 = vmatprep.subr.mxu0 0.0
      %4734 = vmatpush1.msra.mxu0 0.0
      %4735 = vmatprep.mubr.f32.mxu0 0.0
      %4736 = vmatmul.mubr.f32.gmra.mrb[0].mxu0 %v4669
      %v4737 = vpop.f32.mrb[0].mxu0
      %v4738 = vadd.f32 %v260, %v4737
      %v4739 = vpop.f32.mrb[0].mxu0
      %4740 = vdwg.mxu0
      %vm4741 = vcmp.eq.s32.totalorder %v262, 0
      %v4742 = vmul.f32 %v4738, 0.5
      %v4743 = vtanh.pop %v4742
      %v4744 = vadd.f32 %v4743, 1.0
      %v4745 = vmul.f32 %v4744, 0.5
      %v4746 = vsel %vm4741, %v4745, %v4738
      %s4747 = smul.u32 %s264, 8
      %s4748 = scalar_lea.vmem %s14, %s4747
      %vm4749 = vcmask 7168
      %4750 = vst.msk [vmem:[%s4748] sm:$0xff] %vm4749, %v4746
    $region66: #{rnet_forward.1} parent=1 // loop_footer
      %s268 = sadd.s32 1, %s264
    $region67: #{rnet_forward.1} parent=1 // loop_footer_branch
      %263 = sbr.rel target = $region63
    $region68: #{rnet_forward.1} parent=1 // loop_exit
      _
    // Predicated region
    $region69: #{rnet_forward.1} parent=1 // pred_check
      _
    $region70: #{rnet_forward.1} parent=1 // pred_check_branch
      %4752 = sbr.rel (0) target = $region72
    $region71: #{rnet_forward.1} parent=1 // pred_region
      _
    $region72: #{rnet_forward.1} parent=1 // pred_fallthru
      _
    // Predicated region
    $region73: #{rnet_forward.1} parent=1 // pred_check
      _
    $region74: #{rnet_forward.1} parent=1 // pred_check_branch
      %4754 = sbr.rel (0) target = $region76
    $region75: #{rnet_forward.1} parent=1 // pred_region
      _
    $region76: #{rnet_forward.1} parent=1 // pred_fallthru
      _
    %4755 = vsyncpa [#allocation10], 1

</llo_original>
